<compile_context>
chip_gen: v7x
topology: tpu7x:2x2x1
jax: 0.10.0
libtpu: 0.0.40
codegen_flags: <defaults>
</compile_context>

<pallas_src>
import functools

import jax
import jax.numpy as jnp
from jax.experimental import pallas as pl
from jax.experimental.pallas import tpu as pltpu

_IN_EPS = 1e-5       # nn.InstanceNorm2d default eps
_LRELU_SLOPE = 0.2   # nn.LeakyReLU(0.2)
_K_ALIGN = 16        # bf16 sublane pack; do NOT pad K to 128 (wasted HBM bytes)


# ---------------------------------------------------------------------------
# Pallas kernels
# ---------------------------------------------------------------------------
def _conv_in_lrelu_kernel(w_ref, p_ref, o_ref):
    """(OC,K)@(K,OHW) on the MXU -> InstanceNorm over lanes -> LeakyReLU(0.2).

    w_ref: (OC, K) bf16   p_ref: (1, K, OHW) bf16   o_ref: (1, OC, OHW) bf16
    The conv bias is omitted: InstanceNorm's mean subtraction cancels it.
    """
    y = jnp.dot(w_ref[...], p_ref[0], preferred_element_type=jnp.float32)
    inv_n = 1.0 / y.shape[1]
    mean = jnp.sum(y, axis=1, keepdims=True) * inv_n            # (OC, 1)
    ex2 = jnp.sum(y * y, axis=1, keepdims=True) * inv_n         # E[y^2]
    var = jnp.maximum(ex2 - mean * mean, 0.0)                   # biased var
    yn = (y - mean) * jax.lax.rsqrt(var + _IN_EPS)
    o_ref[0] = jnp.where(yn >= 0, yn, _LRELU_SLOPE * yn).astype(o_ref.dtype)


def _tail_kernel(w5_ref, p_ref, w6_ref, b6_ref, o_ref):
    """Fused: conv5 + InstanceNorm + LeakyReLU, then the final 4x4 valid conv.

    The final conv covers the whole 4x4 map, so it is a full contraction of
    the VMEM-resident activation against w6 (kept in f32 for precision).
    w5_ref: (OC5, K5) bf16   p_ref: (1, K5, 16) bf16
    w6_ref: (OC5, 16) f32    b6_ref: (1, 1) f32    o_ref: (1, 1, 1) f32
    """
    y = jnp.dot(w5_ref[...], p_ref[0], preferred_element_type=jnp.float32)
    inv_n = 1.0 / y.shape[1]
    mean = jnp.sum(y, axis=1, keepdims=True) * inv_n
    ex2 = jnp.sum(y * y, axis=1, keepdims=True) * inv_n
    var = jnp.maximum(ex2 - mean * mean, 0.0)
    yn = (y - mean) * jax.lax.rsqrt(var + _IN_EPS)
    act = jnp.where(yn >= 0, yn, _LRELU_SLOPE * yn)              # (OC5, 16) f32
    out = jnp.sum(act * w6_ref[...]) + b6_ref[...]               # (1, 1)
    o_ref[...] = out.reshape(1, 1, 1)


# ---------------------------------------------------------------------------
# Glue: NCHW im2col (transposed patch layout) + pallas_call per layer
# ---------------------------------------------------------------------------
def _im2col_nchw(x, k, stride, pad):
    """(N,C,H,W) -> (N, C*k*k, OH*OW) with feature index = (c*k + kh)*k + kw."""
    n, c, h, w = x.shape
    xp = jnp.pad(x, ((0, 0), (0, 0), (pad, pad), (pad, pad)))
    oh = (h + 2 * pad - k) // stride + 1
    ow = (w + 2 * pad - k) // stride + 1
    taps = []
    for kh in range(k):
        for kw in range(k):
            taps.append(
                xp[:, :, kh:kh + stride * oh:stride, kw:kw + stride * ow:stride])
    p = jnp.stack(taps, axis=2)                     # (N, C, k*k, OH, OW)
    return p.reshape(n, c * k * k, oh * ow), oh, ow


def _prep_matmul_operands(x_nchw, w_oihw, stride, pad):
    """Build bf16 (N,K,OHW) patches and (OC,K) weights, K padded to _K_ALIGN."""
    oc, ic, k, _ = w_oihw.shape
    patches, oh, ow = _im2col_nchw(x_nchw.astype(jnp.bfloat16), k, stride, pad)
    kdim = ic * k * k
    kpad = (-kdim) % _K_ALIGN
    if kpad:
        patches = jnp.pad(patches, ((0, 0), (0, kpad), (0, 0)))
    w_mat = w_oihw.reshape(oc, kdim)
    if kpad:
        w_mat = jnp.pad(w_mat, ((0, 0), (0, kpad)))
    return patches, w_mat.astype(jnp.bfloat16), oh, ow, kdim + kpad


def _fused_conv_layer(x_nchw, w_oihw, *, stride, pad):
    """Conv2d (no bias; cancelled by IN) + InstanceNorm2d + LeakyReLU(0.2)."""
    n = x_nchw.shape[0]
    oc = w_oihw.shape[0]
    patches, w_mat, oh, ow, kd = _prep_matmul_operands(x_nchw, w_oihw, stride, pad)
    ohw = oh * ow
    out = pl.pallas_call(
        _conv_in_lrelu_kernel,
        out_shape=jax.ShapeDtypeStruct((n, oc, ohw), jnp.bfloat16),
        grid=(n,),
        in_specs=[
            pl.BlockSpec((oc, kd), lambda i: (0, 0)),
            pl.BlockSpec((1, kd, ohw), lambda i: (i, 0, 0)),
        ],
        out_specs=pl.BlockSpec((1, oc, ohw), lambda i: (i, 0, 0)),
        compiler_params=pltpu.CompilerParams(
            dimension_semantics=("parallel",)),
    )(w_mat, patches)
    return out.reshape(n, oc, oh, ow)


def _tail_layers(x_nchw, w5_oihw, w6_oihw, b6, *, stride5, pad5):
    """Fused conv5+IN+LReLU and the final 4x4 valid conv (one kernel)."""
    n = x_nchw.shape[0]
    oc5 = w5_oihw.shape[0]
    patches, w5_mat, oh5, ow5, kd5 = _prep_matmul_operands(
        x_nchw, w5_oihw, stride5, pad5)
    ohw5 = oh5 * ow5
    oc6, ic6, k6h, k6w = w6_oihw.shape
    # The final conv must cover the whole layer-5 output map for this fusion.
    assert oc6 == 1 and ic6 == oc5 and k6h == oh5 and k6w == ow5, (
        w6_oihw.shape, (oh5, ow5))
    w6_mat = w6_oihw.reshape(oc5, ohw5).astype(jnp.float32)
    b6_mat = b6.reshape(1, 1).astype(jnp.float32)
    out = pl.pallas_call(
        _tail_kernel,
        out_shape=jax.ShapeDtypeStruct((n, 1, 1), jnp.float32),
        grid=(n,),
        in_specs=[
            pl.BlockSpec((oc5, kd5), lambda i: (0, 0)),
            pl.BlockSpec((1, kd5, ohw5), lambda i: (i, 0, 0)),
            pl.BlockSpec((oc5, ohw5), lambda i: (0, 0)),
            pl.BlockSpec((1, 1), lambda i: (0, 0)),
        ],
        out_specs=pl.BlockSpec((1, 1, 1), lambda i: (i, 0, 0)),
        compiler_params=pltpu.CompilerParams(
            dimension_semantics=("parallel",)),
    )(w5_mat, patches, w6_mat, b6_mat)
    return out.reshape(n, 1)


# ---------------------------------------------------------------------------
# Critic model
# ---------------------------------------------------------------------------
def make_critic_params(key, d_dim=16):
    """Deterministic synthetic parameters. Conv weights stored OIHW (PyTorch)."""
    # (in_ch, out_ch, kernel, stride, pad, fused_instance_norm_lrelu)
    cfg = [
        (3,          d_dim,      4, 2, 1, True),
        (d_dim,      d_dim * 2,  4, 2, 1, True),
        (d_dim * 2,  d_dim * 4,  4, 2, 1, True),
        (d_dim * 4,  d_dim * 8,  4, 2, 1, True),
        (d_dim * 8,  d_dim * 16, 4, 2, 1, True),
        (d_dim * 16, 1,          4, 1, 0, False),
    ]
    params = []
    for (ic, oc, k, stride, pad, fused) in cfg:
        key, kw_key, kb_key = jax.random.split(key, 3)
        fan_in = ic * k * k
        w = jax.random.normal(kw_key, (oc, ic, k, k), jnp.float32) / jnp.sqrt(fan_in)
        b = jax.random.normal(kb_key, (oc,), jnp.float32) * 0.01
        params.append(dict(w=w, b=b, stride=stride, pad=pad, fused=fused))
    return params


def critic_forward(image_nchw, params):
    """image_nchw: (N, 3, 128, 128) float32; returns (N, 1) like .view(N, -1)."""
    assert len(params) == 6
    assert all(p["fused"] for p in params[:5]) and not params[5]["fused"]
    n = image_nchw.shape[0]
    x = image_nchw.astype(jnp.bfloat16)                # bf16 NCHW between layers
    for p in params[:4]:                               # layers 1..4
        x = _fused_conv_layer(x, p["w"], stride=p["stride"], pad=p["pad"])
    p5, p6 = params[4], params[5]                      # layers 5+6, one kernel
    out = _tail_layers(x, p5["w"], p6["w"], p6["b"],
                       stride5=p5["stride"], pad5=p5["pad"])
    return out.reshape(n, -1)


# ---------------------------------------------------------------------------
# Pure-JAX references (for correctness checks)
# ---------------------------------------------------------------------------
def _ref_forward(image_nchw, params, match_kernel_precision=False):
    x = image_nchw.astype(jnp.float32)
    for p in params:
        s, pad = p["stride"], p["pad"]
        lhs, rhs = x, p["w"]
        if match_kernel_precision and p["fused"]:
            lhs = lhs.astype(jnp.bfloat16)
            rhs = rhs.astype(jnp.bfloat16)
        y = jax.lax.conv_general_dilated(
            lhs, rhs, window_strides=(s, s),
            padding=((pad, pad), (pad, pad)),
            dimension_numbers=("NCHW", "OIHW", "NCHW"),
            preferred_element_type=jnp.float32,
        ) + p["b"].reshape(1, -1, 1, 1)
        if p["fused"]:
            mean = jnp.mean(y, axis=(2, 3), keepdims=True)
            var = jnp.mean((y - mean) ** 2, axis=(2, 3), keepdims=True)
            yn = (y - mean) * jax.lax.rsqrt(var + _IN_EPS)
            y = jnp.where(yn >= 0, yn, _LRELU_SLOPE * yn)
            if match_kernel_precision:
                # Kernel stores inter-layer activations in bf16.
                y = y.astype(jnp.bfloat16).astype(jnp.float32)
        x = y
    return x.reshape(x.shape[0], -1)


# ---------------------------------------------------------------------------
if __name__ == "__main__":
    key = jax.random.PRNGKey(0)
    d_dim = 8          # small channel widths (module default is 16)
    batch = 2
    # Spatial size must be 128: five stride-2 4x4 convs + final 4x4 valid conv -> 1x1.
    img_key, param_key = jax.random.split(key)
    image = jax.random.normal(img_key, (batch, 3, 128, 128), jnp.float32)
    params = make_critic_params(param_key, d_dim=d_dim)

    fwd = jax.jit(functools.partial(critic_forward, params=params))
    out = jax.block_until_ready(fwd(image))
    assert out.shape == (batch, 1), out.shape

    # Structural check: reference with matching bf16 conv-input / activation precision.
    ref_bf16 = jax.block_until_ready(
        _ref_forward(image, params, match_kernel_precision=True))
    assert jnp.allclose(out, ref_bf16, rtol=2.5e-2, atol=2.5e-2), (out, ref_bf16)

    # Numerical check vs the full-f32 reference (bf16 MXU inputs / activations
    # => looser tolerance).
    ref_f32 = jax.block_until_ready(_ref_forward(image, params))
    assert jnp.allclose(out, ref_f32, rtol=1e-1, atol=1e-1), (out, ref_f32)

    print("KERNEL_OK")
</pallas_src>

<mosaic_0001>
module attributes {stable_mosaic.version = 11 : i64} {
  func.func @_conv_in_lrelu_kernel(%arg0: i32, %arg1: memref<8x48xbf16, #tpu.memory_space<vmem>>, %arg2: memref<1x48x4096xbf16, #tpu.memory_space<vmem>>, %arg3: memref<1x8x4096xbf16, #tpu.memory_space<vmem>>) attributes {dimension_semantics = [#tpu.dimension_semantics<parallel>], iteration_bounds = array<i64: 2>, scalar_prefetch = 0 : i64, scratch_operands = 0 : i64, tpu.core_type = #tpu.core_type<tc>, window_params = [{pipeline_mode = #tpu.pipeline_mode<synchronous>, transform_indices = @transform_0, window_bounds = array<i64: 8, 48>}, {transform_indices = @transform_1, window_bounds = array<i64: 1, 48, 4096>}, {transform_indices = @transform_2, window_bounds = array<i64: 1, 8, 4096>}]} {
    %c0 = arith.constant 0 : index
    %c0_0 = arith.constant 0 : index
    %0 = vector.load %arg1[%c0, %c0_0] : memref<8x48xbf16, #tpu.memory_space<vmem>>, vector<8x48xbf16>
    %c0_1 = arith.constant 0 : index
    %c0_2 = arith.constant 0 : index
    %c0_3 = arith.constant 0 : index
    %1 = vector.load %arg2[%c0_1, %c0_2, %c0_3] : memref<1x48x4096xbf16, #tpu.memory_space<vmem>>, vector<1x48x4096xbf16>
    %2 = vector.shape_cast %1 : vector<1x48x4096xbf16> to vector<48x4096xbf16>
    %cst = arith.constant dense<0.000000e+00> : vector<8x4096xf32>
    %3 = tpu.matmul %0, %2, %cst {dimension_numbers = #tpu.dot_dimension_numbers<[1], [0], [0], [1], [0, 0, 1, 1], [], []>} : vector<8x48xbf16>, vector<48x4096xbf16>, vector<8x4096xf32> -> vector<8x4096xf32>
    %cst_4 = arith.constant dense<0.000000e+00> : vector<8xf32>
    %4 = vector.multi_reduction <add>, %3, %cst_4 [1] : vector<8x4096xf32> to vector<8xf32>
    %5 = vector.shape_cast %4 : vector<8xf32> to vector<8x1xf32>
    %cst_5 = arith.constant 2.44140625E-4 : f32
    %6 = vector.broadcast %cst_5 : f32 to vector<8x1xf32>
    %7 = arith.mulf %5, %6 : vector<8x1xf32>
    %8 = arith.mulf %3, %3 : vector<8x4096xf32>
    %cst_6 = arith.constant dense<0.000000e+00> : vector<8xf32>
    %9 = vector.multi_reduction <add>, %8, %cst_6 [1] : vector<8x4096xf32> to vector<8xf32>
    %10 = vector.shape_cast %9 : vector<8xf32> to vector<8x1xf32>
    %cst_7 = arith.constant 2.44140625E-4 : f32
    %11 = vector.broadcast %cst_7 : f32 to vector<8x1xf32>
    %12 = arith.mulf %10, %11 : vector<8x1xf32>
    %13 = arith.mulf %7, %7 : vector<8x1xf32>
    %14 = arith.subf %12, %13 : vector<8x1xf32>
    %cst_8 = arith.constant 0.000000e+00 : f32
    %15 = vector.broadcast %cst_8 : f32 to vector<8x1xf32>
    %16 = arith.maximumf %14, %15 : vector<8x1xf32>
    %17 = vector.broadcast %7 : vector<8x1xf32> to vector<8x4096xf32>
    %18 = arith.subf %3, %17 : vector<8x4096xf32>
    %cst_9 = arith.constant 9.99999974E-6 : f32
    %19 = vector.broadcast %cst_9 : f32 to vector<8x1xf32>
    %20 = arith.addf %16, %19 : vector<8x1xf32>
    %21 = math.rsqrt %20 : vector<8x1xf32>
    %22 = vector.broadcast %21 : vector<8x1xf32> to vector<8x4096xf32>
    %23 = arith.mulf %18, %22 : vector<8x4096xf32>
    %cst_10 = arith.constant 0.000000e+00 : f32
    %24 = vector.broadcast %cst_10 : f32 to vector<8x4096xf32>
    %25 = arith.cmpf oge, %23, %24 : vector<8x4096xf32>
    %cst_11 = arith.constant 2.000000e-01 : f32
    %26 = vector.broadcast %cst_11 : f32 to vector<8x4096xf32>
    %27 = arith.mulf %26, %23 : vector<8x4096xf32>
    %28 = arith.select %25, %23, %27 : vector<8x4096xi1>, vector<8x4096xf32>
    %29 = arith.truncf %28 : vector<8x4096xf32> to vector<8x4096xbf16>
    %c0_12 = arith.constant 0 : index
    %c0_13 = arith.constant 0 : index
    %c0_14 = arith.constant 0 : index
    %30 = vector.load %arg3[%c0_12, %c0_13, %c0_14] : memref<1x8x4096xbf16, #tpu.memory_space<vmem>>, vector<1x8x4096xbf16>
    %31 = vector.shape_cast %30 : vector<1x8x4096xbf16> to vector<8x4096xbf16>
    %32 = vector.shape_cast %29 : vector<8x4096xbf16> to vector<1x8x4096xbf16>
    tpu.vector_store %arg3[%c0_12, %c0_13, %c0_14], %32 {strides = array<i32>} : memref<1x8x4096xbf16, #tpu.memory_space<vmem>>, vector<1x8x4096xbf16>,
    return
  }
  func.func @transform_0(%arg0: i32) -> (i32, i32) {
    %c0_i32 = arith.constant 0 : i32
    %c0_i32_0 = arith.constant 0 : i32
    %c0_i32_1 = arith.constant 0 : i32
    return %c0_i32, %c0_i32_0 : i32, i32
  }
  func.func @transform_1(%arg0: i32) -> (i32, i32, i32) {
    %c0_i32 = arith.constant 0 : i32
    %c0_i32_0 = arith.constant 0 : i32
    %c0_i32_1 = arith.constant 0 : i32
    return %arg0, %c0_i32, %c0_i32_0 : i32, i32, i32
  }
  func.func @transform_2(%arg0: i32) -> (i32, i32, i32) {
    %c0_i32 = arith.constant 0 : i32
    %c0_i32_0 = arith.constant 0 : i32
    %c0_i32_1 = arith.constant 0 : i32
    return %arg0, %c0_i32, %c0_i32_0 : i32, i32, i32
  }
}

module attributes {stable_mosaic.version = 11 : i64} {
  func.func @_conv_in_lrelu_kernel(%arg0: i32, %arg1: memref<16x128xbf16, #tpu.memory_space<vmem>>, %arg2: memref<1x128x1024xbf16, #tpu.memory_space<vmem>>, %arg3: memref<1x16x1024xbf16, #tpu.memory_space<vmem>>) attributes {dimension_semantics = [#tpu.dimension_semantics<parallel>], iteration_bounds = array<i64: 2>, scalar_prefetch = 0 : i64, scratch_operands = 0 : i64, tpu.core_type = #tpu.core_type<tc>, window_params = [{pipeline_mode = #tpu.pipeline_mode<synchronous>, transform_indices = @transform_0, window_bounds = array<i64: 16, 128>}, {transform_indices = @transform_1, window_bounds = array<i64: 1, 128, 1024>}, {transform_indices = @transform_2, window_bounds = array<i64: 1, 16, 1024>}]} {
    %c0 = arith.constant 0 : index
    %c0_0 = arith.constant 0 : index
    %0 = vector.load %arg1[%c0, %c0_0] : memref<16x128xbf16, #tpu.memory_space<vmem>>, vector<16x128xbf16>
    %c0_1 = arith.constant 0 : index
    %c0_2 = arith.constant 0 : index
    %c0_3 = arith.constant 0 : index
    %1 = vector.load %arg2[%c0_1, %c0_2, %c0_3] : memref<1x128x1024xbf16, #tpu.memory_space<vmem>>, vector<1x128x1024xbf16>
    %2 = vector.shape_cast %1 : vector<1x128x1024xbf16> to vector<128x1024xbf16>
    %cst = arith.constant dense<0.000000e+00> : vector<16x1024xf32>
    %3 = tpu.matmul %0, %2, %cst {dimension_numbers = #tpu.dot_dimension_numbers<[1], [0], [0], [1], [0, 0, 1, 1], [], []>} : vector<16x128xbf16>, vector<128x1024xbf16>, vector<16x1024xf32> -> vector<16x1024xf32>
    %cst_4 = arith.constant dense<0.000000e+00> : vector<16xf32>
    %4 = vector.multi_reduction <add>, %3, %cst_4 [1] : vector<16x1024xf32> to vector<16xf32>
    %5 = vector.shape_cast %4 : vector<16xf32> to vector<16x1xf32>
    %cst_5 = arith.constant 9.765625E-4 : f32
    %6 = vector.broadcast %cst_5 : f32 to vector<16x1xf32>
    %7 = arith.mulf %5, %6 : vector<16x1xf32>
    %8 = arith.mulf %3, %3 : vector<16x1024xf32>
    %cst_6 = arith.constant dense<0.000000e+00> : vector<16xf32>
    %9 = vector.multi_reduction <add>, %8, %cst_6 [1] : vector<16x1024xf32> to vector<16xf32>
    %10 = vector.shape_cast %9 : vector<16xf32> to vector<16x1xf32>
    %cst_7 = arith.constant 9.765625E-4 : f32
    %11 = vector.broadcast %cst_7 : f32 to vector<16x1xf32>
    %12 = arith.mulf %10, %11 : vector<16x1xf32>
    %13 = arith.mulf %7, %7 : vector<16x1xf32>
    %14 = arith.subf %12, %13 : vector<16x1xf32>
    %cst_8 = arith.constant 0.000000e+00 : f32
    %15 = vector.broadcast %cst_8 : f32 to vector<16x1xf32>
    %16 = arith.maximumf %14, %15 : vector<16x1xf32>
    %17 = vector.broadcast %7 : vector<16x1xf32> to vector<16x1024xf32>
    %18 = arith.subf %3, %17 : vector<16x1024xf32>
    %cst_9 = arith.constant 9.99999974E-6 : f32
    %19 = vector.broadcast %cst_9 : f32 to vector<16x1xf32>
    %20 = arith.addf %16, %19 : vector<16x1xf32>
    %21 = math.rsqrt %20 : vector<16x1xf32>
    %22 = vector.broadcast %21 : vector<16x1xf32> to vector<16x1024xf32>
    %23 = arith.mulf %18, %22 : vector<16x1024xf32>
    %cst_10 = arith.constant 0.000000e+00 : f32
    %24 = vector.broadcast %cst_10 : f32 to vector<16x1024xf32>
    %25 = arith.cmpf oge, %23, %24 : vector<16x1024xf32>
    %cst_11 = arith.constant 2.000000e-01 : f32
    %26 = vector.broadcast %cst_11 : f32 to vector<16x1024xf32>
    %27 = arith.mulf %26, %23 : vector<16x1024xf32>
    %28 = arith.select %25, %23, %27 : vector<16x1024xi1>, vector<16x1024xf32>
    %29 = arith.truncf %28 : vector<16x1024xf32> to vector<16x1024xbf16>
    %c0_12 = arith.constant 0 : index
    %c0_13 = arith.constant 0 : index
    %c0_14 = arith.constant 0 : index
    %30 = vector.load %arg3[%c0_12, %c0_13, %c0_14] : memref<1x16x1024xbf16, #tpu.memory_space<vmem>>, vector<1x16x1024xbf16>
    %31 = vector.shape_cast %30 : vector<1x16x1024xbf16> to vector<16x1024xbf16>
    %32 = vector.shape_cast %29 : vector<16x1024xbf16> to vector<1x16x1024xbf16>
    tpu.vector_store %arg3[%c0_12, %c0_13, %c0_14], %32 {strides = array<i32>} : memref<1x16x1024xbf16, #tpu.memory_space<vmem>>, vector<1x16x1024xbf16>,
    return
  }
  func.func @transform_0(%arg0: i32) -> (i32, i32) {
    %c0_i32 = arith.constant 0 : i32
    %c0_i32_0 = arith.constant 0 : i32
    %c0_i32_1 = arith.constant 0 : i32
    return %c0_i32, %c0_i32_0 : i32, i32
  }
  func.func @transform_1(%arg0: i32) -> (i32, i32, i32) {
    %c0_i32 = arith.constant 0 : i32
    %c0_i32_0 = arith.constant 0 : i32
    %c0_i32_1 = arith.constant 0 : i32
    return %arg0, %c0_i32, %c0_i32_0 : i32, i32, i32
  }
  func.func @transform_2(%arg0: i32) -> (i32, i32, i32) {
    %c0_i32 = arith.constant 0 : i32
    %c0_i32_0 = arith.constant 0 : i32
    %c0_i32_1 = arith.constant 0 : i32
    return %arg0, %c0_i32, %c0_i32_0 : i32, i32, i32
  }
}

module attributes {stable_mosaic.version = 11 : i64} {
  func.func @_conv_in_lrelu_kernel(%arg0: i32, %arg1: memref<32x256xbf16, #tpu.memory_space<vmem>>, %arg2: memref<1x256x256xbf16, #tpu.memory_space<vmem>>, %arg3: memref<1x32x256xbf16, #tpu.memory_space<vmem>>) attributes {dimension_semantics = [#tpu.dimension_semantics<parallel>], iteration_bounds = array<i64: 2>, scalar_prefetch = 0 : i64, scratch_operands = 0 : i64, tpu.core_type = #tpu.core_type<tc>, window_params = [{pipeline_mode = #tpu.pipeline_mode<synchronous>, transform_indices = @transform_0, window_bounds = array<i64: 32, 256>}, {transform_indices = @transform_1, window_bounds = array<i64: 1, 256, 256>}, {transform_indices = @transform_2, window_bounds = array<i64: 1, 32, 256>}]} {
    %c0 = arith.constant 0 : index
    %c0_0 = arith.constant 0 : index
    %0 = vector.load %arg1[%c0, %c0_0] : memref<32x256xbf16, #tpu.memory_space<vmem>>, vector<32x256xbf16>
    %c0_1 = arith.constant 0 : index
    %c0_2 = arith.constant 0 : index
    %c0_3 = arith.constant 0 : index
    %1 = vector.load %arg2[%c0_1, %c0_2, %c0_3] : memref<1x256x256xbf16, #tpu.memory_space<vmem>>, vector<1x256x256xbf16>
    %2 = vector.shape_cast %1 : vector<1x256x256xbf16> to vector<256x256xbf16>
    %cst = arith.constant dense<0.000000e+00> : vector<32x256xf32>
    %3 = tpu.matmul %0, %2, %cst {dimension_numbers = #tpu.dot_dimension_numbers<[1], [0], [0], [1], [0, 0, 1, 1], [], []>} : vector<32x256xbf16>, vector<256x256xbf16>, vector<32x256xf32> -> vector<32x256xf32>
    %cst_4 = arith.constant dense<0.000000e+00> : vector<32xf32>
    %4 = vector.multi_reduction <add>, %3, %cst_4 [1] : vector<32x256xf32> to vector<32xf32>
    %5 = vector.shape_cast %4 : vector<32xf32> to vector<32x1xf32>
    %cst_5 = arith.constant 3.906250e-03 : f32
    %6 = vector.broadcast %cst_5 : f32 to vector<32x1xf32>
    %7 = arith.mulf %5, %6 : vector<32x1xf32>
    %8 = arith.mulf %3, %3 : vector<32x256xf32>
    %cst_6 = arith.constant dense<0.000000e+00> : vector<32xf32>
    %9 = vector.multi_reduction <add>, %8, %cst_6 [1] : vector<32x256xf32> to vector<32xf32>
    %10 = vector.shape_cast %9 : vector<32xf32> to vector<32x1xf32>
    %cst_7 = arith.constant 3.906250e-03 : f32
    %11 = vector.broadcast %cst_7 : f32 to vector<32x1xf32>
    %12 = arith.mulf %10, %11 : vector<32x1xf32>
    %13 = arith.mulf %7, %7 : vector<32x1xf32>
    %14 = arith.subf %12, %13 : vector<32x1xf32>
    %cst_8 = arith.constant 0.000000e+00 : f32
    %15 = vector.broadcast %cst_8 : f32 to vector<32x1xf32>
    %16 = arith.maximumf %14, %15 : vector<32x1xf32>
    %17 = vector.broadcast %7 : vector<32x1xf32> to vector<32x256xf32>
    %18 = arith.subf %3, %17 : vector<32x256xf32>
    %cst_9 = arith.constant 9.99999974E-6 : f32
    %19 = vector.broadcast %cst_9 : f32 to vector<32x1xf32>
    %20 = arith.addf %16, %19 : vector<32x1xf32>
    %21 = math.rsqrt %20 : vector<32x1xf32>
    %22 = vector.broadcast %21 : vector<32x1xf32> to vector<32x256xf32>
    %23 = arith.mulf %18, %22 : vector<32x256xf32>
    %cst_10 = arith.constant 0.000000e+00 : f32
    %24 = vector.broadcast %cst_10 : f32 to vector<32x256xf32>
    %25 = arith.cmpf oge, %23, %24 : vector<32x256xf32>
    %cst_11 = arith.constant 2.000000e-01 : f32
    %26 = vector.broadcast %cst_11 : f32 to vector<32x256xf32>
    %27 = arith.mulf %26, %23 : vector<32x256xf32>
    %28 = arith.select %25, %23, %27 : vector<32x256xi1>, vector<32x256xf32>
    %29 = arith.truncf %28 : vector<32x256xf32> to vector<32x256xbf16>
    %c0_12 = arith.constant 0 : index
    %c0_13 = arith.constant 0 : index
    %c0_14 = arith.constant 0 : index
    %30 = vector.load %arg3[%c0_12, %c0_13, %c0_14] : memref<1x32x256xbf16, #tpu.memory_space<vmem>>, vector<1x32x256xbf16>
    %31 = vector.shape_cast %30 : vector<1x32x256xbf16> to vector<32x256xbf16>
    %32 = vector.shape_cast %29 : vector<32x256xbf16> to vector<1x32x256xbf16>
    tpu.vector_store %arg3[%c0_12, %c0_13, %c0_14], %32 {strides = array<i32>} : memref<1x32x256xbf16, #tpu.memory_space<vmem>>, vector<1x32x256xbf16>,
    return
  }
  func.func @transform_0(%arg0: i32) -> (i32, i32) {
    %c0_i32 = arith.constant 0 : i32
    %c0_i32_0 = arith.constant 0 : i32
    %c0_i32_1 = arith.constant 0 : i32
    return %c0_i32, %c0_i32_0 : i32, i32
  }
  func.func @transform_1(%arg0: i32) -> (i32, i32, i32) {
    %c0_i32 = arith.constant 0 : i32
    %c0_i32_0 = arith.constant 0 : i32
    %c0_i32_1 = arith.constant 0 : i32
    return %arg0, %c0_i32, %c0_i32_0 : i32, i32, i32
  }
  func.func @transform_2(%arg0: i32) -> (i32, i32, i32) {
    %c0_i32 = arith.constant 0 : i32
    %c0_i32_0 = arith.constant 0 : i32
    %c0_i32_1 = arith.constant 0 : i32
    return %arg0, %c0_i32, %c0_i32_0 : i32, i32, i32
  }
}

module attributes {stable_mosaic.version = 11 : i64} {
  func.func @_conv_in_lrelu_kernel(%arg0: i32, %arg1: memref<64x512xbf16, #tpu.memory_space<vmem>>, %arg2: memref<1x512x64xbf16, #tpu.memory_space<vmem>>, %arg3: memref<1x64x64xbf16, #tpu.memory_space<vmem>>) attributes {dimension_semantics = [#tpu.dimension_semantics<parallel>], iteration_bounds = array<i64: 2>, scalar_prefetch = 0 : i64, scratch_operands = 0 : i64, tpu.core_type = #tpu.core_type<tc>, window_params = [{pipeline_mode = #tpu.pipeline_mode<synchronous>, transform_indices = @transform_0, window_bounds = array<i64: 64, 512>}, {transform_indices = @transform_1, window_bounds = array<i64: 1, 512, 64>}, {transform_indices = @transform_2, window_bounds = array<i64: 1, 64, 64>}]} {
    %c0 = arith.constant 0 : index
    %c0_0 = arith.constant 0 : index
    %0 = vector.load %arg1[%c0, %c0_0] : memref<64x512xbf16, #tpu.memory_space<vmem>>, vector<64x512xbf16>
    %c0_1 = arith.constant 0 : index
    %c0_2 = arith.constant 0 : index
    %c0_3 = arith.constant 0 : index
    %1 = vector.load %arg2[%c0_1, %c0_2, %c0_3] : memref<1x512x64xbf16, #tpu.memory_space<vmem>>, vector<1x512x64xbf16>
    %2 = vector.shape_cast %1 : vector<1x512x64xbf16> to vector<512x64xbf16>
    %cst = arith.constant dense<0.000000e+00> : vector<64x64xf32>
    %3 = tpu.matmul %0, %2, %cst {dimension_numbers = #tpu.dot_dimension_numbers<[1], [0], [0], [1], [0, 0, 1, 1], [], []>} : vector<64x512xbf16>, vector<512x64xbf16>, vector<64x64xf32> -> vector<64x64xf32>
    %cst_4 = arith.constant dense<0.000000e+00> : vector<64xf32>
    %4 = vector.multi_reduction <add>, %3, %cst_4 [1] : vector<64x64xf32> to vector<64xf32>
    %5 = vector.shape_cast %4 : vector<64xf32> to vector<64x1xf32>
    %cst_5 = arith.constant 1.562500e-02 : f32
    %6 = vector.broadcast %cst_5 : f32 to vector<64x1xf32>
    %7 = arith.mulf %5, %6 : vector<64x1xf32>
    %8 = arith.mulf %3, %3 : vector<64x64xf32>
    %cst_6 = arith.constant dense<0.000000e+00> : vector<64xf32>
    %9 = vector.multi_reduction <add>, %8, %cst_6 [1] : vector<64x64xf32> to vector<64xf32>
    %10 = vector.shape_cast %9 : vector<64xf32> to vector<64x1xf32>
    %cst_7 = arith.constant 1.562500e-02 : f32
    %11 = vector.broadcast %cst_7 : f32 to vector<64x1xf32>
    %12 = arith.mulf %10, %11 : vector<64x1xf32>
    %13 = arith.mulf %7, %7 : vector<64x1xf32>
    %14 = arith.subf %12, %13 : vector<64x1xf32>
    %cst_8 = arith.constant 0.000000e+00 : f32
    %15 = vector.broadcast %cst_8 : f32 to vector<64x1xf32>
    %16 = arith.maximumf %14, %15 : vector<64x1xf32>
    %17 = vector.broadcast %7 : vector<64x1xf32> to vector<64x64xf32>
    %18 = arith.subf %3, %17 : vector<64x64xf32>
    %cst_9 = arith.constant 9.99999974E-6 : f32
    %19 = vector.broadcast %cst_9 : f32 to vector<64x1xf32>
    %20 = arith.addf %16, %19 : vector<64x1xf32>
    %21 = math.rsqrt %20 : vector<64x1xf32>
    %22 = vector.broadcast %21 : vector<64x1xf32> to vector<64x64xf32>
    %23 = arith.mulf %18, %22 : vector<64x64xf32>
    %cst_10 = arith.constant 0.000000e+00 : f32
    %24 = vector.broadcast %cst_10 : f32 to vector<64x64xf32>
    %25 = arith.cmpf oge, %23, %24 : vector<64x64xf32>
    %cst_11 = arith.constant 2.000000e-01 : f32
    %26 = vector.broadcast %cst_11 : f32 to vector<64x64xf32>
    %27 = arith.mulf %26, %23 : vector<64x64xf32>
    %28 = arith.select %25, %23, %27 : vector<64x64xi1>, vector<64x64xf32>
    %29 = arith.truncf %28 : vector<64x64xf32> to vector<64x64xbf16>
    %c0_12 = arith.constant 0 : index
    %c0_13 = arith.constant 0 : index
    %c0_14 = arith.constant 0 : index
    %30 = vector.load %arg3[%c0_12, %c0_13, %c0_14] : memref<1x64x64xbf16, #tpu.memory_space<vmem>>, vector<1x64x64xbf16>
    %31 = vector.shape_cast %30 : vector<1x64x64xbf16> to vector<64x64xbf16>
    %32 = vector.shape_cast %29 : vector<64x64xbf16> to vector<1x64x64xbf16>
    tpu.vector_store %arg3[%c0_12, %c0_13, %c0_14], %32 {strides = array<i32>} : memref<1x64x64xbf16, #tpu.memory_space<vmem>>, vector<1x64x64xbf16>,
    return
  }
  func.func @transform_0(%arg0: i32) -> (i32, i32) {
    %c0_i32 = arith.constant 0 : i32
    %c0_i32_0 = arith.constant 0 : i32
    %c0_i32_1 = arith.constant 0 : i32
    return %c0_i32, %c0_i32_0 : i32, i32
  }
  func.func @transform_1(%arg0: i32) -> (i32, i32, i32) {
    %c0_i32 = arith.constant 0 : i32
    %c0_i32_0 = arith.constant 0 : i32
    %c0_i32_1 = arith.constant 0 : i32
    return %arg0, %c0_i32, %c0_i32_0 : i32, i32, i32
  }
  func.func @transform_2(%arg0: i32) -> (i32, i32, i32) {
    %c0_i32 = arith.constant 0 : i32
    %c0_i32_0 = arith.constant 0 : i32
    %c0_i32_1 = arith.constant 0 : i32
    return %arg0, %c0_i32, %c0_i32_0 : i32, i32, i32
  }
}

module attributes {stable_mosaic.version = 11 : i64} {
  func.func @_tail_kernel(%arg0: i32, %arg1: memref<128x1024xbf16, #tpu.memory_space<vmem>>, %arg2: memref<1x1024x16xbf16, #tpu.memory_space<vmem>>, %arg3: memref<128x16xf32, #tpu.memory_space<vmem>>, %arg4: memref<1x1xf32, #tpu.memory_space<vmem>>, %arg5: memref<1x1x1xf32, #tpu.memory_space<vmem>>) attributes {dimension_semantics = [#tpu.dimension_semantics<parallel>], iteration_bounds = array<i64: 2>, scalar_prefetch = 0 : i64, scratch_operands = 0 : i64, tpu.core_type = #tpu.core_type<tc>, window_params = [{pipeline_mode = #tpu.pipeline_mode<synchronous>, transform_indices = @transform_0, window_bounds = array<i64: 128, 1024>}, {transform_indices = @transform_1, window_bounds = array<i64: 1, 1024, 16>}, {pipeline_mode = #tpu.pipeline_mode<synchronous>, transform_indices = @transform_2, window_bounds = array<i64: 128, 16>}, {pipeline_mode = #tpu.pipeline_mode<synchronous>, transform_indices = @transform_3, window_bounds = array<i64: 1, 1>}, {transform_indices = @transform_4, window_bounds = array<i64: 1, 1, 1>}]} {
    %c0 = arith.constant 0 : index
    %c0_0 = arith.constant 0 : index
    %0 = vector.load %arg1[%c0, %c0_0] : memref<128x1024xbf16, #tpu.memory_space<vmem>>, vector<128x1024xbf16>
    %c0_1 = arith.constant 0 : index
    %c0_2 = arith.constant 0 : index
    %c0_3 = arith.constant 0 : index
    %1 = vector.load %arg2[%c0_1, %c0_2, %c0_3] : memref<1x1024x16xbf16, #tpu.memory_space<vmem>>, vector<1x1024x16xbf16>
    %2 = vector.shape_cast %1 : vector<1x1024x16xbf16> to vector<1024x16xbf16>
    %cst = arith.constant dense<0.000000e+00> : vector<128x16xf32>
    %3 = tpu.matmul %0, %2, %cst {dimension_numbers = #tpu.dot_dimension_numbers<[1], [0], [0], [1], [0, 0, 1, 1], [], []>} : vector<128x1024xbf16>, vector<1024x16xbf16>, vector<128x16xf32> -> vector<128x16xf32>
    %cst_4 = arith.constant dense<0.000000e+00> : vector<128xf32>
    %4 = vector.multi_reduction <add>, %3, %cst_4 [1] : vector<128x16xf32> to vector<128xf32>
    %5 = vector.shape_cast %4 : vector<128xf32> to vector<128x1xf32>
    %cst_5 = arith.constant 6.250000e-02 : f32
    %6 = vector.broadcast %cst_5 : f32 to vector<128x1xf32>
    %7 = arith.mulf %5, %6 : vector<128x1xf32>
    %8 = arith.mulf %3, %3 : vector<128x16xf32>
    %cst_6 = arith.constant dense<0.000000e+00> : vector<128xf32>
    %9 = vector.multi_reduction <add>, %8, %cst_6 [1] : vector<128x16xf32> to vector<128xf32>
    %10 = vector.shape_cast %9 : vector<128xf32> to vector<128x1xf32>
    %cst_7 = arith.constant 6.250000e-02 : f32
    %11 = vector.broadcast %cst_7 : f32 to vector<128x1xf32>
    %12 = arith.mulf %10, %11 : vector<128x1xf32>
    %13 = arith.mulf %7, %7 : vector<128x1xf32>
    %14 = arith.subf %12, %13 : vector<128x1xf32>
    %cst_8 = arith.constant 0.000000e+00 : f32
    %15 = vector.broadcast %cst_8 : f32 to vector<128x1xf32>
    %16 = arith.maximumf %14, %15 : vector<128x1xf32>
    %17 = vector.broadcast %7 : vector<128x1xf32> to vector<128x16xf32>
    %18 = arith.subf %3, %17 : vector<128x16xf32>
    %cst_9 = arith.constant 9.99999974E-6 : f32
    %19 = vector.broadcast %cst_9 : f32 to vector<128x1xf32>
    %20 = arith.addf %16, %19 : vector<128x1xf32>
    %21 = math.rsqrt %20 : vector<128x1xf32>
    %22 = vector.broadcast %21 : vector<128x1xf32> to vector<128x16xf32>
    %23 = arith.mulf %18, %22 : vector<128x16xf32>
    %cst_10 = arith.constant 0.000000e+00 : f32
    %24 = vector.broadcast %cst_10 : f32 to vector<128x16xf32>
    %25 = arith.cmpf oge, %23, %24 : vector<128x16xf32>
    %cst_11 = arith.constant 2.000000e-01 : f32
    %26 = vector.broadcast %cst_11 : f32 to vector<128x16xf32>
    %27 = arith.mulf %26, %23 : vector<128x16xf32>
    %28 = arith.select %25, %23, %27 : vector<128x16xi1>, vector<128x16xf32>
    %c0_12 = arith.constant 0 : index
    %c0_13 = arith.constant 0 : index
    %29 = vector.load %arg3[%c0_12, %c0_13] : memref<128x16xf32, #tpu.memory_space<vmem>>, vector<128x16xf32>
    %30 = arith.mulf %28, %29 : vector<128x16xf32>
    %31 = vector.shape_cast %30 : vector<128x16xf32> to vector<1x128x16xf32>
    %cst_14 = arith.constant dense<0.000000e+00> : vector<1xf32>
    %32 = vector.multi_reduction <add>, %31, %cst_14 [1, 2] : vector<1x128x16xf32> to vector<1xf32>
    %33 = vector.shape_cast %32 : vector<1xf32> to vector<1x1x1xf32>
    %34 = vector.extract %33[0, 0, 0] : f32 from vector<1x1x1xf32>
    %c0_15 = arith.constant 0 : index
    %c0_16 = arith.constant 0 : index
    %35 = vector.load %arg4[%c0_15, %c0_16] : memref<1x1xf32, #tpu.memory_space<vmem>>, vector<1x1xf32>
    %36 = vector.broadcast %34 : f32 to vector<1x1xf32>
    %37 = arith.addf %36, %35 : vector<1x1xf32>
    %38 = vector.shape_cast %37 : vector<1x1xf32> to vector<1x1x1xf32>
    %c0_17 = arith.constant 0 : index
    %c0_18 = arith.constant 0 : index
    %c0_19 = arith.constant 0 : index
    %39 = vector.load %arg5[%c0_17, %c0_18, %c0_19] : memref<1x1x1xf32, #tpu.memory_space<vmem>>, vector<1x1x1xf32>
    tpu.vector_store %arg5[%c0_17, %c0_18, %c0_19], %38 {strides = array<i32>} : memref<1x1x1xf32, #tpu.memory_space<vmem>>, vector<1x1x1xf32>,
    return
  }
  func.func @transform_0(%arg0: i32) -> (i32, i32) {
    %c0_i32 = arith.constant 0 : i32
    %c0_i32_0 = arith.constant 0 : i32
    %c0_i32_1 = arith.constant 0 : i32
    return %c0_i32, %c0_i32_0 : i32, i32
  }
  func.func @transform_1(%arg0: i32) -> (i32, i32, i32) {
    %c0_i32 = arith.constant 0 : i32
    %c0_i32_0 = arith.constant 0 : i32
    %c0_i32_1 = arith.constant 0 : i32
    return %arg0, %c0_i32, %c0_i32_0 : i32, i32, i32
  }
  func.func @transform_2(%arg0: i32) -> (i32, i32) {
    %c0_i32 = arith.constant 0 : i32
    %c0_i32_0 = arith.constant 0 : i32
    %c0_i32_1 = arith.constant 0 : i32
    return %c0_i32, %c0_i32_0 : i32, i32
  }
  func.func @transform_3(%arg0: i32) -> (i32, i32) {
    %c0_i32 = arith.constant 0 : i32
    %c0_i32_0 = arith.constant 0 : i32
    %c0_i32_1 = arith.constant 0 : i32
    return %c0_i32, %c0_i32_0 : i32, i32
  }
  func.func @transform_4(%arg0: i32) -> (i32, i32, i32) {
    %c0_i32 = arith.constant 0 : i32
    %c0_i32_0 = arith.constant 0 : i32
    %c0_i32_1 = arith.constant 0 : i32
    return %arg0, %c0_i32, %c0_i32_0 : i32, i32, i32
  }
}

</mosaic_0001>

<llo_original>
// kernel: critic_forward.5
$region0: #{critic_forward.5}
  #allocation0 [shape = 'u32[]', space=smem, size = 0x4, offset = 0x4, fixed_abs, tag = 'smem constant byte address 0x4 - core index']
  #allocation1 [shape = 'u32[144,128]{1,0:T(1,128)}', space=vmem, size = 0x12000, scoped, tag = 'internal scratch']
  %s0 = inlined_call_operand.vmem [shape: bf16[8,48], index: 0, kind: input, shape index: {}]
  %s1 = inlined_call_operand.vmem [shape: bf16[2,48,4096], index: 1, kind: input, shape index: {}]
  %s2 = inlined_call_operand.vmem [shape: bf16[2,8,4096], index: 2, kind: output, shape index: {}]
  %s3 = sld [smem:[#allocation0]]
  $region41: #{critic_forward.5} parent=0
    _
  %s5 = ssub.s32 1, %s3
  %s6 = scalar_select 0, %s5, %s3
  loop: start=0, step=1, limit=4
  $region2: #{critic_forward.5} parent=0 // loop_pre_header
    _
  $region3: #{critic_forward.5} parent=0 // loop_header
    %s8 = sphi 0, %s12
    %p9 = scmp.ge.s32.totalorder %s8, 4
    %s16 = sphi 0, %s16
    %s18 = sphi 0, %s16
    %s19 = sphi 0, %s18
    %s33 = sphi 0, %s19
    %s39 = sphi 0, %s41
    %s42 = sphi 0, %s39
    %s43 = sphi 0, %s42
    %s59 = sphi 0, %s43
    %s65 = sphi 0, %s67
    %s68 = sphi 0, %s65
    %s69 = sphi 0, %s68
    %s85 = sphi 0, %s69
  $region4: #{critic_forward.5} parent=0 // loop_header_branch
    %11 = sbr.rel (%p9) target = $region8
  $region5: #{critic_forward.5} parent=0 // loop_body
    %s13 = ssub.s32 %s8, 1
    %s14 = ssub.s32 %s8, 2
    %s15 = sadd.s32 %s8, 1
    %s17 = sadd.s32 %s16, 1
    %p20 = scmp.eq.s32.totalorder %s8, 1
    %p21 = scmp.ne.s32.totalorder %s16, %s18
    %p22 = scmp.eq.s32.totalorder %s8, 0
    %p23 = por %p21, %p22
    %p24 = scmp.ne.s32.totalorder %s16, %s18
    %p25 = scmp.eq.s32.totalorder %s13, 1
    %p26 = por %p24, %p25
    %p27 = scmp.ne.s32.totalorder %s18, %s19
    %p28 = scmp.eq.s32.totalorder %s13, 0
    %p29 = por %p27, %p28
    %p30 = scmp.ne.s32.totalorder %s18, %s19
    %p31 = scmp.eq.s32.totalorder %s14, 1
    %p32 = por %p30, %p31
    %p34 = scmp.ne.s32.totalorder %s19, %s33
    %p35 = scmp.eq.s32.totalorder %s14, 0
    %p36 = por %p34, %p35
    %s37 = ssub.s32 %s8, %s15
    %p38 = scmp.eq.s32.totalorder %s37, 0
    %s40 = sadd.s32 %s39, 1
    %s41 = scalar_select %p38, %s39, %s40
    %p44 = pneg %p38
    %p45 = scmp.eq.s32.totalorder %s8, 1
    %p46 = por %p44, %p45
    %p47 = scmp.ne.s32.totalorder %s39, %s42
    %p48 = scmp.eq.s32.totalorder %s8, 0
    %p49 = por %p47, %p48
    %p50 = scmp.ne.s32.totalorder %s39, %s42
    %p51 = scmp.eq.s32.totalorder %s13, 1
    %p52 = por %p50, %p51
    %p53 = scmp.ne.s32.totalorder %s42, %s43
    %p54 = scmp.eq.s32.totalorder %s13, 0
    %p55 = por %p53, %p54
    %p56 = scmp.ne.s32.totalorder %s42, %s43
    %p57 = scmp.eq.s32.totalorder %s14, 1
    %p58 = por %p56, %p57
    %p60 = scmp.ne.s32.totalorder %s43, %s59
    %p61 = scmp.eq.s32.totalorder %s14, 0
    %p62 = por %p60, %p61
    %s63 = ssub.s32 %s8, %s15
    %p64 = scmp.eq.s32.totalorder %s63, 0
    %s66 = sadd.s32 %s65, 1
    %s67 = scalar_select %p64, %s65, %s66
    %p70 = pneg %p64
    %p71 = scmp.eq.s32.totalorder %s8, 1
    %p72 = por %p70, %p71
    %p73 = scmp.ne.s32.totalorder %s65, %s68
    %p74 = scmp.eq.s32.totalorder %s8, 0
    %p75 = por %p73, %p74
    %p76 = scmp.ne.s32.totalorder %s65, %s68
    %p77 = scmp.eq.s32.totalorder %s13, 1
    %p78 = por %p76, %p77
    %p79 = scmp.ne.s32.totalorder %s68, %s69
    %p80 = scmp.eq.s32.totalorder %s13, 0
    %p81 = por %p79, %p80
    %p82 = scmp.ne.s32.totalorder %s68, %s69
    %p83 = scmp.eq.s32.totalorder %s14, 1
    %p84 = por %p82, %p83
    %p86 = scmp.ne.s32.totalorder %s69, %s85
    %p87 = scmp.eq.s32.totalorder %s14, 0
    %p88 = por %p86, %p87
    %p89 = scmp.le.s32.totalorder 1, %s8
    %p90 = scmp.lt.s32.totalorder %s8, 3
    %p91 = pnand %p89, %p90
    %p92 = pneg %p91
    // Predicated region
    $region9: #{critic_forward.5} parent=5 // pred_check
      _
    $region10: #{critic_forward.5} parent=5 // pred_check_branch
      %94 = sbr.rel (%p91) target = $region12
    $region11: #{critic_forward.5} parent=5 // pred_region
      %s95 = ssub.s32 %s8, 1
      // Predicated region
      $region13: #{critic_forward.5} parent=11 // pred_check
        %p96 = pneg %p29
      $region14: #{critic_forward.5} parent=11 // pred_check_branch
        %98 = sbr.rel (%p96) target = $region16
      $region15: #{critic_forward.5} parent=11 // pred_region
        _
      $region16: #{critic_forward.5} parent=11 // pred_fallthru
        _
    $region12: #{critic_forward.5} parent=5 // pred_fallthru
      _
    %p99 = scmp.lt.s32.totalorder %s8, 2
    // Predicated region
    $region17: #{critic_forward.5} parent=5 // pred_check
      %p100 = pneg %p99
    $region18: #{critic_forward.5} parent=5 // pred_check_branch
      %102 = sbr.rel (%p100) target = $region20
    $region19: #{critic_forward.5} parent=5 // pred_region
      // Predicated region
      $region21: #{critic_forward.5} parent=19 // pred_check
        %p103 = pneg %p49
      $region22: #{critic_forward.5} parent=19 // pred_check_branch
        %105 = sbr.rel (%p103) target = $region24
      $region23: #{critic_forward.5} parent=19 // pred_region
        %p106 = scmp.lt.s32.totalorder %s8, 1
        %s107 = scalar_select %p106, %s8, 1
        %s108 = smul.addr %s107, 192
        %s109 = smul.addr %s108, 4
        %s110 = scalar_lea.vmem %s1, %s109
      $region24: #{critic_forward.5} parent=19 // pred_fallthru
        _
    $region20: #{critic_forward.5} parent=5 // pred_fallthru
      _
    %p111 = scmp.le.s32.totalorder 1, %s8
    %p112 = scmp.lt.s32.totalorder %s8, 3
    %p113 = pnand %p111, %p112
    %p114 = pneg %p113
    // Predicated region
    $region25: #{critic_forward.5} parent=5 // pred_check
      _
    $region26: #{critic_forward.5} parent=5 // pred_check_branch
      %116 = sbr.rel (%p113) target = $region28
    $region27: #{critic_forward.5} parent=5 // pred_region
      %s117 = ssub.s32 %s8, 1
      %p118 = pneg %p29
      %p119 = pneg %p26
      %p120 = scmp.lt.s32.totalorder %s13, 1
      %s121 = scalar_select %p120, %s13, 1
      %s122 = smul.addr %s121, 192
      %s123 = smul.addr %s122, 4
      %s124 = scalar_lea.vmem %s1, %s123
      %p125 = pneg %p55
      %p126 = pneg %p52
      %p127 = pneg %p81
      %p128 = pneg %p78
      %p129 = scmp.lt.s32.totalorder %s13, 1
      %s130 = scalar_select %p129, %s13, 1
      %s131 = smul.addr %s130, 32
      %s132 = smul.addr %s131, 4
      %s133 = scalar_lea.vmem %s2, %s132
      %p134 = scmp.lt.s32.totalorder %s13, 1
      %s135 = scalar_select %p134, %s13, 1
      %s136 = smul.addr %s135, 192
      %s137 = smul.addr %s136, 4
      %s138 = scalar_lea.vmem %s1, %s137
      %p139 = scmp.lt.s32.totalorder %s13, 1
      %s140 = scalar_select %p139, %s13, 1
      %s141 = smul.addr %s140, 32
      %s142 = smul.addr %s141, 4
      %s143 = scalar_lea.vmem %s2, %s142
      %v145 = vld [vmem:[%s0] sm:$0xf]
      %v146 = vld [vmem:[%s138] sm:$0xff]
      %v147 = vld [vmem:[%s138 + $0x8] sm:$0xff]
      %v148 = vld [vmem:[%s138 + $0x10] sm:$0xff]
      %v149 = vld [vmem:[%s138 + $0x18] sm:$0xff]
      %v150 = vld [vmem:[%s138 + $0x20] sm:$0xff]
      %v151 = vld [vmem:[%s138 + $0x28] sm:$0xff]
      %v152 = vld [vmem:[%s138 + $0x30] sm:$0xff]
      %v153 = vld [vmem:[%s138 + $0x38] sm:$0xff]
      %v154 = vld [vmem:[%s138 + $0x40] sm:$0xff]
      %v155 = vld [vmem:[%s138 + $0x48] sm:$0xff]
      %v156 = vld [vmem:[%s138 + $0x50] sm:$0xff]
      %v157 = vld [vmem:[%s138 + $0x58] sm:$0xff]
      %v158 = vld [vmem:[%s138 + $0x60] sm:$0xff]
      %v159 = vld [vmem:[%s138 + $0x68] sm:$0xff]
      %v160 = vld [vmem:[%s138 + $0x70] sm:$0xff]
      %v161 = vld [vmem:[%s138 + $0x78] sm:$0xff]
      %v162 = vld [vmem:[%s138 + $0x80] sm:$0xff]
      %v163 = vld [vmem:[%s138 + $0x88] sm:$0xff]
      %v164 = vld [vmem:[%s138 + $0x90] sm:$0xff]
      %v165 = vld [vmem:[%s138 + $0x98] sm:$0xff]
      %v166 = vld [vmem:[%s138 + $0xa0] sm:$0xff]
      %v167 = vld [vmem:[%s138 + $0xa8] sm:$0xff]
      %v168 = vld [vmem:[%s138 + $0xb0] sm:$0xff]
      %v169 = vld [vmem:[%s138 + $0xb8] sm:$0xff]
      %v170 = vld [vmem:[%s138 + $0xc0] sm:$0xff]
      %v171 = vld [vmem:[%s138 + $0xc8] sm:$0xff]
      %v172 = vld [vmem:[%s138 + $0xd0] sm:$0xff]
      %v173 = vld [vmem:[%s138 + $0xd8] sm:$0xff]
      %v174 = vld [vmem:[%s138 + $0xe0] sm:$0xff]
      %v175 = vld [vmem:[%s138 + $0xe8] sm:$0xff]
      %v176 = vld [vmem:[%s138 + $0xf0] sm:$0xff]
      %v177 = vld [vmem:[%s138 + $0xf8] sm:$0xff]
      %v178 = vld [vmem:[%s138 + $0x100] sm:$0xff]
      %v179 = vld [vmem:[%s138 + $0x108] sm:$0xff]
      %v180 = vld [vmem:[%s138 + $0x110] sm:$0xff]
      %v181 = vld [vmem:[%s138 + $0x118] sm:$0xff]
      %v182 = vld [vmem:[%s138 + $0x120] sm:$0xff]
      %v183 = vld [vmem:[%s138 + $0x128] sm:$0xff]
      %v184 = vld [vmem:[%s138 + $0x130] sm:$0xff]
      %v185 = vld [vmem:[%s138 + $0x138] sm:$0xff]
      %v186 = vld [vmem:[%s138 + $0x140] sm:$0xff]
      %v187 = vld [vmem:[%s138 + $0x148] sm:$0xff]
      %v188 = vld [vmem:[%s138 + $0x150] sm:$0xff]
      %v189 = vld [vmem:[%s138 + $0x158] sm:$0xff]
      %v190 = vld [vmem:[%s138 + $0x160] sm:$0xff]
      %v191 = vld [vmem:[%s138 + $0x168] sm:$0xff]
      %v192 = vld [vmem:[%s138 + $0x170] sm:$0xff]
      %v193 = vld [vmem:[%s138 + $0x178] sm:$0xff]
      %v194 = vld [vmem:[%s138 + $0x180] sm:$0xff]
      %v195 = vld [vmem:[%s138 + $0x188] sm:$0xff]
      %v196 = vld [vmem:[%s138 + $0x190] sm:$0xff]
      %v197 = vld [vmem:[%s138 + $0x198] sm:$0xff]
      %v198 = vld [vmem:[%s138 + $0x1a0] sm:$0xff]
      %v199 = vld [vmem:[%s138 + $0x1a8] sm:$0xff]
      %v200 = vld [vmem:[%s138 + $0x1b0] sm:$0xff]
      %v201 = vld [vmem:[%s138 + $0x1b8] sm:$0xff]
      %v202 = vld [vmem:[%s138 + $0x1c0] sm:$0xff]
      %v203 = vld [vmem:[%s138 + $0x1c8] sm:$0xff]
      %v204 = vld [vmem:[%s138 + $0x1d0] sm:$0xff]
      %v205 = vld [vmem:[%s138 + $0x1d8] sm:$0xff]
      %v206 = vld [vmem:[%s138 + $0x1e0] sm:$0xff]
      %v207 = vld [vmem:[%s138 + $0x1e8] sm:$0xff]
      %v208 = vld [vmem:[%s138 + $0x1f0] sm:$0xff]
      %v209 = vld [vmem:[%s138 + $0x1f8] sm:$0xff]
      %v210 = vld [vmem:[%s138 + $0x200] sm:$0xff]
      %v211 = vld [vmem:[%s138 + $0x208] sm:$0xff]
      %v212 = vld [vmem:[%s138 + $0x210] sm:$0xff]
      %v213 = vld [vmem:[%s138 + $0x218] sm:$0xff]
      %v214 = vld [vmem:[%s138 + $0x220] sm:$0xff]
      %v215 = vld [vmem:[%s138 + $0x228] sm:$0xff]
      %v216 = vld [vmem:[%s138 + $0x230] sm:$0xff]
      %v217 = vld [vmem:[%s138 + $0x238] sm:$0xff]
      %v218 = vld [vmem:[%s138 + $0x240] sm:$0xff]
      %v219 = vld [vmem:[%s138 + $0x248] sm:$0xff]
      %v220 = vld [vmem:[%s138 + $0x250] sm:$0xff]
      %v221 = vld [vmem:[%s138 + $0x258] sm:$0xff]
      %v222 = vld [vmem:[%s138 + $0x260] sm:$0xff]
      %v223 = vld [vmem:[%s138 + $0x268] sm:$0xff]
      %v224 = vld [vmem:[%s138 + $0x270] sm:$0xff]
      %v225 = vld [vmem:[%s138 + $0x278] sm:$0xff]
      %v226 = vld [vmem:[%s138 + $0x280] sm:$0xff]
      %v227 = vld [vmem:[%s138 + $0x288] sm:$0xff]
      %v228 = vld [vmem:[%s138 + $0x290] sm:$0xff]
      %v229 = vld [vmem:[%s138 + $0x298] sm:$0xff]
      %v230 = vld [vmem:[%s138 + $0x2a0] sm:$0xff]
      %v231 = vld [vmem:[%s138 + $0x2a8] sm:$0xff]
      %v232 = vld [vmem:[%s138 + $0x2b0] sm:$0xff]
      %v233 = vld [vmem:[%s138 + $0x2b8] sm:$0xff]
      %v234 = vld [vmem:[%s138 + $0x2c0] sm:$0xff]
      %v235 = vld [vmem:[%s138 + $0x2c8] sm:$0xff]
      %v236 = vld [vmem:[%s138 + $0x2d0] sm:$0xff]
      %v237 = vld [vmem:[%s138 + $0x2d8] sm:$0xff]
      %v238 = vld [vmem:[%s138 + $0x2e0] sm:$0xff]
      %v239 = vld [vmem:[%s138 + $0x2e8] sm:$0xff]
      %v240 = vld [vmem:[%s138 + $0x2f0] sm:$0xff]
      %v241 = vld [vmem:[%s138 + $0x2f8] sm:$0xff]
      %v338 = vunpack.c.l.b16 %v146
      %v339 = vunpack.c.h.b16 %v146
      %v340 = vunpack.c.l.b16 %v147
      %v341 = vunpack.c.h.b16 %v147
      %v342 = vunpack.c.l.b16 %v148
      %v343 = vunpack.c.h.b16 %v148
      %v344 = vunpack.c.l.b16 %v149
      %v345 = vunpack.c.h.b16 %v149
      %v346 = vunpack.c.l.b16 %v150
      %v347 = vunpack.c.h.b16 %v150
      %v348 = vunpack.c.l.b16 %v151
      %v349 = vunpack.c.h.b16 %v151
      %v350 = vunpack.c.l.b16 %v152
      %v351 = vunpack.c.h.b16 %v152
      %v352 = vunpack.c.l.b16 %v153
      %v353 = vunpack.c.h.b16 %v153
      %v354 = vunpack.c.l.b16 %v154
      %v355 = vunpack.c.h.b16 %v154
      %v356 = vunpack.c.l.b16 %v155
      %v357 = vunpack.c.h.b16 %v155
      %v358 = vunpack.c.l.b16 %v156
      %v359 = vunpack.c.h.b16 %v156
      %v360 = vunpack.c.l.b16 %v157
      %v361 = vunpack.c.h.b16 %v157
      %v362 = vunpack.c.l.b16 %v158
      %v363 = vunpack.c.h.b16 %v158
      %v364 = vunpack.c.l.b16 %v159
      %v365 = vunpack.c.h.b16 %v159
      %v366 = vunpack.c.l.b16 %v160
      %v367 = vunpack.c.h.b16 %v160
      %v368 = vunpack.c.l.b16 %v161
      %v369 = vunpack.c.h.b16 %v161
      %v370 = vunpack.c.l.b16 %v162
      %v371 = vunpack.c.h.b16 %v162
      %v372 = vunpack.c.l.b16 %v163
      %v373 = vunpack.c.h.b16 %v163
      %v374 = vunpack.c.l.b16 %v164
      %v375 = vunpack.c.h.b16 %v164
      %v376 = vunpack.c.l.b16 %v165
      %v377 = vunpack.c.h.b16 %v165
      %v378 = vunpack.c.l.b16 %v166
      %v379 = vunpack.c.h.b16 %v166
      %v380 = vunpack.c.l.b16 %v167
      %v381 = vunpack.c.h.b16 %v167
      %v382 = vunpack.c.l.b16 %v168
      %v383 = vunpack.c.h.b16 %v168
      %v384 = vunpack.c.l.b16 %v169
      %v385 = vunpack.c.h.b16 %v169
      %v386 = vunpack.c.l.b16 %v170
      %v387 = vunpack.c.h.b16 %v170
      %v388 = vunpack.c.l.b16 %v171
      %v389 = vunpack.c.h.b16 %v171
      %v390 = vunpack.c.l.b16 %v172
      %v391 = vunpack.c.h.b16 %v172
      %v392 = vunpack.c.l.b16 %v173
      %v393 = vunpack.c.h.b16 %v173
      %v394 = vunpack.c.l.b16 %v174
      %v395 = vunpack.c.h.b16 %v174
      %v396 = vunpack.c.l.b16 %v175
      %v397 = vunpack.c.h.b16 %v175
      %v398 = vunpack.c.l.b16 %v176
      %v399 = vunpack.c.h.b16 %v176
      %v400 = vunpack.c.l.b16 %v177
      %v401 = vunpack.c.h.b16 %v177
      %v402 = vunpack.c.l.b16 %v178
      %v403 = vunpack.c.h.b16 %v178
      %v404 = vunpack.c.l.b16 %v179
      %v405 = vunpack.c.h.b16 %v179
      %v406 = vunpack.c.l.b16 %v180
      %v407 = vunpack.c.h.b16 %v180
      %v408 = vunpack.c.l.b16 %v181
      %v409 = vunpack.c.h.b16 %v181
      %v410 = vunpack.c.l.b16 %v182
      %v411 = vunpack.c.h.b16 %v182
      %v412 = vunpack.c.l.b16 %v183
      %v413 = vunpack.c.h.b16 %v183
      %v414 = vunpack.c.l.b16 %v184
      %v415 = vunpack.c.h.b16 %v184
      %v416 = vunpack.c.l.b16 %v185
      %v417 = vunpack.c.h.b16 %v185
      %v418 = vunpack.c.l.b16 %v186
      %v419 = vunpack.c.h.b16 %v186
      %v420 = vunpack.c.l.b16 %v187
      %v421 = vunpack.c.h.b16 %v187
      %v422 = vunpack.c.l.b16 %v188
      %v423 = vunpack.c.h.b16 %v188
      %v424 = vunpack.c.l.b16 %v189
      %v425 = vunpack.c.h.b16 %v189
      %v426 = vunpack.c.l.b16 %v190
      %v427 = vunpack.c.h.b16 %v190
      %v428 = vunpack.c.l.b16 %v191
      %v429 = vunpack.c.h.b16 %v191
      %v430 = vunpack.c.l.b16 %v192
      %v431 = vunpack.c.h.b16 %v192
      %v432 = vunpack.c.l.b16 %v193
      %v433 = vunpack.c.h.b16 %v193
      %v434 = vunpack.c.l.b16 %v194
      %v435 = vunpack.c.h.b16 %v194
      %v436 = vunpack.c.l.b16 %v195
      %v437 = vunpack.c.h.b16 %v195
      %v438 = vunpack.c.l.b16 %v196
      %v439 = vunpack.c.h.b16 %v196
      %v440 = vunpack.c.l.b16 %v197
      %v441 = vunpack.c.h.b16 %v197
      %v442 = vunpack.c.l.b16 %v198
      %v443 = vunpack.c.h.b16 %v198
      %v444 = vunpack.c.l.b16 %v199
      %v445 = vunpack.c.h.b16 %v199
      %v446 = vunpack.c.l.b16 %v200
      %v447 = vunpack.c.h.b16 %v200
      %v448 = vunpack.c.l.b16 %v201
      %v449 = vunpack.c.h.b16 %v201
      %v450 = vunpack.c.l.b16 %v202
      %v451 = vunpack.c.h.b16 %v202
      %v452 = vunpack.c.l.b16 %v203
      %v453 = vunpack.c.h.b16 %v203
      %v454 = vunpack.c.l.b16 %v204
      %v455 = vunpack.c.h.b16 %v204
      %v456 = vunpack.c.l.b16 %v205
      %v457 = vunpack.c.h.b16 %v205
      %v458 = vunpack.c.l.b16 %v206
      %v459 = vunpack.c.h.b16 %v206
      %v460 = vunpack.c.l.b16 %v207
      %v461 = vunpack.c.h.b16 %v207
      %v462 = vunpack.c.l.b16 %v208
      %v463 = vunpack.c.h.b16 %v208
      %v464 = vunpack.c.l.b16 %v209
      %v465 = vunpack.c.h.b16 %v209
      %v466 = vunpack.c.l.b16 %v210
      %v467 = vunpack.c.h.b16 %v210
      %v468 = vunpack.c.l.b16 %v211
      %v469 = vunpack.c.h.b16 %v211
      %v470 = vunpack.c.l.b16 %v212
      %v471 = vunpack.c.h.b16 %v212
      %v472 = vunpack.c.l.b16 %v213
      %v473 = vunpack.c.h.b16 %v213
      %v474 = vunpack.c.l.b16 %v214
      %v475 = vunpack.c.h.b16 %v214
      %v476 = vunpack.c.l.b16 %v215
      %v477 = vunpack.c.h.b16 %v215
      %v478 = vunpack.c.l.b16 %v216
      %v479 = vunpack.c.h.b16 %v216
      %v480 = vunpack.c.l.b16 %v217
      %v481 = vunpack.c.h.b16 %v217
      %v482 = vunpack.c.l.b16 %v218
      %v483 = vunpack.c.h.b16 %v218
      %v484 = vunpack.c.l.b16 %v219
      %v485 = vunpack.c.h.b16 %v219
      %v486 = vunpack.c.l.b16 %v220
      %v487 = vunpack.c.h.b16 %v220
      %v488 = vunpack.c.l.b16 %v221
      %v489 = vunpack.c.h.b16 %v221
      %v490 = vunpack.c.l.b16 %v222
      %v491 = vunpack.c.h.b16 %v222
      %v492 = vunpack.c.l.b16 %v223
      %v493 = vunpack.c.h.b16 %v223
      %v494 = vunpack.c.l.b16 %v224
      %v495 = vunpack.c.h.b16 %v224
      %v496 = vunpack.c.l.b16 %v225
      %v497 = vunpack.c.h.b16 %v225
      %v498 = vunpack.c.l.b16 %v226
      %v499 = vunpack.c.h.b16 %v226
      %v500 = vunpack.c.l.b16 %v227
      %v501 = vunpack.c.h.b16 %v227
      %v502 = vunpack.c.l.b16 %v228
      %v503 = vunpack.c.h.b16 %v228
      %v504 = vunpack.c.l.b16 %v229
      %v505 = vunpack.c.h.b16 %v229
      %v506 = vunpack.c.l.b16 %v230
      %v507 = vunpack.c.h.b16 %v230
      %v508 = vunpack.c.l.b16 %v231
      %v509 = vunpack.c.h.b16 %v231
      %v510 = vunpack.c.l.b16 %v232
      %v511 = vunpack.c.h.b16 %v232
      %v512 = vunpack.c.l.b16 %v233
      %v513 = vunpack.c.h.b16 %v233
      %v514 = vunpack.c.l.b16 %v234
      %v515 = vunpack.c.h.b16 %v234
      %v516 = vunpack.c.l.b16 %v235
      %v517 = vunpack.c.h.b16 %v235
      %v518 = vunpack.c.l.b16 %v236
      %v519 = vunpack.c.h.b16 %v236
      %v520 = vunpack.c.l.b16 %v237
      %v521 = vunpack.c.h.b16 %v237
      %v522 = vunpack.c.l.b16 %v238
      %v523 = vunpack.c.h.b16 %v238
      %v524 = vunpack.c.l.b16 %v239
      %v525 = vunpack.c.h.b16 %v239
      %v526 = vunpack.c.l.b16 %v240
      %v527 = vunpack.c.h.b16 %v240
      %v528 = vunpack.c.l.b16 %v241
      %v529 = vunpack.c.h.b16 %v241
      %v530 = vpack.c.b16 %v370, %v338
      %v531 = vpack.c.b16 %v371, %v339
      %v532 = vpack.c.b16 %v372, %v340
      %v533 = vpack.c.b16 %v373, %v341
      %v534 = vpack.c.b16 %v374, %v342
      %v535 = vpack.c.b16 %v375, %v343
      %v536 = vpack.c.b16 %v376, %v344
      %v537 = vpack.c.b16 %v377, %v345
      %v538 = vpack.c.b16 %v378, %v346
      %v539 = vpack.c.b16 %v379, %v347
      %v540 = vpack.c.b16 %v380, %v348
      %v541 = vpack.c.b16 %v381, %v349
      %v542 = vpack.c.b16 %v382, %v350
      %v543 = vpack.c.b16 %v383, %v351
      %v544 = vpack.c.b16 %v384, %v352
      %v545 = vpack.c.b16 %v385, %v353
      %v546 = vpack.c.b16 %v386, %v354
      %v547 = vpack.c.b16 %v387, %v355
      %v548 = vpack.c.b16 %v388, %v356
      %v549 = vpack.c.b16 %v389, %v357
      %v550 = vpack.c.b16 %v390, %v358
      %v551 = vpack.c.b16 %v391, %v359
      %v552 = vpack.c.b16 %v392, %v360
      %v553 = vpack.c.b16 %v393, %v361
      %v554 = vpack.c.b16 %v394, %v362
      %v555 = vpack.c.b16 %v395, %v363
      %v556 = vpack.c.b16 %v396, %v364
      %v557 = vpack.c.b16 %v397, %v365
      %v558 = vpack.c.b16 %v398, %v366
      %v559 = vpack.c.b16 %v399, %v367
      %v560 = vpack.c.b16 %v400, %v368
      %v561 = vpack.c.b16 %v401, %v369
      %v562 = vpack.c.b16 %v434, %v402
      %v563 = vpack.c.b16 %v435, %v403
      %v564 = vpack.c.b16 %v436, %v404
      %v565 = vpack.c.b16 %v437, %v405
      %v566 = vpack.c.b16 %v438, %v406
      %v567 = vpack.c.b16 %v439, %v407
      %v568 = vpack.c.b16 %v440, %v408
      %v569 = vpack.c.b16 %v441, %v409
      %v570 = vpack.c.b16 %v442, %v410
      %v571 = vpack.c.b16 %v443, %v411
      %v572 = vpack.c.b16 %v444, %v412
      %v573 = vpack.c.b16 %v445, %v413
      %v574 = vpack.c.b16 %v446, %v414
      %v575 = vpack.c.b16 %v447, %v415
      %v576 = vpack.c.b16 %v448, %v416
      %v577 = vpack.c.b16 %v449, %v417
      %v578 = vpack.c.b16 %v450, %v418
      %v579 = vpack.c.b16 %v451, %v419
      %v580 = vpack.c.b16 %v452, %v420
      %v581 = vpack.c.b16 %v453, %v421
      %v582 = vpack.c.b16 %v454, %v422
      %v583 = vpack.c.b16 %v455, %v423
      %v584 = vpack.c.b16 %v456, %v424
      %v585 = vpack.c.b16 %v457, %v425
      %v586 = vpack.c.b16 %v458, %v426
      %v587 = vpack.c.b16 %v459, %v427
      %v588 = vpack.c.b16 %v460, %v428
      %v589 = vpack.c.b16 %v461, %v429
      %v590 = vpack.c.b16 %v462, %v430
      %v591 = vpack.c.b16 %v463, %v431
      %v592 = vpack.c.b16 %v464, %v432
      %v593 = vpack.c.b16 %v465, %v433
      %v594 = vpack.c.b16 %v498, %v466
      %v595 = vpack.c.b16 %v499, %v467
      %v596 = vpack.c.b16 %v500, %v468
      %v597 = vpack.c.b16 %v501, %v469
      %v598 = vpack.c.b16 %v502, %v470
      %v599 = vpack.c.b16 %v503, %v471
      %v600 = vpack.c.b16 %v504, %v472
      %v601 = vpack.c.b16 %v505, %v473
      %v602 = vpack.c.b16 %v506, %v474
      %v603 = vpack.c.b16 %v507, %v475
      %v604 = vpack.c.b16 %v508, %v476
      %v605 = vpack.c.b16 %v509, %v477
      %v606 = vpack.c.b16 %v510, %v478
      %v607 = vpack.c.b16 %v511, %v479
      %v608 = vpack.c.b16 %v512, %v480
      %v609 = vpack.c.b16 %v513, %v481
      %v610 = vpack.c.b16 %v514, %v482
      %v611 = vpack.c.b16 %v515, %v483
      %v612 = vpack.c.b16 %v516, %v484
      %v613 = vpack.c.b16 %v517, %v485
      %v614 = vpack.c.b16 %v518, %v486
      %v615 = vpack.c.b16 %v519, %v487
      %v616 = vpack.c.b16 %v520, %v488
      %v617 = vpack.c.b16 %v521, %v489
      %v618 = vpack.c.b16 %v522, %v490
      %v619 = vpack.c.b16 %v523, %v491
      %v620 = vpack.c.b16 %v524, %v492
      %v621 = vpack.c.b16 %v525, %v493
      %v622 = vpack.c.b16 %v526, %v494
      %v623 = vpack.c.b16 %v527, %v495
      %v624 = vpack.c.b16 %v528, %v496
      %v625 = vpack.c.b16 %v529, %v497
      %vm722 = vcmask 392192
      %v724 = vsel %vm722, %v145, 0
      %726 = vmatprep.subr.bf16.mxu0 %v531
      %727 = vmatpush1.bf16.msra.mxu0 %v530
      %728 = vmatprep.subr.bf16.mxu0 %v563
      %729 = vmatpush1.bf16.msra.mxu0 %v562
      %730 = vmatprep.subr.bf16.mxu0 %v595
      %731 = vmatpush1.bf16.msra.mxu0 %v594
      %732 = vmatprep.subr.bf16.mxu0 0
      %733 = vmatpush1.bf16.msra.mxu0 0
      %734 = vmatprep.subr.bf16.mxu0 0
      %735 = vmatpush1.bf16.msra.mxu0 0
      %736 = vmatprep.subr.bf16.mxu0 0
      %737 = vmatpush1.bf16.msra.mxu0 0
      %738 = vmatprep.subr.bf16.mxu0 0
      %739 = vmatpush1.bf16.msra.mxu0 0
      %740 = vmatprep.subr.bf16.mxu0 0
      %741 = vmatpush1.bf16.msra.mxu0 0
      %742 = vmatprep.subr.bf16.mxu0 0
      %743 = vmatpush1.bf16.msra.mxu0 0
      %744 = vmatprep.subr.bf16.mxu0 0
      %745 = vmatpush1.bf16.msra.mxu0 0
      %746 = vmatprep.subr.bf16.mxu0 0
      %747 = vmatpush1.bf16.msra.mxu0 0
      %748 = vmatprep.subr.bf16.mxu0 0
      %749 = vmatpush1.bf16.msra.mxu0 0
      %750 = vmatprep.subr.bf16.mxu0 0
      %751 = vmatpush1.bf16.msra.mxu0 0
      %752 = vmatprep.subr.bf16.mxu0 0
      %753 = vmatpush1.bf16.msra.mxu0 0
      %754 = vmatprep.subr.bf16.mxu0 0
      %755 = vmatpush1.bf16.msra.mxu0 0
      %756 = vmatprep.subr.bf16.mxu0 0
      %757 = vmatpush1.bf16.msra.mxu0 0
      %758 = vmatprep.mubr.bf16.mxu0 0
      %759 = vmatmul.mubr.bf16.gmra.mrb[0].mxu0 %v724
      %v760 = vpop.f32.mrb[0].mxu0
      %v761 = vadd.f32 0.0, %v760
      %v762 = vpop.f32.mrb[0].mxu0
      %v763 = vadd.f32 0.0, %v762
      %v764 = vpop.f32.mrb[0].mxu0
      %v765 = vpop.f32.mrb[0].mxu0
      %766 = vdwg.mxu0
      %767 = vmatprep.subr.bf16.mxu0 %v533
      %768 = vmatpush1.bf16.msra.mxu0 %v532
      %769 = vmatprep.subr.bf16.mxu0 %v565
      %770 = vmatpush1.bf16.msra.mxu0 %v564
      %771 = vmatprep.subr.bf16.mxu0 %v597
      %772 = vmatpush1.bf16.msra.mxu0 %v596
      %773 = vmatprep.subr.bf16.mxu0 0
      %774 = vmatpush1.bf16.msra.mxu0 0
      %775 = vmatprep.subr.bf16.mxu0 0
      %776 = vmatpush1.bf16.msra.mxu0 0
      %777 = vmatprep.subr.bf16.mxu0 0
      %778 = vmatpush1.bf16.msra.mxu0 0
      %779 = vmatprep.subr.bf16.mxu0 0
      %780 = vmatpush1.bf16.msra.mxu0 0
      %781 = vmatprep.subr.bf16.mxu0 0
      %782 = vmatpush1.bf16.msra.mxu0 0
      %783 = vmatprep.subr.bf16.mxu0 0
      %784 = vmatpush1.bf16.msra.mxu0 0
      %785 = vmatprep.subr.bf16.mxu0 0
      %786 = vmatpush1.bf16.msra.mxu0 0
      %787 = vmatprep.subr.bf16.mxu0 0
      %788 = vmatpush1.bf16.msra.mxu0 0
      %789 = vmatprep.subr.bf16.mxu0 0
      %790 = vmatpush1.bf16.msra.mxu0 0
      %791 = vmatprep.subr.bf16.mxu0 0
      %792 = vmatpush1.bf16.msra.mxu0 0
      %793 = vmatprep.subr.bf16.mxu0 0
      %794 = vmatpush1.bf16.msra.mxu0 0
      %795 = vmatprep.subr.bf16.mxu0 0
      %796 = vmatpush1.bf16.msra.mxu0 0
      %797 = vmatprep.subr.bf16.mxu0 0
      %798 = vmatpush1.bf16.msra.mxu0 0
      %799 = vmatprep.mubr.bf16.mxu0 0
      %800 = vmatmul.mubr.bf16.gmra.mrb[0].mxu0 %v724
      %v801 = vpop.f32.mrb[0].mxu0
      %v802 = vadd.f32 0.0, %v801
      %v803 = vpop.f32.mrb[0].mxu0
      %v804 = vadd.f32 0.0, %v803
      %v805 = vpop.f32.mrb[0].mxu0
      %v806 = vpop.f32.mrb[0].mxu0
      %807 = vdwg.mxu0
      %808 = vmatprep.subr.bf16.mxu0 %v535
      %809 = vmatpush1.bf16.msra.mxu0 %v534
      %810 = vmatprep.subr.bf16.mxu0 %v567
      %811 = vmatpush1.bf16.msra.mxu0 %v566
      %812 = vmatprep.subr.bf16.mxu0 %v599
      %813 = vmatpush1.bf16.msra.mxu0 %v598
      %814 = vmatprep.subr.bf16.mxu0 0
      %815 = vmatpush1.bf16.msra.mxu0 0
      %816 = vmatprep.subr.bf16.mxu0 0
      %817 = vmatpush1.bf16.msra.mxu0 0
      %818 = vmatprep.subr.bf16.mxu0 0
      %819 = vmatpush1.bf16.msra.mxu0 0
      %820 = vmatprep.subr.bf16.mxu0 0
      %821 = vmatpush1.bf16.msra.mxu0 0
      %822 = vmatprep.subr.bf16.mxu0 0
      %823 = vmatpush1.bf16.msra.mxu0 0
      %824 = vmatprep.subr.bf16.mxu0 0
      %825 = vmatpush1.bf16.msra.mxu0 0
      %826 = vmatprep.subr.bf16.mxu0 0
      %827 = vmatpush1.bf16.msra.mxu0 0
      %828 = vmatprep.subr.bf16.mxu0 0
      %829 = vmatpush1.bf16.msra.mxu0 0
      %830 = vmatprep.subr.bf16.mxu0 0
      %831 = vmatpush1.bf16.msra.mxu0 0
      %832 = vmatprep.subr.bf16.mxu0 0
      %833 = vmatpush1.bf16.msra.mxu0 0
      %834 = vmatprep.subr.bf16.mxu0 0
      %835 = vmatpush1.bf16.msra.mxu0 0
      %836 = vmatprep.subr.bf16.mxu0 0
      %837 = vmatpush1.bf16.msra.mxu0 0
      %838 = vmatprep.subr.bf16.mxu0 0
      %839 = vmatpush1.bf16.msra.mxu0 0
      %840 = vmatprep.mubr.bf16.mxu0 0
      %841 = vmatmul.mubr.bf16.gmra.mrb[0].mxu0 %v724
      %v842 = vpop.f32.mrb[0].mxu0
      %v843 = vadd.f32 0.0, %v842
      %v844 = vpop.f32.mrb[0].mxu0
      %v845 = vadd.f32 0.0, %v844
      %v846 = vpop.f32.mrb[0].mxu0
      %v847 = vpop.f32.mrb[0].mxu0
      %848 = vdwg.mxu0
      %849 = vmatprep.subr.bf16.mxu0 %v537
      %850 = vmatpush1.bf16.msra.mxu0 %v536
      %851 = vmatprep.subr.bf16.mxu0 %v569
      %852 = vmatpush1.bf16.msra.mxu0 %v568
      %853 = vmatprep.subr.bf16.mxu0 %v601
      %854 = vmatpush1.bf16.msra.mxu0 %v600
      %855 = vmatprep.subr.bf16.mxu0 0
      %856 = vmatpush1.bf16.msra.mxu0 0
      %857 = vmatprep.subr.bf16.mxu0 0
      %858 = vmatpush1.bf16.msra.mxu0 0
      %859 = vmatprep.subr.bf16.mxu0 0
      %860 = vmatpush1.bf16.msra.mxu0 0
      %861 = vmatprep.subr.bf16.mxu0 0
      %862 = vmatpush1.bf16.msra.mxu0 0
      %863 = vmatprep.subr.bf16.mxu0 0
      %864 = vmatpush1.bf16.msra.mxu0 0
      %865 = vmatprep.subr.bf16.mxu0 0
      %866 = vmatpush1.bf16.msra.mxu0 0
      %867 = vmatprep.subr.bf16.mxu0 0
      %868 = vmatpush1.bf16.msra.mxu0 0
      %869 = vmatprep.subr.bf16.mxu0 0
      %870 = vmatpush1.bf16.msra.mxu0 0
      %871 = vmatprep.subr.bf16.mxu0 0
      %872 = vmatpush1.bf16.msra.mxu0 0
      %873 = vmatprep.subr.bf16.mxu0 0
      %874 = vmatpush1.bf16.msra.mxu0 0
      %875 = vmatprep.subr.bf16.mxu0 0
      %876 = vmatpush1.bf16.msra.mxu0 0
      %877 = vmatprep.subr.bf16.mxu0 0
      %878 = vmatpush1.bf16.msra.mxu0 0
      %879 = vmatprep.subr.bf16.mxu0 0
      %880 = vmatpush1.bf16.msra.mxu0 0
      %881 = vmatprep.mubr.bf16.mxu0 0
      %882 = vmatmul.mubr.bf16.gmra.mrb[0].mxu0 %v724
      %v883 = vpop.f32.mrb[0].mxu0
      %v884 = vadd.f32 0.0, %v883
      %v885 = vpop.f32.mrb[0].mxu0
      %v886 = vadd.f32 0.0, %v885
      %v887 = vpop.f32.mrb[0].mxu0
      %v888 = vpop.f32.mrb[0].mxu0
      %889 = vdwg.mxu0
      %890 = vmatprep.subr.bf16.mxu0 %v539
      %891 = vmatpush1.bf16.msra.mxu0 %v538
      %892 = vmatprep.subr.bf16.mxu0 %v571
      %893 = vmatpush1.bf16.msra.mxu0 %v570
      %894 = vmatprep.subr.bf16.mxu0 %v603
      %895 = vmatpush1.bf16.msra.mxu0 %v602
      %896 = vmatprep.subr.bf16.mxu0 0
      %897 = vmatpush1.bf16.msra.mxu0 0
      %898 = vmatprep.subr.bf16.mxu0 0
      %899 = vmatpush1.bf16.msra.mxu0 0
      %900 = vmatprep.subr.bf16.mxu0 0
      %901 = vmatpush1.bf16.msra.mxu0 0
      %902 = vmatprep.subr.bf16.mxu0 0
      %903 = vmatpush1.bf16.msra.mxu0 0
      %904 = vmatprep.subr.bf16.mxu0 0
      %905 = vmatpush1.bf16.msra.mxu0 0
      %906 = vmatprep.subr.bf16.mxu0 0
      %907 = vmatpush1.bf16.msra.mxu0 0
      %908 = vmatprep.subr.bf16.mxu0 0
      %909 = vmatpush1.bf16.msra.mxu0 0
      %910 = vmatprep.subr.bf16.mxu0 0
      %911 = vmatpush1.bf16.msra.mxu0 0
      %912 = vmatprep.subr.bf16.mxu0 0
      %913 = vmatpush1.bf16.msra.mxu0 0
      %914 = vmatprep.subr.bf16.mxu0 0
      %915 = vmatpush1.bf16.msra.mxu0 0
      %916 = vmatprep.subr.bf16.mxu0 0
      %917 = vmatpush1.bf16.msra.mxu0 0
      %918 = vmatprep.subr.bf16.mxu0 0
      %919 = vmatpush1.bf16.msra.mxu0 0
      %920 = vmatprep.subr.bf16.mxu0 0
      %921 = vmatpush1.bf16.msra.mxu0 0
      %922 = vmatprep.mubr.bf16.mxu0 0
      %923 = vmatmul.mubr.bf16.gmra.mrb[0].mxu0 %v724
      %v924 = vpop.f32.mrb[0].mxu0
      %v925 = vadd.f32 0.0, %v924
      %v926 = vpop.f32.mrb[0].mxu0
      %v927 = vadd.f32 0.0, %v926
      %v928 = vpop.f32.mrb[0].mxu0
      %v929 = vpop.f32.mrb[0].mxu0
      %930 = vdwg.mxu0
      %931 = vmatprep.subr.bf16.mxu0 %v541
      %932 = vmatpush1.bf16.msra.mxu0 %v540
      %933 = vmatprep.subr.bf16.mxu0 %v573
      %934 = vmatpush1.bf16.msra.mxu0 %v572
      %935 = vmatprep.subr.bf16.mxu0 %v605
      %936 = vmatpush1.bf16.msra.mxu0 %v604
      %937 = vmatprep.subr.bf16.mxu0 0
      %938 = vmatpush1.bf16.msra.mxu0 0
      %939 = vmatprep.subr.bf16.mxu0 0
      %940 = vmatpush1.bf16.msra.mxu0 0
      %941 = vmatprep.subr.bf16.mxu0 0
      %942 = vmatpush1.bf16.msra.mxu0 0
      %943 = vmatprep.subr.bf16.mxu0 0
      %944 = vmatpush1.bf16.msra.mxu0 0
      %945 = vmatprep.subr.bf16.mxu0 0
      %946 = vmatpush1.bf16.msra.mxu0 0
      %947 = vmatprep.subr.bf16.mxu0 0
      %948 = vmatpush1.bf16.msra.mxu0 0
      %949 = vmatprep.subr.bf16.mxu0 0
      %950 = vmatpush1.bf16.msra.mxu0 0
      %951 = vmatprep.subr.bf16.mxu0 0
      %952 = vmatpush1.bf16.msra.mxu0 0
      %953 = vmatprep.subr.bf16.mxu0 0
      %954 = vmatpush1.bf16.msra.mxu0 0
      %955 = vmatprep.subr.bf16.mxu0 0
      %956 = vmatpush1.bf16.msra.mxu0 0
      %957 = vmatprep.subr.bf16.mxu0 0
      %958 = vmatpush1.bf16.msra.mxu0 0
      %959 = vmatprep.subr.bf16.mxu0 0
      %960 = vmatpush1.bf16.msra.mxu0 0
      %961 = vmatprep.subr.bf16.mxu0 0
      %962 = vmatpush1.bf16.msra.mxu0 0
      %963 = vmatprep.mubr.bf16.mxu0 0
      %964 = vmatmul.mubr.bf16.gmra.mrb[0].mxu0 %v724
      %v965 = vpop.f32.mrb[0].mxu0
      %v966 = vadd.f32 0.0, %v965
      %v967 = vpop.f32.mrb[0].mxu0
      %v968 = vadd.f32 0.0, %v967
      %v969 = vpop.f32.mrb[0].mxu0
      %v970 = vpop.f32.mrb[0].mxu0
      %971 = vdwg.mxu0
      %972 = vmatprep.subr.bf16.mxu0 %v543
      %973 = vmatpush1.bf16.msra.mxu0 %v542
      %974 = vmatprep.subr.bf16.mxu0 %v575
      %975 = vmatpush1.bf16.msra.mxu0 %v574
      %976 = vmatprep.subr.bf16.mxu0 %v607
      %977 = vmatpush1.bf16.msra.mxu0 %v606
      %978 = vmatprep.subr.bf16.mxu0 0
      %979 = vmatpush1.bf16.msra.mxu0 0
      %980 = vmatprep.subr.bf16.mxu0 0
      %981 = vmatpush1.bf16.msra.mxu0 0
      %982 = vmatprep.subr.bf16.mxu0 0
      %983 = vmatpush1.bf16.msra.mxu0 0
      %984 = vmatprep.subr.bf16.mxu0 0
      %985 = vmatpush1.bf16.msra.mxu0 0
      %986 = vmatprep.subr.bf16.mxu0 0
      %987 = vmatpush1.bf16.msra.mxu0 0
      %988 = vmatprep.subr.bf16.mxu0 0
      %989 = vmatpush1.bf16.msra.mxu0 0
      %990 = vmatprep.subr.bf16.mxu0 0
      %991 = vmatpush1.bf16.msra.mxu0 0
      %992 = vmatprep.subr.bf16.mxu0 0
      %993 = vmatpush1.bf16.msra.mxu0 0
      %994 = vmatprep.subr.bf16.mxu0 0
      %995 = vmatpush1.bf16.msra.mxu0 0
      %996 = vmatprep.subr.bf16.mxu0 0
      %997 = vmatpush1.bf16.msra.mxu0 0
      %998 = vmatprep.subr.bf16.mxu0 0
      %999 = vmatpush1.bf16.msra.mxu0 0
      %1000 = vmatprep.subr.bf16.mxu0 0
      %1001 = vmatpush1.bf16.msra.mxu0 0
      %1002 = vmatprep.subr.bf16.mxu0 0
      %1003 = vmatpush1.bf16.msra.mxu0 0
      %1004 = vmatprep.mubr.bf16.mxu0 0
      %1005 = vmatmul.mubr.bf16.gmra.mrb[0].mxu0 %v724
      %v1006 = vpop.f32.mrb[0].mxu0
      %v1007 = vadd.f32 0.0, %v1006
      %v1008 = vpop.f32.mrb[0].mxu0
      %v1009 = vadd.f32 0.0, %v1008
      %v1010 = vpop.f32.mrb[0].mxu0
      %v1011 = vpop.f32.mrb[0].mxu0
      %1012 = vdwg.mxu0
      %1013 = vmatprep.subr.bf16.mxu0 %v545
      %1014 = vmatpush1.bf16.msra.mxu0 %v544
      %1015 = vmatprep.subr.bf16.mxu0 %v577
      %1016 = vmatpush1.bf16.msra.mxu0 %v576
      %1017 = vmatprep.subr.bf16.mxu0 %v609
      %1018 = vmatpush1.bf16.msra.mxu0 %v608
      %1019 = vmatprep.subr.bf16.mxu0 0
      %1020 = vmatpush1.bf16.msra.mxu0 0
      %1021 = vmatprep.subr.bf16.mxu0 0
      %1022 = vmatpush1.bf16.msra.mxu0 0
      %1023 = vmatprep.subr.bf16.mxu0 0
      %1024 = vmatpush1.bf16.msra.mxu0 0
      %1025 = vmatprep.subr.bf16.mxu0 0
      %1026 = vmatpush1.bf16.msra.mxu0 0
      %1027 = vmatprep.subr.bf16.mxu0 0
      %1028 = vmatpush1.bf16.msra.mxu0 0
      %1029 = vmatprep.subr.bf16.mxu0 0
      %1030 = vmatpush1.bf16.msra.mxu0 0
      %1031 = vmatprep.subr.bf16.mxu0 0
      %1032 = vmatpush1.bf16.msra.mxu0 0
      %1033 = vmatprep.subr.bf16.mxu0 0
      %1034 = vmatpush1.bf16.msra.mxu0 0
      %1035 = vmatprep.subr.bf16.mxu0 0
      %1036 = vmatpush1.bf16.msra.mxu0 0
      %1037 = vmatprep.subr.bf16.mxu0 0
      %1038 = vmatpush1.bf16.msra.mxu0 0
      %1039 = vmatprep.subr.bf16.mxu0 0
      %1040 = vmatpush1.bf16.msra.mxu0 0
      %1041 = vmatprep.subr.bf16.mxu0 0
      %1042 = vmatpush1.bf16.msra.mxu0 0
      %1043 = vmatprep.subr.bf16.mxu0 0
      %1044 = vmatpush1.bf16.msra.mxu0 0
      %1045 = vmatprep.mubr.bf16.mxu0 0
      %1046 = vmatmul.mubr.bf16.gmra.mrb[0].mxu0 %v724
      %v1047 = vpop.f32.mrb[0].mxu0
      %v1048 = vadd.f32 0.0, %v1047
      %v1049 = vpop.f32.mrb[0].mxu0
      %v1050 = vadd.f32 0.0, %v1049
      %v1051 = vpop.f32.mrb[0].mxu0
      %v1052 = vpop.f32.mrb[0].mxu0
      %1053 = vdwg.mxu0
      %1054 = vmatprep.subr.bf16.mxu0 %v547
      %1055 = vmatpush1.bf16.msra.mxu0 %v546
      %1056 = vmatprep.subr.bf16.mxu0 %v579
      %1057 = vmatpush1.bf16.msra.mxu0 %v578
      %1058 = vmatprep.subr.bf16.mxu0 %v611
      %1059 = vmatpush1.bf16.msra.mxu0 %v610
      %1060 = vmatprep.subr.bf16.mxu0 0
      %1061 = vmatpush1.bf16.msra.mxu0 0
      %1062 = vmatprep.subr.bf16.mxu0 0
      %1063 = vmatpush1.bf16.msra.mxu0 0
      %1064 = vmatprep.subr.bf16.mxu0 0
      %1065 = vmatpush1.bf16.msra.mxu0 0
      %1066 = vmatprep.subr.bf16.mxu0 0
      %1067 = vmatpush1.bf16.msra.mxu0 0
      %1068 = vmatprep.subr.bf16.mxu0 0
      %1069 = vmatpush1.bf16.msra.mxu0 0
      %1070 = vmatprep.subr.bf16.mxu0 0
      %1071 = vmatpush1.bf16.msra.mxu0 0
      %1072 = vmatprep.subr.bf16.mxu0 0
      %1073 = vmatpush1.bf16.msra.mxu0 0
      %1074 = vmatprep.subr.bf16.mxu0 0
      %1075 = vmatpush1.bf16.msra.mxu0 0
      %1076 = vmatprep.subr.bf16.mxu0 0
      %1077 = vmatpush1.bf16.msra.mxu0 0
      %1078 = vmatprep.subr.bf16.mxu0 0
      %1079 = vmatpush1.bf16.msra.mxu0 0
      %1080 = vmatprep.subr.bf16.mxu0 0
      %1081 = vmatpush1.bf16.msra.mxu0 0
      %1082 = vmatprep.subr.bf16.mxu0 0
      %1083 = vmatpush1.bf16.msra.mxu0 0
      %1084 = vmatprep.subr.bf16.mxu0 0
      %1085 = vmatpush1.bf16.msra.mxu0 0
      %1086 = vmatprep.mubr.bf16.mxu0 0
      %1087 = vmatmul.mubr.bf16.gmra.mrb[0].mxu0 %v724
      %v1088 = vpop.f32.mrb[0].mxu0
      %v1089 = vadd.f32 0.0, %v1088
      %v1090 = vpop.f32.mrb[0].mxu0
      %v1091 = vadd.f32 0.0, %v1090
      %v1092 = vpop.f32.mrb[0].mxu0
      %v1093 = vpop.f32.mrb[0].mxu0
      %1094 = vdwg.mxu0
      %1095 = vmatprep.subr.bf16.mxu0 %v549
      %1096 = vmatpush1.bf16.msra.mxu0 %v548
      %1097 = vmatprep.subr.bf16.mxu0 %v581
      %1098 = vmatpush1.bf16.msra.mxu0 %v580
      %1099 = vmatprep.subr.bf16.mxu0 %v613
      %1100 = vmatpush1.bf16.msra.mxu0 %v612
      %1101 = vmatprep.subr.bf16.mxu0 0
      %1102 = vmatpush1.bf16.msra.mxu0 0
      %1103 = vmatprep.subr.bf16.mxu0 0
      %1104 = vmatpush1.bf16.msra.mxu0 0
      %1105 = vmatprep.subr.bf16.mxu0 0
      %1106 = vmatpush1.bf16.msra.mxu0 0
      %1107 = vmatprep.subr.bf16.mxu0 0
      %1108 = vmatpush1.bf16.msra.mxu0 0
      %1109 = vmatprep.subr.bf16.mxu0 0
      %1110 = vmatpush1.bf16.msra.mxu0 0
      %1111 = vmatprep.subr.bf16.mxu0 0
      %1112 = vmatpush1.bf16.msra.mxu0 0
      %1113 = vmatprep.subr.bf16.mxu0 0
      %1114 = vmatpush1.bf16.msra.mxu0 0
      %1115 = vmatprep.subr.bf16.mxu0 0
      %1116 = vmatpush1.bf16.msra.mxu0 0
      %1117 = vmatprep.subr.bf16.mxu0 0
      %1118 = vmatpush1.bf16.msra.mxu0 0
      %1119 = vmatprep.subr.bf16.mxu0 0
      %1120 = vmatpush1.bf16.msra.mxu0 0
      %1121 = vmatprep.subr.bf16.mxu0 0
      %1122 = vmatpush1.bf16.msra.mxu0 0
      %1123 = vmatprep.subr.bf16.mxu0 0
      %1124 = vmatpush1.bf16.msra.mxu0 0
      %1125 = vmatprep.subr.bf16.mxu0 0
      %1126 = vmatpush1.bf16.msra.mxu0 0
      %1127 = vmatprep.mubr.bf16.mxu0 0
      %1128 = vmatmul.mubr.bf16.gmra.mrb[0].mxu0 %v724
      %v1129 = vpop.f32.mrb[0].mxu0
      %v1130 = vadd.f32 0.0, %v1129
      %v1131 = vpop.f32.mrb[0].mxu0
      %v1132 = vadd.f32 0.0, %v1131
      %v1133 = vpop.f32.mrb[0].mxu0
      %v1134 = vpop.f32.mrb[0].mxu0
      %1135 = vdwg.mxu0
      %1136 = vmatprep.subr.bf16.mxu0 %v551
      %1137 = vmatpush1.bf16.msra.mxu0 %v550
      %1138 = vmatprep.subr.bf16.mxu0 %v583
      %1139 = vmatpush1.bf16.msra.mxu0 %v582
      %1140 = vmatprep.subr.bf16.mxu0 %v615
      %1141 = vmatpush1.bf16.msra.mxu0 %v614
      %1142 = vmatprep.subr.bf16.mxu0 0
      %1143 = vmatpush1.bf16.msra.mxu0 0
      %1144 = vmatprep.subr.bf16.mxu0 0
      %1145 = vmatpush1.bf16.msra.mxu0 0
      %1146 = vmatprep.subr.bf16.mxu0 0
      %1147 = vmatpush1.bf16.msra.mxu0 0
      %1148 = vmatprep.subr.bf16.mxu0 0
      %1149 = vmatpush1.bf16.msra.mxu0 0
      %1150 = vmatprep.subr.bf16.mxu0 0
      %1151 = vmatpush1.bf16.msra.mxu0 0
      %1152 = vmatprep.subr.bf16.mxu0 0
      %1153 = vmatpush1.bf16.msra.mxu0 0
      %1154 = vmatprep.subr.bf16.mxu0 0
      %1155 = vmatpush1.bf16.msra.mxu0 0
      %1156 = vmatprep.subr.bf16.mxu0 0
      %1157 = vmatpush1.bf16.msra.mxu0 0
      %1158 = vmatprep.subr.bf16.mxu0 0
      %1159 = vmatpush1.bf16.msra.mxu0 0
      %1160 = vmatprep.subr.bf16.mxu0 0
      %1161 = vmatpush1.bf16.msra.mxu0 0
      %1162 = vmatprep.subr.bf16.mxu0 0
      %1163 = vmatpush1.bf16.msra.mxu0 0
      %1164 = vmatprep.subr.bf16.mxu0 0
      %1165 = vmatpush1.bf16.msra.mxu0 0
      %1166 = vmatprep.subr.bf16.mxu0 0
      %1167 = vmatpush1.bf16.msra.mxu0 0
      %1168 = vmatprep.mubr.bf16.mxu0 0
      %1169 = vmatmul.mubr.bf16.gmra.mrb[0].mxu0 %v724
      %v1170 = vpop.f32.mrb[0].mxu0
      %v1171 = vadd.f32 0.0, %v1170
      %v1172 = vpop.f32.mrb[0].mxu0
      %v1173 = vadd.f32 0.0, %v1172
      %v1174 = vpop.f32.mrb[0].mxu0
      %v1175 = vpop.f32.mrb[0].mxu0
      %1176 = vdwg.mxu0
      %1177 = vmatprep.subr.bf16.mxu0 %v553
      %1178 = vmatpush1.bf16.msra.mxu0 %v552
      %1179 = vmatprep.subr.bf16.mxu0 %v585
      %1180 = vmatpush1.bf16.msra.mxu0 %v584
      %1181 = vmatprep.subr.bf16.mxu0 %v617
      %1182 = vmatpush1.bf16.msra.mxu0 %v616
      %1183 = vmatprep.subr.bf16.mxu0 0
      %1184 = vmatpush1.bf16.msra.mxu0 0
      %1185 = vmatprep.subr.bf16.mxu0 0
      %1186 = vmatpush1.bf16.msra.mxu0 0
      %1187 = vmatprep.subr.bf16.mxu0 0
      %1188 = vmatpush1.bf16.msra.mxu0 0
      %1189 = vmatprep.subr.bf16.mxu0 0
      %1190 = vmatpush1.bf16.msra.mxu0 0
      %1191 = vmatprep.subr.bf16.mxu0 0
      %1192 = vmatpush1.bf16.msra.mxu0 0
      %1193 = vmatprep.subr.bf16.mxu0 0
      %1194 = vmatpush1.bf16.msra.mxu0 0
      %1195 = vmatprep.subr.bf16.mxu0 0
      %1196 = vmatpush1.bf16.msra.mxu0 0
      %1197 = vmatprep.subr.bf16.mxu0 0
      %1198 = vmatpush1.bf16.msra.mxu0 0
      %1199 = vmatprep.subr.bf16.mxu0 0
      %1200 = vmatpush1.bf16.msra.mxu0 0
      %1201 = vmatprep.subr.bf16.mxu0 0
      %1202 = vmatpush1.bf16.msra.mxu0 0
      %1203 = vmatprep.subr.bf16.mxu0 0
      %1204 = vmatpush1.bf16.msra.mxu0 0
      %1205 = vmatprep.subr.bf16.mxu0 0
      %1206 = vmatpush1.bf16.msra.mxu0 0
      %1207 = vmatprep.subr.bf16.mxu0 0
      %1208 = vmatpush1.bf16.msra.mxu0 0
      %1209 = vmatprep.mubr.bf16.mxu0 0
      %1210 = vmatmul.mubr.bf16.gmra.mrb[0].mxu0 %v724
      %v1211 = vpop.f32.mrb[0].mxu0
      %v1212 = vadd.f32 0.0, %v1211
      %v1213 = vpop.f32.mrb[0].mxu0
      %v1214 = vadd.f32 0.0, %v1213
      %v1215 = vpop.f32.mrb[0].mxu0
      %v1216 = vpop.f32.mrb[0].mxu0
      %1217 = vdwg.mxu0
      %1218 = vmatprep.subr.bf16.mxu0 %v555
      %1219 = vmatpush1.bf16.msra.mxu0 %v554
      %1220 = vmatprep.subr.bf16.mxu0 %v587
      %1221 = vmatpush1.bf16.msra.mxu0 %v586
      %1222 = vmatprep.subr.bf16.mxu0 %v619
      %1223 = vmatpush1.bf16.msra.mxu0 %v618
      %1224 = vmatprep.subr.bf16.mxu0 0
      %1225 = vmatpush1.bf16.msra.mxu0 0
      %1226 = vmatprep.subr.bf16.mxu0 0
      %1227 = vmatpush1.bf16.msra.mxu0 0
      %1228 = vmatprep.subr.bf16.mxu0 0
      %1229 = vmatpush1.bf16.msra.mxu0 0
      %1230 = vmatprep.subr.bf16.mxu0 0
      %1231 = vmatpush1.bf16.msra.mxu0 0
      %1232 = vmatprep.subr.bf16.mxu0 0
      %1233 = vmatpush1.bf16.msra.mxu0 0
      %1234 = vmatprep.subr.bf16.mxu0 0
      %1235 = vmatpush1.bf16.msra.mxu0 0
      %1236 = vmatprep.subr.bf16.mxu0 0
      %1237 = vmatpush1.bf16.msra.mxu0 0
      %1238 = vmatprep.subr.bf16.mxu0 0
      %1239 = vmatpush1.bf16.msra.mxu0 0
      %1240 = vmatprep.subr.bf16.mxu0 0
      %1241 = vmatpush1.bf16.msra.mxu0 0
      %1242 = vmatprep.subr.bf16.mxu0 0
      %1243 = vmatpush1.bf16.msra.mxu0 0
      %1244 = vmatprep.subr.bf16.mxu0 0
      %1245 = vmatpush1.bf16.msra.mxu0 0
      %1246 = vmatprep.subr.bf16.mxu0 0
      %1247 = vmatpush1.bf16.msra.mxu0 0
      %1248 = vmatprep.subr.bf16.mxu0 0
      %1249 = vmatpush1.bf16.msra.mxu0 0
      %1250 = vmatprep.mubr.bf16.mxu0 0
      %1251 = vmatmul.mubr.bf16.gmra.mrb[0].mxu0 %v724
      %v1252 = vpop.f32.mrb[0].mxu0
      %v1253 = vadd.f32 0.0, %v1252
      %v1254 = vpop.f32.mrb[0].mxu0
      %v1255 = vadd.f32 0.0, %v1254
      %v1256 = vpop.f32.mrb[0].mxu0
      %v1257 = vpop.f32.mrb[0].mxu0
      %1258 = vdwg.mxu0
      %1259 = vmatprep.subr.bf16.mxu0 %v557
      %1260 = vmatpush1.bf16.msra.mxu0 %v556
      %1261 = vmatprep.subr.bf16.mxu0 %v589
      %1262 = vmatpush1.bf16.msra.mxu0 %v588
      %1263 = vmatprep.subr.bf16.mxu0 %v621
      %1264 = vmatpush1.bf16.msra.mxu0 %v620
      %1265 = vmatprep.subr.bf16.mxu0 0
      %1266 = vmatpush1.bf16.msra.mxu0 0
      %1267 = vmatprep.subr.bf16.mxu0 0
      %1268 = vmatpush1.bf16.msra.mxu0 0
      %1269 = vmatprep.subr.bf16.mxu0 0
      %1270 = vmatpush1.bf16.msra.mxu0 0
      %1271 = vmatprep.subr.bf16.mxu0 0
      %1272 = vmatpush1.bf16.msra.mxu0 0
      %1273 = vmatprep.subr.bf16.mxu0 0
      %1274 = vmatpush1.bf16.msra.mxu0 0
      %1275 = vmatprep.subr.bf16.mxu0 0
      %1276 = vmatpush1.bf16.msra.mxu0 0
      %1277 = vmatprep.subr.bf16.mxu0 0
      %1278 = vmatpush1.bf16.msra.mxu0 0
      %1279 = vmatprep.subr.bf16.mxu0 0
      %1280 = vmatpush1.bf16.msra.mxu0 0
      %1281 = vmatprep.subr.bf16.mxu0 0
      %1282 = vmatpush1.bf16.msra.mxu0 0
      %1283 = vmatprep.subr.bf16.mxu0 0
      %1284 = vmatpush1.bf16.msra.mxu0 0
      %1285 = vmatprep.subr.bf16.mxu0 0
      %1286 = vmatpush1.bf16.msra.mxu0 0
      %1287 = vmatprep.subr.bf16.mxu0 0
      %1288 = vmatpush1.bf16.msra.mxu0 0
      %1289 = vmatprep.subr.bf16.mxu0 0
      %1290 = vmatpush1.bf16.msra.mxu0 0
      %1291 = vmatprep.mubr.bf16.mxu0 0
      %1292 = vmatmul.mubr.bf16.gmra.mrb[0].mxu0 %v724
      %v1293 = vpop.f32.mrb[0].mxu0
      %v1294 = vadd.f32 0.0, %v1293
      %v1295 = vpop.f32.mrb[0].mxu0
      %v1296 = vadd.f32 0.0, %v1295
      %v1297 = vpop.f32.mrb[0].mxu0
      %v1298 = vpop.f32.mrb[0].mxu0
      %1299 = vdwg.mxu0
      %1300 = vmatprep.subr.bf16.mxu0 %v559
      %1301 = vmatpush1.bf16.msra.mxu0 %v558
      %1302 = vmatprep.subr.bf16.mxu0 %v591
      %1303 = vmatpush1.bf16.msra.mxu0 %v590
      %1304 = vmatprep.subr.bf16.mxu0 %v623
      %1305 = vmatpush1.bf16.msra.mxu0 %v622
      %1306 = vmatprep.subr.bf16.mxu0 0
      %1307 = vmatpush1.bf16.msra.mxu0 0
      %1308 = vmatprep.subr.bf16.mxu0 0
      %1309 = vmatpush1.bf16.msra.mxu0 0
      %1310 = vmatprep.subr.bf16.mxu0 0
      %1311 = vmatpush1.bf16.msra.mxu0 0
      %1312 = vmatprep.subr.bf16.mxu0 0
      %1313 = vmatpush1.bf16.msra.mxu0 0
      %1314 = vmatprep.subr.bf16.mxu0 0
      %1315 = vmatpush1.bf16.msra.mxu0 0
      %1316 = vmatprep.subr.bf16.mxu0 0
      %1317 = vmatpush1.bf16.msra.mxu0 0
      %1318 = vmatprep.subr.bf16.mxu0 0
      %1319 = vmatpush1.bf16.msra.mxu0 0
      %1320 = vmatprep.subr.bf16.mxu0 0
      %1321 = vmatpush1.bf16.msra.mxu0 0
      %1322 = vmatprep.subr.bf16.mxu0 0
      %1323 = vmatpush1.bf16.msra.mxu0 0
      %1324 = vmatprep.subr.bf16.mxu0 0
      %1325 = vmatpush1.bf16.msra.mxu0 0
      %1326 = vmatprep.subr.bf16.mxu0 0
      %1327 = vmatpush1.bf16.msra.mxu0 0
      %1328 = vmatprep.subr.bf16.mxu0 0
      %1329 = vmatpush1.bf16.msra.mxu0 0
      %1330 = vmatprep.subr.bf16.mxu0 0
      %1331 = vmatpush1.bf16.msra.mxu0 0
      %1332 = vmatprep.mubr.bf16.mxu0 0
      %1333 = vmatmul.mubr.bf16.gmra.mrb[0].mxu0 %v724
      %v1334 = vpop.f32.mrb[0].mxu0
      %v1335 = vadd.f32 0.0, %v1334
      %v1336 = vpop.f32.mrb[0].mxu0
      %v1337 = vadd.f32 0.0, %v1336
      %v1338 = vpop.f32.mrb[0].mxu0
      %v1339 = vpop.f32.mrb[0].mxu0
      %1340 = vdwg.mxu0
      %1341 = vmatprep.subr.bf16.mxu0 %v561
      %1342 = vmatpush1.bf16.msra.mxu0 %v560
      %1343 = vmatprep.subr.bf16.mxu0 %v593
      %1344 = vmatpush1.bf16.msra.mxu0 %v592
      %1345 = vmatprep.subr.bf16.mxu0 %v625
      %1346 = vmatpush1.bf16.msra.mxu0 %v624
      %1347 = vmatprep.subr.bf16.mxu0 0
      %1348 = vmatpush1.bf16.msra.mxu0 0
      %1349 = vmatprep.subr.bf16.mxu0 0
      %1350 = vmatpush1.bf16.msra.mxu0 0
      %1351 = vmatprep.subr.bf16.mxu0 0
      %1352 = vmatpush1.bf16.msra.mxu0 0
      %1353 = vmatprep.subr.bf16.mxu0 0
      %1354 = vmatpush1.bf16.msra.mxu0 0
      %1355 = vmatprep.subr.bf16.mxu0 0
      %1356 = vmatpush1.bf16.msra.mxu0 0
      %1357 = vmatprep.subr.bf16.mxu0 0
      %1358 = vmatpush1.bf16.msra.mxu0 0
      %1359 = vmatprep.subr.bf16.mxu0 0
      %1360 = vmatpush1.bf16.msra.mxu0 0
      %1361 = vmatprep.subr.bf16.mxu0 0
      %1362 = vmatpush1.bf16.msra.mxu0 0
      %1363 = vmatprep.subr.bf16.mxu0 0
      %1364 = vmatpush1.bf16.msra.mxu0 0
      %1365 = vmatprep.subr.bf16.mxu0 0
      %1366 = vmatpush1.bf16.msra.mxu0 0
      %1367 = vmatprep.subr.bf16.mxu0 0
      %1368 = vmatpush1.bf16.msra.mxu0 0
      %1369 = vmatprep.subr.bf16.mxu0 0
      %1370 = vmatpush1.bf16.msra.mxu0 0
      %1371 = vmatprep.subr.bf16.mxu0 0
      %1372 = vmatpush1.bf16.msra.mxu0 0
      %1373 = vmatprep.mubr.bf16.mxu0 0
      %1374 = vmatmul.mubr.bf16.gmra.mrb[0].mxu0 %v724
      %v1375 = vpop.f32.mrb[0].mxu0
      %v1376 = vadd.f32 0.0, %v1375
      %v1377 = vpop.f32.mrb[0].mxu0
      %v1378 = vadd.f32 0.0, %v1377
      %v1379 = vpop.f32.mrb[0].mxu0
      %v1380 = vpop.f32.mrb[0].mxu0
      %1381 = vdwg.mxu0
      %v1382 = vadd.f32 %v761, %v763
      %v1383 = vadd.f32 %v1382, %v802
      %v1384 = vadd.f32 %v1383, %v804
      %v1385 = vadd.f32 %v1384, %v843
      %v1386 = vadd.f32 %v1385, %v845
      %v1387 = vadd.f32 %v1386, %v884
      %v1388 = vadd.f32 %v1387, %v886
      %v1389 = vadd.f32 %v1388, %v925
      %v1390 = vadd.f32 %v1389, %v927
      %v1391 = vadd.f32 %v1390, %v966
      %v1392 = vadd.f32 %v1391, %v968
      %v1393 = vadd.f32 %v1392, %v1007
      %v1394 = vadd.f32 %v1393, %v1009
      %v1395 = vadd.f32 %v1394, %v1048
      %v1396 = vadd.f32 %v1395, %v1050
      %v1397 = vadd.f32 %v1396, %v1089
      %v1398 = vadd.f32 %v1397, %v1091
      %v1399 = vadd.f32 %v1398, %v1130
      %v1400 = vadd.f32 %v1399, %v1132
      %v1401 = vadd.f32 %v1400, %v1171
      %v1402 = vadd.f32 %v1401, %v1173
      %v1403 = vadd.f32 %v1402, %v1212
      %v1404 = vadd.f32 %v1403, %v1214
      %v1405 = vadd.f32 %v1404, %v1253
      %v1406 = vadd.f32 %v1405, %v1255
      %v1407 = vadd.f32 %v1406, %v1294
      %v1408 = vadd.f32 %v1407, %v1296
      %v1409 = vadd.f32 %v1408, %v1335
      %v1410 = vadd.f32 %v1409, %v1337
      %v1411 = vadd.f32 %v1410, %v1376
      %v1412 = vadd.f32 %v1411, %v1378
      %1413 = vadd.xlane.f32.xlu0 %v1412
      %v1414 = vpop.xlane.xlu0 %1413
      %v1415 = vmul.f32 %v1414, 0.00024414063
      %v1416 = vmul.f32 %v761, %v761
      %v1417 = vmul.f32 %v763, %v763
      %v1418 = vmul.f32 %v802, %v802
      %v1419 = vmul.f32 %v804, %v804
      %v1420 = vmul.f32 %v843, %v843
      %v1421 = vmul.f32 %v845, %v845
      %v1422 = vmul.f32 %v884, %v884
      %v1423 = vmul.f32 %v886, %v886
      %v1424 = vmul.f32 %v925, %v925
      %v1425 = vmul.f32 %v927, %v927
      %v1426 = vmul.f32 %v966, %v966
      %v1427 = vmul.f32 %v968, %v968
      %v1428 = vmul.f32 %v1007, %v1007
      %v1429 = vmul.f32 %v1009, %v1009
      %v1430 = vmul.f32 %v1048, %v1048
      %v1431 = vmul.f32 %v1050, %v1050
      %v1432 = vmul.f32 %v1089, %v1089
      %v1433 = vmul.f32 %v1091, %v1091
      %v1434 = vmul.f32 %v1130, %v1130
      %v1435 = vmul.f32 %v1132, %v1132
      %v1436 = vmul.f32 %v1171, %v1171
      %v1437 = vmul.f32 %v1173, %v1173
      %v1438 = vmul.f32 %v1212, %v1212
      %v1439 = vmul.f32 %v1214, %v1214
      %v1440 = vmul.f32 %v1253, %v1253
      %v1441 = vmul.f32 %v1255, %v1255
      %v1442 = vmul.f32 %v1294, %v1294
      %v1443 = vmul.f32 %v1296, %v1296
      %v1444 = vmul.f32 %v1335, %v1335
      %v1445 = vmul.f32 %v1337, %v1337
      %v1446 = vmul.f32 %v1376, %v1376
      %v1447 = vmul.f32 %v1378, %v1378
      %v1448 = vadd.f32 %v1416, %v1417
      %v1449 = vadd.f32 %v1448, %v1418
      %v1450 = vadd.f32 %v1449, %v1419
      %v1451 = vadd.f32 %v1450, %v1420
      %v1452 = vadd.f32 %v1451, %v1421
      %v1453 = vadd.f32 %v1452, %v1422
      %v1454 = vadd.f32 %v1453, %v1423
      %v1455 = vadd.f32 %v1454, %v1424
      %v1456 = vadd.f32 %v1455, %v1425
      %v1457 = vadd.f32 %v1456, %v1426
      %v1458 = vadd.f32 %v1457, %v1427
      %v1459 = vadd.f32 %v1458, %v1428
      %v1460 = vadd.f32 %v1459, %v1429
      %v1461 = vadd.f32 %v1460, %v1430
      %v1462 = vadd.f32 %v1461, %v1431
      %v1463 = vadd.f32 %v1462, %v1432
      %v1464 = vadd.f32 %v1463, %v1433
      %v1465 = vadd.f32 %v1464, %v1434
      %v1466 = vadd.f32 %v1465, %v1435
      %v1467 = vadd.f32 %v1466, %v1436
      %v1468 = vadd.f32 %v1467, %v1437
      %v1469 = vadd.f32 %v1468, %v1438
      %v1470 = vadd.f32 %v1469, %v1439
      %v1471 = vadd.f32 %v1470, %v1440
      %v1472 = vadd.f32 %v1471, %v1441
      %v1473 = vadd.f32 %v1472, %v1442
      %v1474 = vadd.f32 %v1473, %v1443
      %v1475 = vadd.f32 %v1474, %v1444
      %v1476 = vadd.f32 %v1475, %v1445
      %v1477 = vadd.f32 %v1476, %v1446
      %v1478 = vadd.f32 %v1477, %v1447
      %1479 = vadd.xlane.f32.xlu0 %v1478
      %v1480 = vpop.xlane.xlu0 %1479
      %v1481 = vmul.f32 %v1480, 0.00024414063
      %v1482 = vmul.f32 %v1415, %v1415
      %v1483 = vsub.f32 %v1481, %v1482
      %v1484 = vmax.f32 %v1483, 0.0
      %v1485 = vsub.f32 %v761, %v1415
      %v1486 = vsub.f32 %v763, %v1415
      %v1487 = vsub.f32 %v802, %v1415
      %v1488 = vsub.f32 %v804, %v1415
      %v1489 = vsub.f32 %v843, %v1415
      %v1490 = vsub.f32 %v845, %v1415
      %v1491 = vsub.f32 %v884, %v1415
      %v1492 = vsub.f32 %v886, %v1415
      %v1493 = vsub.f32 %v925, %v1415
      %v1494 = vsub.f32 %v927, %v1415
      %v1495 = vsub.f32 %v966, %v1415
      %v1496 = vsub.f32 %v968, %v1415
      %v1497 = vsub.f32 %v1007, %v1415
      %v1498 = vsub.f32 %v1009, %v1415
      %v1499 = vsub.f32 %v1048, %v1415
      %v1500 = vsub.f32 %v1050, %v1415
      %v1501 = vsub.f32 %v1089, %v1415
      %v1502 = vsub.f32 %v1091, %v1415
      %v1503 = vsub.f32 %v1130, %v1415
      %v1504 = vsub.f32 %v1132, %v1415
      %v1505 = vsub.f32 %v1171, %v1415
      %v1506 = vsub.f32 %v1173, %v1415
      %v1507 = vsub.f32 %v1212, %v1415
      %v1508 = vsub.f32 %v1214, %v1415
      %v1509 = vsub.f32 %v1253, %v1415
      %v1510 = vsub.f32 %v1255, %v1415
      %v1511 = vsub.f32 %v1294, %v1415
      %v1512 = vsub.f32 %v1296, %v1415
      %v1513 = vsub.f32 %v1335, %v1415
      %v1514 = vsub.f32 %v1337, %v1415
      %v1515 = vsub.f32 %v1376, %v1415
      %v1516 = vsub.f32 %v1378, %v1415
      %v1517 = vadd.f32 %v1484, 1e-05
      %v1518 = vrsqrt.pop %v1517
      %v1519 = vmul.f32 %v1485, %v1518
      %v1520 = vmul.f32 %v1486, %v1518
      %v1521 = vmul.f32 %v1487, %v1518
      %v1522 = vmul.f32 %v1488, %v1518
      %v1523 = vmul.f32 %v1489, %v1518
      %v1524 = vmul.f32 %v1490, %v1518
      %v1525 = vmul.f32 %v1491, %v1518
      %v1526 = vmul.f32 %v1492, %v1518
      %v1527 = vmul.f32 %v1493, %v1518
      %v1528 = vmul.f32 %v1494, %v1518
      %v1529 = vmul.f32 %v1495, %v1518
      %v1530 = vmul.f32 %v1496, %v1518
      %v1531 = vmul.f32 %v1497, %v1518
      %v1532 = vmul.f32 %v1498, %v1518
      %v1533 = vmul.f32 %v1499, %v1518
      %v1534 = vmul.f32 %v1500, %v1518
      %v1535 = vmul.f32 %v1501, %v1518
      %v1536 = vmul.f32 %v1502, %v1518
      %v1537 = vmul.f32 %v1503, %v1518
      %v1538 = vmul.f32 %v1504, %v1518
      %v1539 = vmul.f32 %v1505, %v1518
      %v1540 = vmul.f32 %v1506, %v1518
      %v1541 = vmul.f32 %v1507, %v1518
      %v1542 = vmul.f32 %v1508, %v1518
      %v1543 = vmul.f32 %v1509, %v1518
      %v1544 = vmul.f32 %v1510, %v1518
      %v1545 = vmul.f32 %v1511, %v1518
      %v1546 = vmul.f32 %v1512, %v1518
      %v1547 = vmul.f32 %v1513, %v1518
      %v1548 = vmul.f32 %v1514, %v1518
      %v1549 = vmul.f32 %v1515, %v1518
      %v1550 = vmul.f32 %v1516, %v1518
      %vm1551 = vcmp.ge.f32.partialorder %v1519, 0.0
      %vm1552 = vcmp.ge.f32.partialorder %v1520, 0.0
      %vm1553 = vcmp.ge.f32.partialorder %v1521, 0.0
      %vm1554 = vcmp.ge.f32.partialorder %v1522, 0.0
      %vm1555 = vcmp.ge.f32.partialorder %v1523, 0.0
      %vm1556 = vcmp.ge.f32.partialorder %v1524, 0.0
      %vm1557 = vcmp.ge.f32.partialorder %v1525, 0.0
      %vm1558 = vcmp.ge.f32.partialorder %v1526, 0.0
      %vm1559 = vcmp.ge.f32.partialorder %v1527, 0.0
      %vm1560 = vcmp.ge.f32.partialorder %v1528, 0.0
      %vm1561 = vcmp.ge.f32.partialorder %v1529, 0.0
      %vm1562 = vcmp.ge.f32.partialorder %v1530, 0.0
      %vm1563 = vcmp.ge.f32.partialorder %v1531, 0.0
      %vm1564 = vcmp.ge.f32.partialorder %v1532, 0.0
      %vm1565 = vcmp.ge.f32.partialorder %v1533, 0.0
      %vm1566 = vcmp.ge.f32.partialorder %v1534, 0.0
      %vm1567 = vcmp.ge.f32.partialorder %v1535, 0.0
      %vm1568 = vcmp.ge.f32.partialorder %v1536, 0.0
      %vm1569 = vcmp.ge.f32.partialorder %v1537, 0.0
      %vm1570 = vcmp.ge.f32.partialorder %v1538, 0.0
      %vm1571 = vcmp.ge.f32.partialorder %v1539, 0.0
      %vm1572 = vcmp.ge.f32.partialorder %v1540, 0.0
      %vm1573 = vcmp.ge.f32.partialorder %v1541, 0.0
      %vm1574 = vcmp.ge.f32.partialorder %v1542, 0.0
      %vm1575 = vcmp.ge.f32.partialorder %v1543, 0.0
      %vm1576 = vcmp.ge.f32.partialorder %v1544, 0.0
      %vm1577 = vcmp.ge.f32.partialorder %v1545, 0.0
      %vm1578 = vcmp.ge.f32.partialorder %v1546, 0.0
      %vm1579 = vcmp.ge.f32.partialorder %v1547, 0.0
      %vm1580 = vcmp.ge.f32.partialorder %v1548, 0.0
      %vm1581 = vcmp.ge.f32.partialorder %v1549, 0.0
      %vm1582 = vcmp.ge.f32.partialorder %v1550, 0.0
      %v1583 = vmul.f32 %v1519, 0.2
      %v1584 = vmul.f32 %v1520, 0.2
      %v1585 = vmul.f32 %v1521, 0.2
      %v1586 = vmul.f32 %v1522, 0.2
      %v1587 = vmul.f32 %v1523, 0.2
      %v1588 = vmul.f32 %v1524, 0.2
      %v1589 = vmul.f32 %v1525, 0.2
      %v1590 = vmul.f32 %v1526, 0.2
      %v1591 = vmul.f32 %v1527, 0.2
      %v1592 = vmul.f32 %v1528, 0.2
      %v1593 = vmul.f32 %v1529, 0.2
      %v1594 = vmul.f32 %v1530, 0.2
      %v1595 = vmul.f32 %v1531, 0.2
      %v1596 = vmul.f32 %v1532, 0.2
      %v1597 = vmul.f32 %v1533, 0.2
      %v1598 = vmul.f32 %v1534, 0.2
      %v1599 = vmul.f32 %v1535, 0.2
      %v1600 = vmul.f32 %v1536, 0.2
      %v1601 = vmul.f32 %v1537, 0.2
      %v1602 = vmul.f32 %v1538, 0.2
      %v1603 = vmul.f32 %v1539, 0.2
      %v1604 = vmul.f32 %v1540, 0.2
      %v1605 = vmul.f32 %v1541, 0.2
      %v1606 = vmul.f32 %v1542, 0.2
      %v1607 = vmul.f32 %v1543, 0.2
      %v1608 = vmul.f32 %v1544, 0.2
      %v1609 = vmul.f32 %v1545, 0.2
      %v1610 = vmul.f32 %v1546, 0.2
      %v1611 = vmul.f32 %v1547, 0.2
      %v1612 = vmul.f32 %v1548, 0.2
      %v1613 = vmul.f32 %v1549, 0.2
      %v1614 = vmul.f32 %v1550, 0.2
      %v1615 = vsel %vm1551, %v1519, %v1583
      %v1616 = vsel %vm1552, %v1520, %v1584
      %v1617 = vsel %vm1553, %v1521, %v1585
      %v1618 = vsel %vm1554, %v1522, %v1586
      %v1619 = vsel %vm1555, %v1523, %v1587
      %v1620 = vsel %vm1556, %v1524, %v1588
      %v1621 = vsel %vm1557, %v1525, %v1589
      %v1622 = vsel %vm1558, %v1526, %v1590
      %v1623 = vsel %vm1559, %v1527, %v1591
      %v1624 = vsel %vm1560, %v1528, %v1592
      %v1625 = vsel %vm1561, %v1529, %v1593
      %v1626 = vsel %vm1562, %v1530, %v1594
      %v1627 = vsel %vm1563, %v1531, %v1595
      %v1628 = vsel %vm1564, %v1532, %v1596
      %v1629 = vsel %vm1565, %v1533, %v1597
      %v1630 = vsel %vm1566, %v1534, %v1598
      %v1631 = vsel %vm1567, %v1535, %v1599
      %v1632 = vsel %vm1568, %v1536, %v1600
      %v1633 = vsel %vm1569, %v1537, %v1601
      %v1634 = vsel %vm1570, %v1538, %v1602
      %v1635 = vsel %vm1571, %v1539, %v1603
      %v1636 = vsel %vm1572, %v1540, %v1604
      %v1637 = vsel %vm1573, %v1541, %v1605
      %v1638 = vsel %vm1574, %v1542, %v1606
      %v1639 = vsel %vm1575, %v1543, %v1607
      %v1640 = vsel %vm1576, %v1544, %v1608
      %v1641 = vsel %vm1577, %v1545, %v1609
      %v1642 = vsel %vm1578, %v1546, %v1610
      %v1643 = vsel %vm1579, %v1547, %v1611
      %v1644 = vsel %vm1580, %v1548, %v1612
      %v1645 = vsel %vm1581, %v1549, %v1613
      %v1646 = vsel %vm1582, %v1550, %v1614
      %v1647 = vpack.c.bf16 %v1615, %v1615
      %v1648 = vpack.c.bf16 %v1616, %v1616
      %v1649 = vpack.c.bf16 %v1617, %v1617
      %v1650 = vpack.c.bf16 %v1618, %v1618
      %v1651 = vpack.c.bf16 %v1619, %v1619
      %v1652 = vpack.c.bf16 %v1620, %v1620
      %v1653 = vpack.c.bf16 %v1621, %v1621
      %v1654 = vpack.c.bf16 %v1622, %v1622
      %v1655 = vpack.c.bf16 %v1623, %v1623
      %v1656 = vpack.c.bf16 %v1624, %v1624
      %v1657 = vpack.c.bf16 %v1625, %v1625
      %v1658 = vpack.c.bf16 %v1626, %v1626
      %v1659 = vpack.c.bf16 %v1627, %v1627
      %v1660 = vpack.c.bf16 %v1628, %v1628
      %v1661 = vpack.c.bf16 %v1629, %v1629
      %v1662 = vpack.c.bf16 %v1630, %v1630
      %v1663 = vpack.c.bf16 %v1631, %v1631
      %v1664 = vpack.c.bf16 %v1632, %v1632
      %v1665 = vpack.c.bf16 %v1633, %v1633
      %v1666 = vpack.c.bf16 %v1634, %v1634
      %v1667 = vpack.c.bf16 %v1635, %v1635
      %v1668 = vpack.c.bf16 %v1636, %v1636
      %v1669 = vpack.c.bf16 %v1637, %v1637
      %v1670 = vpack.c.bf16 %v1638, %v1638
      %v1671 = vpack.c.bf16 %v1639, %v1639
      %v1672 = vpack.c.bf16 %v1640, %v1640
      %v1673 = vpack.c.bf16 %v1641, %v1641
      %v1674 = vpack.c.bf16 %v1642, %v1642
      %v1675 = vpack.c.bf16 %v1643, %v1643
      %v1676 = vpack.c.bf16 %v1644, %v1644
      %v1677 = vpack.c.bf16 %v1645, %v1645
      %v1678 = vpack.c.bf16 %v1646, %v1646
      %v1711 = vunpack.c.l.b16 %v1647
      %v1712 = vunpack.c.l.b16 %v1648
      %v1713 = vunpack.c.l.b16 %v1649
      %v1714 = vunpack.c.l.b16 %v1650
      %v1715 = vunpack.c.l.b16 %v1651
      %v1716 = vunpack.c.l.b16 %v1652
      %v1717 = vunpack.c.l.b16 %v1653
      %v1718 = vunpack.c.l.b16 %v1654
      %v1719 = vunpack.c.l.b16 %v1655
      %v1720 = vunpack.c.l.b16 %v1656
      %v1721 = vunpack.c.l.b16 %v1657
      %v1722 = vunpack.c.l.b16 %v1658
      %v1723 = vunpack.c.l.b16 %v1659
      %v1724 = vunpack.c.l.b16 %v1660
      %v1725 = vunpack.c.l.b16 %v1661
      %v1726 = vunpack.c.l.b16 %v1662
      %v1727 = vunpack.c.l.b16 %v1663
      %v1728 = vunpack.c.l.b16 %v1664
      %v1729 = vunpack.c.l.b16 %v1665
      %v1730 = vunpack.c.l.b16 %v1666
      %v1731 = vunpack.c.l.b16 %v1667
      %v1732 = vunpack.c.l.b16 %v1668
      %v1733 = vunpack.c.l.b16 %v1669
      %v1734 = vunpack.c.l.b16 %v1670
      %v1735 = vunpack.c.l.b16 %v1671
      %v1736 = vunpack.c.l.b16 %v1672
      %v1737 = vunpack.c.l.b16 %v1673
      %v1738 = vunpack.c.l.b16 %v1674
      %v1739 = vunpack.c.l.b16 %v1675
      %v1740 = vunpack.c.l.b16 %v1676
      %v1741 = vunpack.c.l.b16 %v1677
      %v1742 = vunpack.c.l.b16 %v1678
      %v1743 = vpack.c.b16 %v1712, %v1711
      %v1744 = vpack.c.b16 %v1714, %v1713
      %v1745 = vpack.c.b16 %v1716, %v1715
      %v1746 = vpack.c.b16 %v1718, %v1717
      %v1747 = vpack.c.b16 %v1720, %v1719
      %v1748 = vpack.c.b16 %v1722, %v1721
      %v1749 = vpack.c.b16 %v1724, %v1723
      %v1750 = vpack.c.b16 %v1726, %v1725
      %v1751 = vpack.c.b16 %v1728, %v1727
      %v1752 = vpack.c.b16 %v1730, %v1729
      %v1753 = vpack.c.b16 %v1732, %v1731
      %v1754 = vpack.c.b16 %v1734, %v1733
      %v1755 = vpack.c.b16 %v1736, %v1735
      %v1756 = vpack.c.b16 %v1738, %v1737
      %v1757 = vpack.c.b16 %v1740, %v1739
      %v1758 = vpack.c.b16 %v1742, %v1741
      %1775 = vst [vmem:[%s143] sm:$0xff] %v1743
      %1776 = vst [vmem:[%s143 + $0x8] sm:$0xff] %v1744
      %1777 = vst [vmem:[%s143 + $0x10] sm:$0xff] %v1745
      %1778 = vst [vmem:[%s143 + $0x18] sm:$0xff] %v1746
      %1779 = vst [vmem:[%s143 + $0x20] sm:$0xff] %v1747
      %1780 = vst [vmem:[%s143 + $0x28] sm:$0xff] %v1748
      %1781 = vst [vmem:[%s143 + $0x30] sm:$0xff] %v1749
      %1782 = vst [vmem:[%s143 + $0x38] sm:$0xff] %v1750
      %1783 = vst [vmem:[%s143 + $0x40] sm:$0xff] %v1751
      %1784 = vst [vmem:[%s143 + $0x48] sm:$0xff] %v1752
      %1785 = vst [vmem:[%s143 + $0x50] sm:$0xff] %v1753
      %1786 = vst [vmem:[%s143 + $0x58] sm:$0xff] %v1754
      %1787 = vst [vmem:[%s143 + $0x60] sm:$0xff] %v1755
      %1788 = vst [vmem:[%s143 + $0x68] sm:$0xff] %v1756
      %1789 = vst [vmem:[%s143 + $0x70] sm:$0xff] %v1757
      %1790 = vst [vmem:[%s143 + $0x78] sm:$0xff] %v1758
      %p1791 = scmp.lt.s32.totalorder %s13, 1
      %s1792 = scalar_select %p1791, %s13, 1
      %s1793 = smul.addr %s1792, 32
      %s1794 = smul.addr %s1793, 4
      %s1795 = scalar_lea.vmem %s2, %s1794
      // Predicated region
      $region29: #{critic_forward.5} parent=27 // pred_check
        %p1796 = pneg %p78
      $region30: #{critic_forward.5} parent=27 // pred_check_branch
        %1798 = sbr.rel (%p1796) target = $region32
      $region31: #{critic_forward.5} parent=27 // pred_region
        _
      $region32: #{critic_forward.5} parent=27 // pred_fallthru
        _
    $region28: #{critic_forward.5} parent=5 // pred_fallthru
      _
    %p1799 = scmp.le.s32.totalorder 2, %s8
    // Predicated region
    $region33: #{critic_forward.5} parent=5 // pred_check
      %p1800 = pneg %p1799
    $region34: #{critic_forward.5} parent=5 // pred_check_branch
      %1802 = sbr.rel (%p1800) target = $region36
    $region35: #{critic_forward.5} parent=5 // pred_region
      %s1803 = ssub.s32 %s8, 2
      // Predicated region
      $region37: #{critic_forward.5} parent=35 // pred_check
        %p1804 = pneg %p84
      $region38: #{critic_forward.5} parent=35 // pred_check_branch
        %1806 = sbr.rel (%p1804) target = $region40
      $region39: #{critic_forward.5} parent=35 // pred_region
        %p1807 = scmp.lt.s32.totalorder %s14, 1
        %s1808 = scalar_select %p1807, %s14, 1
        %s1809 = smul.addr %s1808, 32
        %s1810 = smul.addr %s1809, 4
        %s1811 = scalar_lea.vmem %s2, %s1810
      $region40: #{critic_forward.5} parent=35 // pred_fallthru
        _
    $region36: #{critic_forward.5} parent=5 // pred_fallthru
      _
  $region6: #{critic_forward.5} parent=0 // loop_footer
    %s12 = sadd.s32 1, %s8
  $region7: #{critic_forward.5} parent=0 // loop_footer_branch
    %7 = sbr.rel target = $region3
  $region8: #{critic_forward.5} parent=0 // loop_exit
    _

// kernel: critic_forward.6
$region0: #{critic_forward.6}
  #allocation0 [shape = 'u32[]', space=smem, size = 0x4, offset = 0x4, fixed_abs, tag = 'smem constant byte address 0x4 - core index']
  #allocation1 [shape = 'u32[144,128]{1,0:T(1,128)}', space=vmem, size = 0x12000, scoped, tag = 'internal scratch']
  %s0 = inlined_call_operand.vmem [shape: bf16[16,128], index: 0, kind: input, shape index: {}]
  %s1 = inlined_call_operand.vmem [shape: bf16[2,128,1024], index: 1, kind: input, shape index: {}]
  %s2 = inlined_call_operand.vmem [shape: bf16[2,16,1024], index: 2, kind: output, shape index: {}]
  %s3 = sld [smem:[#allocation0]]
  $region41: #{critic_forward.6} parent=0
    _
  %s5 = ssub.s32 1, %s3
  %s6 = scalar_select 0, %s5, %s3
  loop: start=0, step=1, limit=4
  $region2: #{critic_forward.6} parent=0 // loop_pre_header
    _
  $region3: #{critic_forward.6} parent=0 // loop_header
    %s8 = sphi 0, %s12
    %p9 = scmp.ge.s32.totalorder %s8, 4
    %s16 = sphi 0, %s16
    %s18 = sphi 0, %s16
    %s19 = sphi 0, %s18
    %s33 = sphi 0, %s19
    %s39 = sphi 0, %s41
    %s42 = sphi 0, %s39
    %s43 = sphi 0, %s42
    %s59 = sphi 0, %s43
    %s65 = sphi 0, %s67
    %s68 = sphi 0, %s65
    %s69 = sphi 0, %s68
    %s85 = sphi 0, %s69
  $region4: #{critic_forward.6} parent=0 // loop_header_branch
    %11 = sbr.rel (%p9) target = $region8
  $region5: #{critic_forward.6} parent=0 // loop_body
    %s13 = ssub.s32 %s8, 1
    %s14 = ssub.s32 %s8, 2
    %s15 = sadd.s32 %s8, 1
    %s17 = sadd.s32 %s16, 1
    %p20 = scmp.eq.s32.totalorder %s8, 1
    %p21 = scmp.ne.s32.totalorder %s16, %s18
    %p22 = scmp.eq.s32.totalorder %s8, 0
    %p23 = por %p21, %p22
    %p24 = scmp.ne.s32.totalorder %s16, %s18
    %p25 = scmp.eq.s32.totalorder %s13, 1
    %p26 = por %p24, %p25
    %p27 = scmp.ne.s32.totalorder %s18, %s19
    %p28 = scmp.eq.s32.totalorder %s13, 0
    %p29 = por %p27, %p28
    %p30 = scmp.ne.s32.totalorder %s18, %s19
    %p31 = scmp.eq.s32.totalorder %s14, 1
    %p32 = por %p30, %p31
    %p34 = scmp.ne.s32.totalorder %s19, %s33
    %p35 = scmp.eq.s32.totalorder %s14, 0
    %p36 = por %p34, %p35
    %s37 = ssub.s32 %s8, %s15
    %p38 = scmp.eq.s32.totalorder %s37, 0
    %s40 = sadd.s32 %s39, 1
    %s41 = scalar_select %p38, %s39, %s40
    %p44 = pneg %p38
    %p45 = scmp.eq.s32.totalorder %s8, 1
    %p46 = por %p44, %p45
    %p47 = scmp.ne.s32.totalorder %s39, %s42
    %p48 = scmp.eq.s32.totalorder %s8, 0
    %p49 = por %p47, %p48
    %p50 = scmp.ne.s32.totalorder %s39, %s42
    %p51 = scmp.eq.s32.totalorder %s13, 1
    %p52 = por %p50, %p51
    %p53 = scmp.ne.s32.totalorder %s42, %s43
    %p54 = scmp.eq.s32.totalorder %s13, 0
    %p55 = por %p53, %p54
    %p56 = scmp.ne.s32.totalorder %s42, %s43
    %p57 = scmp.eq.s32.totalorder %s14, 1
    %p58 = por %p56, %p57
    %p60 = scmp.ne.s32.totalorder %s43, %s59
    %p61 = scmp.eq.s32.totalorder %s14, 0
    %p62 = por %p60, %p61
    %s63 = ssub.s32 %s8, %s15
    %p64 = scmp.eq.s32.totalorder %s63, 0
    %s66 = sadd.s32 %s65, 1
    %s67 = scalar_select %p64, %s65, %s66
    %p70 = pneg %p64
    %p71 = scmp.eq.s32.totalorder %s8, 1
    %p72 = por %p70, %p71
    %p73 = scmp.ne.s32.totalorder %s65, %s68
    %p74 = scmp.eq.s32.totalorder %s8, 0
    %p75 = por %p73, %p74
    %p76 = scmp.ne.s32.totalorder %s65, %s68
    %p77 = scmp.eq.s32.totalorder %s13, 1
    %p78 = por %p76, %p77
    %p79 = scmp.ne.s32.totalorder %s68, %s69
    %p80 = scmp.eq.s32.totalorder %s13, 0
    %p81 = por %p79, %p80
    %p82 = scmp.ne.s32.totalorder %s68, %s69
    %p83 = scmp.eq.s32.totalorder %s14, 1
    %p84 = por %p82, %p83
    %p86 = scmp.ne.s32.totalorder %s69, %s85
    %p87 = scmp.eq.s32.totalorder %s14, 0
    %p88 = por %p86, %p87
    %p89 = scmp.le.s32.totalorder 1, %s8
    %p90 = scmp.lt.s32.totalorder %s8, 3
    %p91 = pnand %p89, %p90
    %p92 = pneg %p91
    // Predicated region
    $region9: #{critic_forward.6} parent=5 // pred_check
      _
    $region10: #{critic_forward.6} parent=5 // pred_check_branch
      %94 = sbr.rel (%p91) target = $region12
    $region11: #{critic_forward.6} parent=5 // pred_region
      %s95 = ssub.s32 %s8, 1
      // Predicated region
      $region13: #{critic_forward.6} parent=11 // pred_check
        %p96 = pneg %p29
      $region14: #{critic_forward.6} parent=11 // pred_check_branch
        %98 = sbr.rel (%p96) target = $region16
      $region15: #{critic_forward.6} parent=11 // pred_region
        _
      $region16: #{critic_forward.6} parent=11 // pred_fallthru
        _
    $region12: #{critic_forward.6} parent=5 // pred_fallthru
      _
    %p99 = scmp.lt.s32.totalorder %s8, 2
    // Predicated region
    $region17: #{critic_forward.6} parent=5 // pred_check
      %p100 = pneg %p99
    $region18: #{critic_forward.6} parent=5 // pred_check_branch
      %102 = sbr.rel (%p100) target = $region20
    $region19: #{critic_forward.6} parent=5 // pred_region
      // Predicated region
      $region21: #{critic_forward.6} parent=19 // pred_check
        %p103 = pneg %p49
      $region22: #{critic_forward.6} parent=19 // pred_check_branch
        %105 = sbr.rel (%p103) target = $region24
      $region23: #{critic_forward.6} parent=19 // pred_region
        %p106 = scmp.lt.s32.totalorder %s8, 1
        %s107 = scalar_select %p106, %s8, 1
        %s108 = smul.addr %s107, 128
        %s109 = smul.addr %s108, 4
        %s110 = scalar_lea.vmem %s1, %s109
      $region24: #{critic_forward.6} parent=19 // pred_fallthru
        _
    $region20: #{critic_forward.6} parent=5 // pred_fallthru
      _
    %p111 = scmp.le.s32.totalorder 1, %s8
    %p112 = scmp.lt.s32.totalorder %s8, 3
    %p113 = pnand %p111, %p112
    %p114 = pneg %p113
    // Predicated region
    $region25: #{critic_forward.6} parent=5 // pred_check
      _
    $region26: #{critic_forward.6} parent=5 // pred_check_branch
      %116 = sbr.rel (%p113) target = $region28
    $region27: #{critic_forward.6} parent=5 // pred_region
      %s117 = ssub.s32 %s8, 1
      %p118 = pneg %p29
      %p119 = pneg %p26
      %p120 = scmp.lt.s32.totalorder %s13, 1
      %s121 = scalar_select %p120, %s13, 1
      %s122 = smul.addr %s121, 128
      %s123 = smul.addr %s122, 4
      %s124 = scalar_lea.vmem %s1, %s123
      %p125 = pneg %p55
      %p126 = pneg %p52
      %p127 = pneg %p81
      %p128 = pneg %p78
      %p129 = scmp.lt.s32.totalorder %s13, 1
      %s130 = scalar_select %p129, %s13, 1
      %s131 = smul.addr %s130, 16
      %s132 = smul.addr %s131, 4
      %s133 = scalar_lea.vmem %s2, %s132
      %p134 = scmp.lt.s32.totalorder %s13, 1
      %s135 = scalar_select %p134, %s13, 1
      %s136 = smul.addr %s135, 128
      %s137 = smul.addr %s136, 4
      %s138 = scalar_lea.vmem %s1, %s137
      %p139 = scmp.lt.s32.totalorder %s13, 1
      %s140 = scalar_select %p139, %s13, 1
      %s141 = smul.addr %s140, 16
      %s142 = smul.addr %s141, 4
      %s143 = scalar_lea.vmem %s2, %s142
      %v145 = vld [vmem:[%s0] sm:$0xf]
      %v146 = vld [vmem:[%s0 + $0x4] sm:$0xf]
      %v147 = vld [vmem:[%s138] sm:$0xff]
      %v148 = vld [vmem:[%s138 + $0x8] sm:$0xff]
      %v149 = vld [vmem:[%s138 + $0x10] sm:$0xff]
      %v150 = vld [vmem:[%s138 + $0x18] sm:$0xff]
      %v151 = vld [vmem:[%s138 + $0x20] sm:$0xff]
      %v152 = vld [vmem:[%s138 + $0x28] sm:$0xff]
      %v153 = vld [vmem:[%s138 + $0x30] sm:$0xff]
      %v154 = vld [vmem:[%s138 + $0x38] sm:$0xff]
      %v155 = vld [vmem:[%s138 + $0x40] sm:$0xff]
      %v156 = vld [vmem:[%s138 + $0x48] sm:$0xff]
      %v157 = vld [vmem:[%s138 + $0x50] sm:$0xff]
      %v158 = vld [vmem:[%s138 + $0x58] sm:$0xff]
      %v159 = vld [vmem:[%s138 + $0x60] sm:$0xff]
      %v160 = vld [vmem:[%s138 + $0x68] sm:$0xff]
      %v161 = vld [vmem:[%s138 + $0x70] sm:$0xff]
      %v162 = vld [vmem:[%s138 + $0x78] sm:$0xff]
      %v163 = vld [vmem:[%s138 + $0x80] sm:$0xff]
      %v164 = vld [vmem:[%s138 + $0x88] sm:$0xff]
      %v165 = vld [vmem:[%s138 + $0x90] sm:$0xff]
      %v166 = vld [vmem:[%s138 + $0x98] sm:$0xff]
      %v167 = vld [vmem:[%s138 + $0xa0] sm:$0xff]
      %v168 = vld [vmem:[%s138 + $0xa8] sm:$0xff]
      %v169 = vld [vmem:[%s138 + $0xb0] sm:$0xff]
      %v170 = vld [vmem:[%s138 + $0xb8] sm:$0xff]
      %v171 = vld [vmem:[%s138 + $0xc0] sm:$0xff]
      %v172 = vld [vmem:[%s138 + $0xc8] sm:$0xff]
      %v173 = vld [vmem:[%s138 + $0xd0] sm:$0xff]
      %v174 = vld [vmem:[%s138 + $0xd8] sm:$0xff]
      %v175 = vld [vmem:[%s138 + $0xe0] sm:$0xff]
      %v176 = vld [vmem:[%s138 + $0xe8] sm:$0xff]
      %v177 = vld [vmem:[%s138 + $0xf0] sm:$0xff]
      %v178 = vld [vmem:[%s138 + $0xf8] sm:$0xff]
      %v179 = vld [vmem:[%s138 + $0x100] sm:$0xff]
      %v180 = vld [vmem:[%s138 + $0x108] sm:$0xff]
      %v181 = vld [vmem:[%s138 + $0x110] sm:$0xff]
      %v182 = vld [vmem:[%s138 + $0x118] sm:$0xff]
      %v183 = vld [vmem:[%s138 + $0x120] sm:$0xff]
      %v184 = vld [vmem:[%s138 + $0x128] sm:$0xff]
      %v185 = vld [vmem:[%s138 + $0x130] sm:$0xff]
      %v186 = vld [vmem:[%s138 + $0x138] sm:$0xff]
      %v187 = vld [vmem:[%s138 + $0x140] sm:$0xff]
      %v188 = vld [vmem:[%s138 + $0x148] sm:$0xff]
      %v189 = vld [vmem:[%s138 + $0x150] sm:$0xff]
      %v190 = vld [vmem:[%s138 + $0x158] sm:$0xff]
      %v191 = vld [vmem:[%s138 + $0x160] sm:$0xff]
      %v192 = vld [vmem:[%s138 + $0x168] sm:$0xff]
      %v193 = vld [vmem:[%s138 + $0x170] sm:$0xff]
      %v194 = vld [vmem:[%s138 + $0x178] sm:$0xff]
      %v195 = vld [vmem:[%s138 + $0x180] sm:$0xff]
      %v196 = vld [vmem:[%s138 + $0x188] sm:$0xff]
      %v197 = vld [vmem:[%s138 + $0x190] sm:$0xff]
      %v198 = vld [vmem:[%s138 + $0x198] sm:$0xff]
      %v199 = vld [vmem:[%s138 + $0x1a0] sm:$0xff]
      %v200 = vld [vmem:[%s138 + $0x1a8] sm:$0xff]
      %v201 = vld [vmem:[%s138 + $0x1b0] sm:$0xff]
      %v202 = vld [vmem:[%s138 + $0x1b8] sm:$0xff]
      %v203 = vld [vmem:[%s138 + $0x1c0] sm:$0xff]
      %v204 = vld [vmem:[%s138 + $0x1c8] sm:$0xff]
      %v205 = vld [vmem:[%s138 + $0x1d0] sm:$0xff]
      %v206 = vld [vmem:[%s138 + $0x1d8] sm:$0xff]
      %v207 = vld [vmem:[%s138 + $0x1e0] sm:$0xff]
      %v208 = vld [vmem:[%s138 + $0x1e8] sm:$0xff]
      %v209 = vld [vmem:[%s138 + $0x1f0] sm:$0xff]
      %v210 = vld [vmem:[%s138 + $0x1f8] sm:$0xff]
      %v213 = vunpack.c.l.b16 %v145
      %v214 = vunpack.c.l.b16 %v146
      %v215 = vpack.c.b16 %v214, %v213
      %v281 = vunpack.c.l.b16 %v147
      %v282 = vunpack.c.h.b16 %v147
      %v283 = vunpack.c.l.b16 %v148
      %v284 = vunpack.c.h.b16 %v148
      %v285 = vunpack.c.l.b16 %v149
      %v286 = vunpack.c.h.b16 %v149
      %v287 = vunpack.c.l.b16 %v150
      %v288 = vunpack.c.h.b16 %v150
      %v289 = vunpack.c.l.b16 %v151
      %v290 = vunpack.c.h.b16 %v151
      %v291 = vunpack.c.l.b16 %v152
      %v292 = vunpack.c.h.b16 %v152
      %v293 = vunpack.c.l.b16 %v153
      %v294 = vunpack.c.h.b16 %v153
      %v295 = vunpack.c.l.b16 %v154
      %v296 = vunpack.c.h.b16 %v154
      %v297 = vunpack.c.l.b16 %v155
      %v298 = vunpack.c.h.b16 %v155
      %v299 = vunpack.c.l.b16 %v156
      %v300 = vunpack.c.h.b16 %v156
      %v301 = vunpack.c.l.b16 %v157
      %v302 = vunpack.c.h.b16 %v157
      %v303 = vunpack.c.l.b16 %v158
      %v304 = vunpack.c.h.b16 %v158
      %v305 = vunpack.c.l.b16 %v159
      %v306 = vunpack.c.h.b16 %v159
      %v307 = vunpack.c.l.b16 %v160
      %v308 = vunpack.c.h.b16 %v160
      %v309 = vunpack.c.l.b16 %v161
      %v310 = vunpack.c.h.b16 %v161
      %v311 = vunpack.c.l.b16 %v162
      %v312 = vunpack.c.h.b16 %v162
      %v313 = vunpack.c.l.b16 %v163
      %v314 = vunpack.c.h.b16 %v163
      %v315 = vunpack.c.l.b16 %v164
      %v316 = vunpack.c.h.b16 %v164
      %v317 = vunpack.c.l.b16 %v165
      %v318 = vunpack.c.h.b16 %v165
      %v319 = vunpack.c.l.b16 %v166
      %v320 = vunpack.c.h.b16 %v166
      %v321 = vunpack.c.l.b16 %v167
      %v322 = vunpack.c.h.b16 %v167
      %v323 = vunpack.c.l.b16 %v168
      %v324 = vunpack.c.h.b16 %v168
      %v325 = vunpack.c.l.b16 %v169
      %v326 = vunpack.c.h.b16 %v169
      %v327 = vunpack.c.l.b16 %v170
      %v328 = vunpack.c.h.b16 %v170
      %v329 = vunpack.c.l.b16 %v171
      %v330 = vunpack.c.h.b16 %v171
      %v331 = vunpack.c.l.b16 %v172
      %v332 = vunpack.c.h.b16 %v172
      %v333 = vunpack.c.l.b16 %v173
      %v334 = vunpack.c.h.b16 %v173
      %v335 = vunpack.c.l.b16 %v174
      %v336 = vunpack.c.h.b16 %v174
      %v337 = vunpack.c.l.b16 %v175
      %v338 = vunpack.c.h.b16 %v175
      %v339 = vunpack.c.l.b16 %v176
      %v340 = vunpack.c.h.b16 %v176
      %v341 = vunpack.c.l.b16 %v177
      %v342 = vunpack.c.h.b16 %v177
      %v343 = vunpack.c.l.b16 %v178
      %v344 = vunpack.c.h.b16 %v178
      %v345 = vunpack.c.l.b16 %v179
      %v346 = vunpack.c.h.b16 %v179
      %v347 = vunpack.c.l.b16 %v180
      %v348 = vunpack.c.h.b16 %v180
      %v349 = vunpack.c.l.b16 %v181
      %v350 = vunpack.c.h.b16 %v181
      %v351 = vunpack.c.l.b16 %v182
      %v352 = vunpack.c.h.b16 %v182
      %v353 = vunpack.c.l.b16 %v183
      %v354 = vunpack.c.h.b16 %v183
      %v355 = vunpack.c.l.b16 %v184
      %v356 = vunpack.c.h.b16 %v184
      %v357 = vunpack.c.l.b16 %v185
      %v358 = vunpack.c.h.b16 %v185
      %v359 = vunpack.c.l.b16 %v186
      %v360 = vunpack.c.h.b16 %v186
      %v361 = vunpack.c.l.b16 %v187
      %v362 = vunpack.c.h.b16 %v187
      %v363 = vunpack.c.l.b16 %v188
      %v364 = vunpack.c.h.b16 %v188
      %v365 = vunpack.c.l.b16 %v189
      %v366 = vunpack.c.h.b16 %v189
      %v367 = vunpack.c.l.b16 %v190
      %v368 = vunpack.c.h.b16 %v190
      %v369 = vunpack.c.l.b16 %v191
      %v370 = vunpack.c.h.b16 %v191
      %v371 = vunpack.c.l.b16 %v192
      %v372 = vunpack.c.h.b16 %v192
      %v373 = vunpack.c.l.b16 %v193
      %v374 = vunpack.c.h.b16 %v193
      %v375 = vunpack.c.l.b16 %v194
      %v376 = vunpack.c.h.b16 %v194
      %v377 = vunpack.c.l.b16 %v195
      %v378 = vunpack.c.h.b16 %v195
      %v379 = vunpack.c.l.b16 %v196
      %v380 = vunpack.c.h.b16 %v196
      %v381 = vunpack.c.l.b16 %v197
      %v382 = vunpack.c.h.b16 %v197
      %v383 = vunpack.c.l.b16 %v198
      %v384 = vunpack.c.h.b16 %v198
      %v385 = vunpack.c.l.b16 %v199
      %v386 = vunpack.c.h.b16 %v199
      %v387 = vunpack.c.l.b16 %v200
      %v388 = vunpack.c.h.b16 %v200
      %v389 = vunpack.c.l.b16 %v201
      %v390 = vunpack.c.h.b16 %v201
      %v391 = vunpack.c.l.b16 %v202
      %v392 = vunpack.c.h.b16 %v202
      %v393 = vunpack.c.l.b16 %v203
      %v394 = vunpack.c.h.b16 %v203
      %v395 = vunpack.c.l.b16 %v204
      %v396 = vunpack.c.h.b16 %v204
      %v397 = vunpack.c.l.b16 %v205
      %v398 = vunpack.c.h.b16 %v205
      %v399 = vunpack.c.l.b16 %v206
      %v400 = vunpack.c.h.b16 %v206
      %v401 = vunpack.c.l.b16 %v207
      %v402 = vunpack.c.h.b16 %v207
      %v403 = vunpack.c.l.b16 %v208
      %v404 = vunpack.c.h.b16 %v208
      %v405 = vunpack.c.l.b16 %v209
      %v406 = vunpack.c.h.b16 %v209
      %v407 = vunpack.c.l.b16 %v210
      %v408 = vunpack.c.h.b16 %v210
      %v409 = vpack.c.b16 %v289, %v281
      %v410 = vpack.c.b16 %v290, %v282
      %v411 = vpack.c.b16 %v291, %v283
      %v412 = vpack.c.b16 %v292, %v284
      %v413 = vpack.c.b16 %v293, %v285
      %v414 = vpack.c.b16 %v294, %v286
      %v415 = vpack.c.b16 %v295, %v287
      %v416 = vpack.c.b16 %v296, %v288
      %v417 = vpack.c.b16 %v305, %v297
      %v418 = vpack.c.b16 %v306, %v298
      %v419 = vpack.c.b16 %v307, %v299
      %v420 = vpack.c.b16 %v308, %v300
      %v421 = vpack.c.b16 %v309, %v301
      %v422 = vpack.c.b16 %v310, %v302
      %v423 = vpack.c.b16 %v311, %v303
      %v424 = vpack.c.b16 %v312, %v304
      %v425 = vpack.c.b16 %v321, %v313
      %v426 = vpack.c.b16 %v322, %v314
      %v427 = vpack.c.b16 %v323, %v315
      %v428 = vpack.c.b16 %v324, %v316
      %v429 = vpack.c.b16 %v325, %v317
      %v430 = vpack.c.b16 %v326, %v318
      %v431 = vpack.c.b16 %v327, %v319
      %v432 = vpack.c.b16 %v328, %v320
      %v433 = vpack.c.b16 %v337, %v329
      %v434 = vpack.c.b16 %v338, %v330
      %v435 = vpack.c.b16 %v339, %v331
      %v436 = vpack.c.b16 %v340, %v332
      %v437 = vpack.c.b16 %v341, %v333
      %v438 = vpack.c.b16 %v342, %v334
      %v439 = vpack.c.b16 %v343, %v335
      %v440 = vpack.c.b16 %v344, %v336
      %v441 = vpack.c.b16 %v353, %v345
      %v442 = vpack.c.b16 %v354, %v346
      %v443 = vpack.c.b16 %v355, %v347
      %v444 = vpack.c.b16 %v356, %v348
      %v445 = vpack.c.b16 %v357, %v349
      %v446 = vpack.c.b16 %v358, %v350
      %v447 = vpack.c.b16 %v359, %v351
      %v448 = vpack.c.b16 %v360, %v352
      %v449 = vpack.c.b16 %v369, %v361
      %v450 = vpack.c.b16 %v370, %v362
      %v451 = vpack.c.b16 %v371, %v363
      %v452 = vpack.c.b16 %v372, %v364
      %v453 = vpack.c.b16 %v373, %v365
      %v454 = vpack.c.b16 %v374, %v366
      %v455 = vpack.c.b16 %v375, %v367
      %v456 = vpack.c.b16 %v376, %v368
      %v457 = vpack.c.b16 %v385, %v377
      %v458 = vpack.c.b16 %v386, %v378
      %v459 = vpack.c.b16 %v387, %v379
      %v460 = vpack.c.b16 %v388, %v380
      %v461 = vpack.c.b16 %v389, %v381
      %v462 = vpack.c.b16 %v390, %v382
      %v463 = vpack.c.b16 %v391, %v383
      %v464 = vpack.c.b16 %v392, %v384
      %v465 = vpack.c.b16 %v401, %v393
      %v466 = vpack.c.b16 %v402, %v394
      %v467 = vpack.c.b16 %v403, %v395
      %v468 = vpack.c.b16 %v404, %v396
      %v469 = vpack.c.b16 %v405, %v397
      %v470 = vpack.c.b16 %v406, %v398
      %v471 = vpack.c.b16 %v407, %v399
      %v472 = vpack.c.b16 %v408, %v400
      %537 = vmatprep.subr.bf16.mxu0 %v410
      %538 = vmatpush1.bf16.msra.mxu0 %v409
      %539 = vmatprep.subr.bf16.mxu0 %v418
      %540 = vmatpush1.bf16.msra.mxu0 %v417
      %541 = vmatprep.subr.bf16.mxu0 %v426
      %542 = vmatpush1.bf16.msra.mxu0 %v425
      %543 = vmatprep.subr.bf16.mxu0 %v434
      %544 = vmatpush1.bf16.msra.mxu0 %v433
      %545 = vmatprep.subr.bf16.mxu0 %v442
      %546 = vmatpush1.bf16.msra.mxu0 %v441
      %547 = vmatprep.subr.bf16.mxu0 %v450
      %548 = vmatpush1.bf16.msra.mxu0 %v449
      %549 = vmatprep.subr.bf16.mxu0 %v458
      %550 = vmatpush1.bf16.msra.mxu0 %v457
      %551 = vmatprep.subr.bf16.mxu0 %v466
      %552 = vmatpush1.bf16.msra.mxu0 %v465
      %553 = vmatprep.subr.bf16.mxu0 0
      %554 = vmatpush1.bf16.msra.mxu0 0
      %555 = vmatprep.subr.bf16.mxu0 0
      %556 = vmatpush1.bf16.msra.mxu0 0
      %557 = vmatprep.subr.bf16.mxu0 0
      %558 = vmatpush1.bf16.msra.mxu0 0
      %559 = vmatprep.subr.bf16.mxu0 0
      %560 = vmatpush1.bf16.msra.mxu0 0
      %561 = vmatprep.subr.bf16.mxu0 0
      %562 = vmatpush1.bf16.msra.mxu0 0
      %563 = vmatprep.subr.bf16.mxu0 0
      %564 = vmatpush1.bf16.msra.mxu0 0
      %565 = vmatprep.subr.bf16.mxu0 0
      %566 = vmatpush1.bf16.msra.mxu0 0
      %567 = vmatprep.subr.bf16.mxu0 0
      %568 = vmatpush1.bf16.msra.mxu0 0
      %569 = vmatprep.mubr.bf16.mxu0 0
      %570 = vmatmul.mubr.bf16.gmra.mrb[0].mxu0 %v215
      %v571 = vpop.f32.mrb[0].mxu0
      %v572 = vadd.f32 0.0, %v571
      %v573 = vpop.f32.mrb[0].mxu0
      %v574 = vadd.f32 0.0, %v573
      %v575 = vpop.f32.mrb[0].mxu0
      %v576 = vadd.f32 0.0, %v575
      %v577 = vpop.f32.mrb[0].mxu0
      %v578 = vadd.f32 0.0, %v577
      %579 = vdwg.mxu0
      %580 = vmatprep.subr.bf16.mxu0 %v412
      %581 = vmatpush1.bf16.msra.mxu0 %v411
      %582 = vmatprep.subr.bf16.mxu0 %v420
      %583 = vmatpush1.bf16.msra.mxu0 %v419
      %584 = vmatprep.subr.bf16.mxu0 %v428
      %585 = vmatpush1.bf16.msra.mxu0 %v427
      %586 = vmatprep.subr.bf16.mxu0 %v436
      %587 = vmatpush1.bf16.msra.mxu0 %v435
      %588 = vmatprep.subr.bf16.mxu0 %v444
      %589 = vmatpush1.bf16.msra.mxu0 %v443
      %590 = vmatprep.subr.bf16.mxu0 %v452
      %591 = vmatpush1.bf16.msra.mxu0 %v451
      %592 = vmatprep.subr.bf16.mxu0 %v460
      %593 = vmatpush1.bf16.msra.mxu0 %v459
      %594 = vmatprep.subr.bf16.mxu0 %v468
      %595 = vmatpush1.bf16.msra.mxu0 %v467
      %596 = vmatprep.subr.bf16.mxu0 0
      %597 = vmatpush1.bf16.msra.mxu0 0
      %598 = vmatprep.subr.bf16.mxu0 0
      %599 = vmatpush1.bf16.msra.mxu0 0
      %600 = vmatprep.subr.bf16.mxu0 0
      %601 = vmatpush1.bf16.msra.mxu0 0
      %602 = vmatprep.subr.bf16.mxu0 0
      %603 = vmatpush1.bf16.msra.mxu0 0
      %604 = vmatprep.subr.bf16.mxu0 0
      %605 = vmatpush1.bf16.msra.mxu0 0
      %606 = vmatprep.subr.bf16.mxu0 0
      %607 = vmatpush1.bf16.msra.mxu0 0
      %608 = vmatprep.subr.bf16.mxu0 0
      %609 = vmatpush1.bf16.msra.mxu0 0
      %610 = vmatprep.subr.bf16.mxu0 0
      %611 = vmatpush1.bf16.msra.mxu0 0
      %612 = vmatprep.mubr.bf16.mxu0 0
      %613 = vmatmul.mubr.bf16.gmra.mrb[0].mxu0 %v215
      %v614 = vpop.f32.mrb[0].mxu0
      %v615 = vadd.f32 0.0, %v614
      %v616 = vpop.f32.mrb[0].mxu0
      %v617 = vadd.f32 0.0, %v616
      %v618 = vpop.f32.mrb[0].mxu0
      %v619 = vadd.f32 0.0, %v618
      %v620 = vpop.f32.mrb[0].mxu0
      %v621 = vadd.f32 0.0, %v620
      %622 = vdwg.mxu0
      %623 = vmatprep.subr.bf16.mxu0 %v414
      %624 = vmatpush1.bf16.msra.mxu0 %v413
      %625 = vmatprep.subr.bf16.mxu0 %v422
      %626 = vmatpush1.bf16.msra.mxu0 %v421
      %627 = vmatprep.subr.bf16.mxu0 %v430
      %628 = vmatpush1.bf16.msra.mxu0 %v429
      %629 = vmatprep.subr.bf16.mxu0 %v438
      %630 = vmatpush1.bf16.msra.mxu0 %v437
      %631 = vmatprep.subr.bf16.mxu0 %v446
      %632 = vmatpush1.bf16.msra.mxu0 %v445
      %633 = vmatprep.subr.bf16.mxu0 %v454
      %634 = vmatpush1.bf16.msra.mxu0 %v453
      %635 = vmatprep.subr.bf16.mxu0 %v462
      %636 = vmatpush1.bf16.msra.mxu0 %v461
      %637 = vmatprep.subr.bf16.mxu0 %v470
      %638 = vmatpush1.bf16.msra.mxu0 %v469
      %639 = vmatprep.subr.bf16.mxu0 0
      %640 = vmatpush1.bf16.msra.mxu0 0
      %641 = vmatprep.subr.bf16.mxu0 0
      %642 = vmatpush1.bf16.msra.mxu0 0
      %643 = vmatprep.subr.bf16.mxu0 0
      %644 = vmatpush1.bf16.msra.mxu0 0
      %645 = vmatprep.subr.bf16.mxu0 0
      %646 = vmatpush1.bf16.msra.mxu0 0
      %647 = vmatprep.subr.bf16.mxu0 0
      %648 = vmatpush1.bf16.msra.mxu0 0
      %649 = vmatprep.subr.bf16.mxu0 0
      %650 = vmatpush1.bf16.msra.mxu0 0
      %651 = vmatprep.subr.bf16.mxu0 0
      %652 = vmatpush1.bf16.msra.mxu0 0
      %653 = vmatprep.subr.bf16.mxu0 0
      %654 = vmatpush1.bf16.msra.mxu0 0
      %655 = vmatprep.mubr.bf16.mxu0 0
      %656 = vmatmul.mubr.bf16.gmra.mrb[0].mxu0 %v215
      %v657 = vpop.f32.mrb[0].mxu0
      %v658 = vadd.f32 0.0, %v657
      %v659 = vpop.f32.mrb[0].mxu0
      %v660 = vadd.f32 0.0, %v659
      %v661 = vpop.f32.mrb[0].mxu0
      %v662 = vadd.f32 0.0, %v661
      %v663 = vpop.f32.mrb[0].mxu0
      %v664 = vadd.f32 0.0, %v663
      %665 = vdwg.mxu0
      %666 = vmatprep.subr.bf16.mxu0 %v416
      %667 = vmatpush1.bf16.msra.mxu0 %v415
      %668 = vmatprep.subr.bf16.mxu0 %v424
      %669 = vmatpush1.bf16.msra.mxu0 %v423
      %670 = vmatprep.subr.bf16.mxu0 %v432
      %671 = vmatpush1.bf16.msra.mxu0 %v431
      %672 = vmatprep.subr.bf16.mxu0 %v440
      %673 = vmatpush1.bf16.msra.mxu0 %v439
      %674 = vmatprep.subr.bf16.mxu0 %v448
      %675 = vmatpush1.bf16.msra.mxu0 %v447
      %676 = vmatprep.subr.bf16.mxu0 %v456
      %677 = vmatpush1.bf16.msra.mxu0 %v455
      %678 = vmatprep.subr.bf16.mxu0 %v464
      %679 = vmatpush1.bf16.msra.mxu0 %v463
      %680 = vmatprep.subr.bf16.mxu0 %v472
      %681 = vmatpush1.bf16.msra.mxu0 %v471
      %682 = vmatprep.subr.bf16.mxu0 0
      %683 = vmatpush1.bf16.msra.mxu0 0
      %684 = vmatprep.subr.bf16.mxu0 0
      %685 = vmatpush1.bf16.msra.mxu0 0
      %686 = vmatprep.subr.bf16.mxu0 0
      %687 = vmatpush1.bf16.msra.mxu0 0
      %688 = vmatprep.subr.bf16.mxu0 0
      %689 = vmatpush1.bf16.msra.mxu0 0
      %690 = vmatprep.subr.bf16.mxu0 0
      %691 = vmatpush1.bf16.msra.mxu0 0
      %692 = vmatprep.subr.bf16.mxu0 0
      %693 = vmatpush1.bf16.msra.mxu0 0
      %694 = vmatprep.subr.bf16.mxu0 0
      %695 = vmatpush1.bf16.msra.mxu0 0
      %696 = vmatprep.subr.bf16.mxu0 0
      %697 = vmatpush1.bf16.msra.mxu0 0
      %698 = vmatprep.mubr.bf16.mxu0 0
      %699 = vmatmul.mubr.bf16.gmra.mrb[0].mxu0 %v215
      %v700 = vpop.f32.mrb[0].mxu0
      %v701 = vadd.f32 0.0, %v700
      %v702 = vpop.f32.mrb[0].mxu0
      %v703 = vadd.f32 0.0, %v702
      %v704 = vpop.f32.mrb[0].mxu0
      %v705 = vadd.f32 0.0, %v704
      %v706 = vpop.f32.mrb[0].mxu0
      %v707 = vadd.f32 0.0, %v706
      %708 = vdwg.mxu0
      %v709 = vadd.f32 %v572, %v574
      %v710 = vadd.f32 %v709, %v615
      %v711 = vadd.f32 %v710, %v617
      %v712 = vadd.f32 %v711, %v658
      %v713 = vadd.f32 %v712, %v660
      %v714 = vadd.f32 %v713, %v701
      %v715 = vadd.f32 %v714, %v703
      %716 = vadd.xlane.f32.xlu0 %v715
      %v717 = vpop.xlane.xlu0 %716
      %v718 = vadd.f32 %v576, %v578
      %v719 = vadd.f32 %v718, %v619
      %v720 = vadd.f32 %v719, %v621
      %v721 = vadd.f32 %v720, %v662
      %v722 = vadd.f32 %v721, %v664
      %v723 = vadd.f32 %v722, %v705
      %v724 = vadd.f32 %v723, %v707
      %725 = vadd.xlane.f32.xlu0 %v724
      %v726 = vpop.xlane.xlu0 %725
      %v727 = vmul.f32 %v717, 0.0009765625
      %v728 = vmul.f32 %v726, 0.0009765625
      %v729 = vmul.f32 %v572, %v572
      %v730 = vmul.f32 %v574, %v574
      %v731 = vmul.f32 %v615, %v615
      %v732 = vmul.f32 %v617, %v617
      %v733 = vmul.f32 %v658, %v658
      %v734 = vmul.f32 %v660, %v660
      %v735 = vmul.f32 %v701, %v701
      %v736 = vmul.f32 %v703, %v703
      %v737 = vmul.f32 %v576, %v576
      %v738 = vmul.f32 %v578, %v578
      %v739 = vmul.f32 %v619, %v619
      %v740 = vmul.f32 %v621, %v621
      %v741 = vmul.f32 %v662, %v662
      %v742 = vmul.f32 %v664, %v664
      %v743 = vmul.f32 %v705, %v705
      %v744 = vmul.f32 %v707, %v707
      %v745 = vadd.f32 %v729, %v730
      %v746 = vadd.f32 %v745, %v731
      %v747 = vadd.f32 %v746, %v732
      %v748 = vadd.f32 %v747, %v733
      %v749 = vadd.f32 %v748, %v734
      %v750 = vadd.f32 %v749, %v735
      %v751 = vadd.f32 %v750, %v736
      %752 = vadd.xlane.f32.xlu0 %v751
      %v753 = vpop.xlane.xlu0 %752
      %v754 = vadd.f32 %v737, %v738
      %v755 = vadd.f32 %v754, %v739
      %v756 = vadd.f32 %v755, %v740
      %v757 = vadd.f32 %v756, %v741
      %v758 = vadd.f32 %v757, %v742
      %v759 = vadd.f32 %v758, %v743
      %v760 = vadd.f32 %v759, %v744
      %761 = vadd.xlane.f32.xlu0 %v760
      %v762 = vpop.xlane.xlu0 %761
      %v763 = vmul.f32 %v753, 0.0009765625
      %v764 = vmul.f32 %v762, 0.0009765625
      %v765 = vmul.f32 %v727, %v727
      %v766 = vmul.f32 %v728, %v728
      %v767 = vsub.f32 %v763, %v765
      %v768 = vsub.f32 %v764, %v766
      %v769 = vmax.f32 %v767, 0.0
      %v770 = vmax.f32 %v768, 0.0
      %v771 = vsub.f32 %v572, %v727
      %v772 = vsub.f32 %v574, %v727
      %v773 = vsub.f32 %v615, %v727
      %v774 = vsub.f32 %v617, %v727
      %v775 = vsub.f32 %v658, %v727
      %v776 = vsub.f32 %v660, %v727
      %v777 = vsub.f32 %v701, %v727
      %v778 = vsub.f32 %v703, %v727
      %v779 = vsub.f32 %v576, %v728
      %v780 = vsub.f32 %v578, %v728
      %v781 = vsub.f32 %v619, %v728
      %v782 = vsub.f32 %v621, %v728
      %v783 = vsub.f32 %v662, %v728
      %v784 = vsub.f32 %v664, %v728
      %v785 = vsub.f32 %v705, %v728
      %v786 = vsub.f32 %v707, %v728
      %v787 = vadd.f32 %v769, 1e-05
      %v788 = vadd.f32 %v770, 1e-05
      %v789 = vrsqrt.pop %v787
      %v790 = vrsqrt.pop %v788
      %v791 = vmul.f32 %v771, %v789
      %v792 = vmul.f32 %v772, %v789
      %v793 = vmul.f32 %v773, %v789
      %v794 = vmul.f32 %v774, %v789
      %v795 = vmul.f32 %v775, %v789
      %v796 = vmul.f32 %v776, %v789
      %v797 = vmul.f32 %v777, %v789
      %v798 = vmul.f32 %v778, %v789
      %v799 = vmul.f32 %v779, %v790
      %v800 = vmul.f32 %v780, %v790
      %v801 = vmul.f32 %v781, %v790
      %v802 = vmul.f32 %v782, %v790
      %v803 = vmul.f32 %v783, %v790
      %v804 = vmul.f32 %v784, %v790
      %v805 = vmul.f32 %v785, %v790
      %v806 = vmul.f32 %v786, %v790
      %vm807 = vcmp.ge.f32.partialorder %v791, 0.0
      %vm808 = vcmp.ge.f32.partialorder %v792, 0.0
      %vm809 = vcmp.ge.f32.partialorder %v793, 0.0
      %vm810 = vcmp.ge.f32.partialorder %v794, 0.0
      %vm811 = vcmp.ge.f32.partialorder %v795, 0.0
      %vm812 = vcmp.ge.f32.partialorder %v796, 0.0
      %vm813 = vcmp.ge.f32.partialorder %v797, 0.0
      %vm814 = vcmp.ge.f32.partialorder %v798, 0.0
      %vm815 = vcmp.ge.f32.partialorder %v799, 0.0
      %vm816 = vcmp.ge.f32.partialorder %v800, 0.0
      %vm817 = vcmp.ge.f32.partialorder %v801, 0.0
      %vm818 = vcmp.ge.f32.partialorder %v802, 0.0
      %vm819 = vcmp.ge.f32.partialorder %v803, 0.0
      %vm820 = vcmp.ge.f32.partialorder %v804, 0.0
      %vm821 = vcmp.ge.f32.partialorder %v805, 0.0
      %vm822 = vcmp.ge.f32.partialorder %v806, 0.0
      %v823 = vmul.f32 %v791, 0.2
      %v824 = vmul.f32 %v792, 0.2
      %v825 = vmul.f32 %v793, 0.2
      %v826 = vmul.f32 %v794, 0.2
      %v827 = vmul.f32 %v795, 0.2
      %v828 = vmul.f32 %v796, 0.2
      %v829 = vmul.f32 %v797, 0.2
      %v830 = vmul.f32 %v798, 0.2
      %v831 = vmul.f32 %v799, 0.2
      %v832 = vmul.f32 %v800, 0.2
      %v833 = vmul.f32 %v801, 0.2
      %v834 = vmul.f32 %v802, 0.2
      %v835 = vmul.f32 %v803, 0.2
      %v836 = vmul.f32 %v804, 0.2
      %v837 = vmul.f32 %v805, 0.2
      %v838 = vmul.f32 %v806, 0.2
      %v839 = vsel %vm807, %v791, %v823
      %v840 = vsel %vm808, %v792, %v824
      %v841 = vsel %vm809, %v793, %v825
      %v842 = vsel %vm810, %v794, %v826
      %v843 = vsel %vm811, %v795, %v827
      %v844 = vsel %vm812, %v796, %v828
      %v845 = vsel %vm813, %v797, %v829
      %v846 = vsel %vm814, %v798, %v830
      %v847 = vsel %vm815, %v799, %v831
      %v848 = vsel %vm816, %v800, %v832
      %v849 = vsel %vm817, %v801, %v833
      %v850 = vsel %vm818, %v802, %v834
      %v851 = vsel %vm819, %v803, %v835
      %v852 = vsel %vm820, %v804, %v836
      %v853 = vsel %vm821, %v805, %v837
      %v854 = vsel %vm822, %v806, %v838
      %v855 = vpack.c.bf16 %v847, %v839
      %v856 = vpack.c.bf16 %v848, %v840
      %v857 = vpack.c.bf16 %v849, %v841
      %v858 = vpack.c.bf16 %v850, %v842
      %v859 = vpack.c.bf16 %v851, %v843
      %v860 = vpack.c.bf16 %v852, %v844
      %v861 = vpack.c.bf16 %v853, %v845
      %v862 = vpack.c.bf16 %v854, %v846
      %v871 = vunpack.c.l.b16 %v855
      %v872 = vunpack.c.l.b16 %v856
      %v873 = vunpack.c.l.b16 %v857
      %v874 = vunpack.c.l.b16 %v858
      %v875 = vunpack.c.l.b16 %v859
      %v876 = vunpack.c.l.b16 %v860
      %v877 = vunpack.c.l.b16 %v861
      %v878 = vunpack.c.l.b16 %v862
      %v879 = vunpack.c.h.b16 %v855
      %v880 = vunpack.c.h.b16 %v856
      %v881 = vunpack.c.h.b16 %v857
      %v882 = vunpack.c.h.b16 %v858
      %v883 = vunpack.c.h.b16 %v859
      %v884 = vunpack.c.h.b16 %v860
      %v885 = vunpack.c.h.b16 %v861
      %v886 = vunpack.c.h.b16 %v862
      %v887 = vpack.c.b16 %v872, %v871
      %v888 = vpack.c.b16 %v874, %v873
      %v889 = vpack.c.b16 %v876, %v875
      %v890 = vpack.c.b16 %v878, %v877
      %v891 = vpack.c.b16 %v880, %v879
      %v892 = vpack.c.b16 %v882, %v881
      %v893 = vpack.c.b16 %v884, %v883
      %v894 = vpack.c.b16 %v886, %v885
      %903 = vst [vmem:[%s143] sm:$0xff] %v887
      %904 = vst [vmem:[%s143 + $0x8] sm:$0xff] %v888
      %905 = vst [vmem:[%s143 + $0x10] sm:$0xff] %v889
      %906 = vst [vmem:[%s143 + $0x18] sm:$0xff] %v890
      %907 = vst [vmem:[%s143 + $0x20] sm:$0xff] %v891
      %908 = vst [vmem:[%s143 + $0x28] sm:$0xff] %v892
      %909 = vst [vmem:[%s143 + $0x30] sm:$0xff] %v893
      %910 = vst [vmem:[%s143 + $0x38] sm:$0xff] %v894
      %p911 = scmp.lt.s32.totalorder %s13, 1
      %s912 = scalar_select %p911, %s13, 1
      %s913 = smul.addr %s912, 16
      %s914 = smul.addr %s913, 4
      %s915 = scalar_lea.vmem %s2, %s914
      // Predicated region
      $region29: #{critic_forward.6} parent=27 // pred_check
        %p916 = pneg %p78
      $region30: #{critic_forward.6} parent=27 // pred_check_branch
        %918 = sbr.rel (%p916) target = $region32
      $region31: #{critic_forward.6} parent=27 // pred_region
        _
      $region32: #{critic_forward.6} parent=27 // pred_fallthru
        _
    $region28: #{critic_forward.6} parent=5 // pred_fallthru
      _
    %p919 = scmp.le.s32.totalorder 2, %s8
    // Predicated region
    $region33: #{critic_forward.6} parent=5 // pred_check
      %p920 = pneg %p919
    $region34: #{critic_forward.6} parent=5 // pred_check_branch
      %922 = sbr.rel (%p920) target = $region36
    $region35: #{critic_forward.6} parent=5 // pred_region
      %s923 = ssub.s32 %s8, 2
      // Predicated region
      $region37: #{critic_forward.6} parent=35 // pred_check
        %p924 = pneg %p84
      $region38: #{critic_forward.6} parent=35 // pred_check_branch
        %926 = sbr.rel (%p924) target = $region40
      $region39: #{critic_forward.6} parent=35 // pred_region
        %p927 = scmp.lt.s32.totalorder %s14, 1
        %s928 = scalar_select %p927, %s14, 1
        %s929 = smul.addr %s928, 16
        %s930 = smul.addr %s929, 4
        %s931 = scalar_lea.vmem %s2, %s930
      $region40: #{critic_forward.6} parent=35 // pred_fallthru
        _
    $region36: #{critic_forward.6} parent=5 // pred_fallthru
      _
  $region6: #{critic_forward.6} parent=0 // loop_footer
    %s12 = sadd.s32 1, %s8
  $region7: #{critic_forward.6} parent=0 // loop_footer_branch
    %7 = sbr.rel target = $region3
  $region8: #{critic_forward.6} parent=0 // loop_exit
    _

// kernel: critic_forward.7
$region0: #{critic_forward.7}
  #allocation0 [shape = 'u32[]', space=smem, size = 0x4, offset = 0x4, fixed_abs, tag = 'smem constant byte address 0x4 - core index']
  #allocation1 [shape = 'u32[144,128]{1,0:T(1,128)}', space=vmem, size = 0x12000, scoped, tag = 'internal scratch']
  %s0 = inlined_call_operand.vmem [shape: bf16[32,256], index: 0, kind: input, shape index: {}]
  %s1 = inlined_call_operand.vmem [shape: bf16[2,256,256], index: 1, kind: input, shape index: {}]
  %s2 = inlined_call_operand.vmem [shape: bf16[2,32,256], index: 2, kind: output, shape index: {}]
  %s3 = sld [smem:[#allocation0]]
  $region41: #{critic_forward.7} parent=0
    _
  %s5 = ssub.s32 1, %s3
  %s6 = scalar_select 0, %s5, %s3
  loop: start=0, step=1, limit=4
  $region2: #{critic_forward.7} parent=0 // loop_pre_header
    _
  $region3: #{critic_forward.7} parent=0 // loop_header
    %s8 = sphi 0, %s12
    %p9 = scmp.ge.s32.totalorder %s8, 4
    %s16 = sphi 0, %s16
    %s18 = sphi 0, %s16
    %s19 = sphi 0, %s18
    %s33 = sphi 0, %s19
    %s39 = sphi 0, %s41
    %s42 = sphi 0, %s39
    %s43 = sphi 0, %s42
    %s59 = sphi 0, %s43
    %s65 = sphi 0, %s67
    %s68 = sphi 0, %s65
    %s69 = sphi 0, %s68
    %s85 = sphi 0, %s69
  $region4: #{critic_forward.7} parent=0 // loop_header_branch
    %11 = sbr.rel (%p9) target = $region8
  $region5: #{critic_forward.7} parent=0 // loop_body
    %s13 = ssub.s32 %s8, 1
    %s14 = ssub.s32 %s8, 2
    %s15 = sadd.s32 %s8, 1
    %s17 = sadd.s32 %s16, 1
    %p20 = scmp.eq.s32.totalorder %s8, 1
    %p21 = scmp.ne.s32.totalorder %s16, %s18
    %p22 = scmp.eq.s32.totalorder %s8, 0
    %p23 = por %p21, %p22
    %p24 = scmp.ne.s32.totalorder %s16, %s18
    %p25 = scmp.eq.s32.totalorder %s13, 1
    %p26 = por %p24, %p25
    %p27 = scmp.ne.s32.totalorder %s18, %s19
    %p28 = scmp.eq.s32.totalorder %s13, 0
    %p29 = por %p27, %p28
    %p30 = scmp.ne.s32.totalorder %s18, %s19
    %p31 = scmp.eq.s32.totalorder %s14, 1
    %p32 = por %p30, %p31
    %p34 = scmp.ne.s32.totalorder %s19, %s33
    %p35 = scmp.eq.s32.totalorder %s14, 0
    %p36 = por %p34, %p35
    %s37 = ssub.s32 %s8, %s15
    %p38 = scmp.eq.s32.totalorder %s37, 0
    %s40 = sadd.s32 %s39, 1
    %s41 = scalar_select %p38, %s39, %s40
    %p44 = pneg %p38
    %p45 = scmp.eq.s32.totalorder %s8, 1
    %p46 = por %p44, %p45
    %p47 = scmp.ne.s32.totalorder %s39, %s42
    %p48 = scmp.eq.s32.totalorder %s8, 0
    %p49 = por %p47, %p48
    %p50 = scmp.ne.s32.totalorder %s39, %s42
    %p51 = scmp.eq.s32.totalorder %s13, 1
    %p52 = por %p50, %p51
    %p53 = scmp.ne.s32.totalorder %s42, %s43
    %p54 = scmp.eq.s32.totalorder %s13, 0
    %p55 = por %p53, %p54
    %p56 = scmp.ne.s32.totalorder %s42, %s43
    %p57 = scmp.eq.s32.totalorder %s14, 1
    %p58 = por %p56, %p57
    %p60 = scmp.ne.s32.totalorder %s43, %s59
    %p61 = scmp.eq.s32.totalorder %s14, 0
    %p62 = por %p60, %p61
    %s63 = ssub.s32 %s8, %s15
    %p64 = scmp.eq.s32.totalorder %s63, 0
    %s66 = sadd.s32 %s65, 1
    %s67 = scalar_select %p64, %s65, %s66
    %p70 = pneg %p64
    %p71 = scmp.eq.s32.totalorder %s8, 1
    %p72 = por %p70, %p71
    %p73 = scmp.ne.s32.totalorder %s65, %s68
    %p74 = scmp.eq.s32.totalorder %s8, 0
    %p75 = por %p73, %p74
    %p76 = scmp.ne.s32.totalorder %s65, %s68
    %p77 = scmp.eq.s32.totalorder %s13, 1
    %p78 = por %p76, %p77
    %p79 = scmp.ne.s32.totalorder %s68, %s69
    %p80 = scmp.eq.s32.totalorder %s13, 0
    %p81 = por %p79, %p80
    %p82 = scmp.ne.s32.totalorder %s68, %s69
    %p83 = scmp.eq.s32.totalorder %s14, 1
    %p84 = por %p82, %p83
    %p86 = scmp.ne.s32.totalorder %s69, %s85
    %p87 = scmp.eq.s32.totalorder %s14, 0
    %p88 = por %p86, %p87
    %p89 = scmp.le.s32.totalorder 1, %s8
    %p90 = scmp.lt.s32.totalorder %s8, 3
    %p91 = pnand %p89, %p90
    %p92 = pneg %p91
    // Predicated region
    $region9: #{critic_forward.7} parent=5 // pred_check
      _
    $region10: #{critic_forward.7} parent=5 // pred_check_branch
      %94 = sbr.rel (%p91) target = $region12
    $region11: #{critic_forward.7} parent=5 // pred_region
      %s95 = ssub.s32 %s8, 1
      // Predicated region
      $region13: #{critic_forward.7} parent=11 // pred_check
        %p96 = pneg %p29
      $region14: #{critic_forward.7} parent=11 // pred_check_branch
        %98 = sbr.rel (%p96) target = $region16
      $region15: #{critic_forward.7} parent=11 // pred_region
        _
      $region16: #{critic_forward.7} parent=11 // pred_fallthru
        _
    $region12: #{critic_forward.7} parent=5 // pred_fallthru
      _
    %p99 = scmp.lt.s32.totalorder %s8, 2
    // Predicated region
    $region17: #{critic_forward.7} parent=5 // pred_check
      %p100 = pneg %p99
    $region18: #{critic_forward.7} parent=5 // pred_check_branch
      %102 = sbr.rel (%p100) target = $region20
    $region19: #{critic_forward.7} parent=5 // pred_region
      // Predicated region
      $region21: #{critic_forward.7} parent=19 // pred_check
        %p103 = pneg %p49
      $region22: #{critic_forward.7} parent=19 // pred_check_branch
        %105 = sbr.rel (%p103) target = $region24
      $region23: #{critic_forward.7} parent=19 // pred_region
        %p106 = scmp.lt.s32.totalorder %s8, 1
        %s107 = scalar_select %p106, %s8, 1
        %s108 = smul.addr %s107, 64
        %s109 = smul.addr %s108, 4
        %s110 = scalar_lea.vmem %s1, %s109
      $region24: #{critic_forward.7} parent=19 // pred_fallthru
        _
    $region20: #{critic_forward.7} parent=5 // pred_fallthru
      _
    %p111 = scmp.le.s32.totalorder 1, %s8
    %p112 = scmp.lt.s32.totalorder %s8, 3
    %p113 = pnand %p111, %p112
    %p114 = pneg %p113
    // Predicated region
    $region25: #{critic_forward.7} parent=5 // pred_check
      _
    $region26: #{critic_forward.7} parent=5 // pred_check_branch
      %116 = sbr.rel (%p113) target = $region28
    $region27: #{critic_forward.7} parent=5 // pred_region
      %s117 = ssub.s32 %s8, 1
      %p118 = pneg %p29
      %p119 = pneg %p26
      %p120 = scmp.lt.s32.totalorder %s13, 1
      %s121 = scalar_select %p120, %s13, 1
      %s122 = smul.addr %s121, 64
      %s123 = smul.addr %s122, 4
      %s124 = scalar_lea.vmem %s1, %s123
      %p125 = pneg %p55
      %p126 = pneg %p52
      %p127 = pneg %p81
      %p128 = pneg %p78
      %p129 = scmp.lt.s32.totalorder %s13, 1
      %s130 = scalar_select %p129, %s13, 1
      %s131 = smul.addr %s130, 8
      %s132 = smul.addr %s131, 4
      %s133 = scalar_lea.vmem %s2, %s132
      %p134 = scmp.lt.s32.totalorder %s13, 1
      %s135 = scalar_select %p134, %s13, 1
      %s136 = smul.addr %s135, 64
      %s137 = smul.addr %s136, 4
      %s138 = scalar_lea.vmem %s1, %s137
      %p139 = scmp.lt.s32.totalorder %s13, 1
      %s140 = scalar_select %p139, %s13, 1
      %s141 = smul.addr %s140, 8
      %s142 = smul.addr %s141, 4
      %s143 = scalar_lea.vmem %s2, %s142
      %v144 = vld [vmem:[%s0] sm:$0xff]
      %v145 = vld [vmem:[%s0 + $0x8] sm:$0xff]
      %v146 = vld [vmem:[%s0 + $0x10] sm:$0xff]
      %v147 = vld [vmem:[%s0 + $0x18] sm:$0xff]
      %v148 = vld [vmem:[%s138] sm:$0xff]
      %v149 = vld [vmem:[%s138 + $0x8] sm:$0xff]
      %v150 = vld [vmem:[%s138 + $0x10] sm:$0xff]
      %v151 = vld [vmem:[%s138 + $0x18] sm:$0xff]
      %v152 = vld [vmem:[%s138 + $0x20] sm:$0xff]
      %v153 = vld [vmem:[%s138 + $0x28] sm:$0xff]
      %v154 = vld [vmem:[%s138 + $0x30] sm:$0xff]
      %v155 = vld [vmem:[%s138 + $0x38] sm:$0xff]
      %v156 = vld [vmem:[%s138 + $0x40] sm:$0xff]
      %v157 = vld [vmem:[%s138 + $0x48] sm:$0xff]
      %v158 = vld [vmem:[%s138 + $0x50] sm:$0xff]
      %v159 = vld [vmem:[%s138 + $0x58] sm:$0xff]
      %v160 = vld [vmem:[%s138 + $0x60] sm:$0xff]
      %v161 = vld [vmem:[%s138 + $0x68] sm:$0xff]
      %v162 = vld [vmem:[%s138 + $0x70] sm:$0xff]
      %v163 = vld [vmem:[%s138 + $0x78] sm:$0xff]
      %v164 = vld [vmem:[%s138 + $0x80] sm:$0xff]
      %v165 = vld [vmem:[%s138 + $0x88] sm:$0xff]
      %v166 = vld [vmem:[%s138 + $0x90] sm:$0xff]
      %v167 = vld [vmem:[%s138 + $0x98] sm:$0xff]
      %v168 = vld [vmem:[%s138 + $0xa0] sm:$0xff]
      %v169 = vld [vmem:[%s138 + $0xa8] sm:$0xff]
      %v170 = vld [vmem:[%s138 + $0xb0] sm:$0xff]
      %v171 = vld [vmem:[%s138 + $0xb8] sm:$0xff]
      %v172 = vld [vmem:[%s138 + $0xc0] sm:$0xff]
      %v173 = vld [vmem:[%s138 + $0xc8] sm:$0xff]
      %v174 = vld [vmem:[%s138 + $0xd0] sm:$0xff]
      %v175 = vld [vmem:[%s138 + $0xd8] sm:$0xff]
      %v176 = vld [vmem:[%s138 + $0xe0] sm:$0xff]
      %v177 = vld [vmem:[%s138 + $0xe8] sm:$0xff]
      %v178 = vld [vmem:[%s138 + $0xf0] sm:$0xff]
      %v179 = vld [vmem:[%s138 + $0xf8] sm:$0xff]
      %v184 = vunpack.c.l.b16 %v144
      %v185 = vunpack.c.h.b16 %v144
      %v186 = vunpack.c.l.b16 %v145
      %v187 = vunpack.c.h.b16 %v145
      %v188 = vunpack.c.l.b16 %v146
      %v189 = vunpack.c.h.b16 %v146
      %v190 = vunpack.c.l.b16 %v147
      %v191 = vunpack.c.h.b16 %v147
      %v192 = vpack.c.b16 %v186, %v184
      %v193 = vpack.c.b16 %v187, %v185
      %v194 = vpack.c.b16 %v190, %v188
      %v195 = vpack.c.b16 %v191, %v189
      %v232 = vunpack.c.l.b16 %v148
      %v233 = vunpack.c.h.b16 %v148
      %v234 = vunpack.c.l.b16 %v149
      %v235 = vunpack.c.h.b16 %v149
      %v236 = vunpack.c.l.b16 %v150
      %v237 = vunpack.c.h.b16 %v150
      %v238 = vunpack.c.l.b16 %v151
      %v239 = vunpack.c.h.b16 %v151
      %v240 = vunpack.c.l.b16 %v152
      %v241 = vunpack.c.h.b16 %v152
      %v242 = vunpack.c.l.b16 %v153
      %v243 = vunpack.c.h.b16 %v153
      %v244 = vunpack.c.l.b16 %v154
      %v245 = vunpack.c.h.b16 %v154
      %v246 = vunpack.c.l.b16 %v155
      %v247 = vunpack.c.h.b16 %v155
      %v248 = vunpack.c.l.b16 %v156
      %v249 = vunpack.c.h.b16 %v156
      %v250 = vunpack.c.l.b16 %v157
      %v251 = vunpack.c.h.b16 %v157
      %v252 = vunpack.c.l.b16 %v158
      %v253 = vunpack.c.h.b16 %v158
      %v254 = vunpack.c.l.b16 %v159
      %v255 = vunpack.c.h.b16 %v159
      %v256 = vunpack.c.l.b16 %v160
      %v257 = vunpack.c.h.b16 %v160
      %v258 = vunpack.c.l.b16 %v161
      %v259 = vunpack.c.h.b16 %v161
      %v260 = vunpack.c.l.b16 %v162
      %v261 = vunpack.c.h.b16 %v162
      %v262 = vunpack.c.l.b16 %v163
      %v263 = vunpack.c.h.b16 %v163
      %v264 = vunpack.c.l.b16 %v164
      %v265 = vunpack.c.h.b16 %v164
      %v266 = vunpack.c.l.b16 %v165
      %v267 = vunpack.c.h.b16 %v165
      %v268 = vunpack.c.l.b16 %v166
      %v269 = vunpack.c.h.b16 %v166
      %v270 = vunpack.c.l.b16 %v167
      %v271 = vunpack.c.h.b16 %v167
      %v272 = vunpack.c.l.b16 %v168
      %v273 = vunpack.c.h.b16 %v168
      %v274 = vunpack.c.l.b16 %v169
      %v275 = vunpack.c.h.b16 %v169
      %v276 = vunpack.c.l.b16 %v170
      %v277 = vunpack.c.h.b16 %v170
      %v278 = vunpack.c.l.b16 %v171
      %v279 = vunpack.c.h.b16 %v171
      %v280 = vunpack.c.l.b16 %v172
      %v281 = vunpack.c.h.b16 %v172
      %v282 = vunpack.c.l.b16 %v173
      %v283 = vunpack.c.h.b16 %v173
      %v284 = vunpack.c.l.b16 %v174
      %v285 = vunpack.c.h.b16 %v174
      %v286 = vunpack.c.l.b16 %v175
      %v287 = vunpack.c.h.b16 %v175
      %v288 = vunpack.c.l.b16 %v176
      %v289 = vunpack.c.h.b16 %v176
      %v290 = vunpack.c.l.b16 %v177
      %v291 = vunpack.c.h.b16 %v177
      %v292 = vunpack.c.l.b16 %v178
      %v293 = vunpack.c.h.b16 %v178
      %v294 = vunpack.c.l.b16 %v179
      %v295 = vunpack.c.h.b16 %v179
      %v296 = vpack.c.b16 %v234, %v232
      %v297 = vpack.c.b16 %v235, %v233
      %v298 = vpack.c.b16 %v238, %v236
      %v299 = vpack.c.b16 %v239, %v237
      %v300 = vpack.c.b16 %v242, %v240
      %v301 = vpack.c.b16 %v243, %v241
      %v302 = vpack.c.b16 %v246, %v244
      %v303 = vpack.c.b16 %v247, %v245
      %v304 = vpack.c.b16 %v250, %v248
      %v305 = vpack.c.b16 %v251, %v249
      %v306 = vpack.c.b16 %v254, %v252
      %v307 = vpack.c.b16 %v255, %v253
      %v308 = vpack.c.b16 %v258, %v256
      %v309 = vpack.c.b16 %v259, %v257
      %v310 = vpack.c.b16 %v262, %v260
      %v311 = vpack.c.b16 %v263, %v261
      %v312 = vpack.c.b16 %v266, %v264
      %v313 = vpack.c.b16 %v267, %v265
      %v314 = vpack.c.b16 %v270, %v268
      %v315 = vpack.c.b16 %v271, %v269
      %v316 = vpack.c.b16 %v274, %v272
      %v317 = vpack.c.b16 %v275, %v273
      %v318 = vpack.c.b16 %v278, %v276
      %v319 = vpack.c.b16 %v279, %v277
      %v320 = vpack.c.b16 %v282, %v280
      %v321 = vpack.c.b16 %v283, %v281
      %v322 = vpack.c.b16 %v286, %v284
      %v323 = vpack.c.b16 %v287, %v285
      %v324 = vpack.c.b16 %v290, %v288
      %v325 = vpack.c.b16 %v291, %v289
      %v326 = vpack.c.b16 %v294, %v292
      %v327 = vpack.c.b16 %v295, %v293
      %360 = vmatprep.subr.bf16.mxu0 %v297
      %361 = vmatpush1.bf16.msra.mxu0 %v296
      %362 = vmatprep.subr.bf16.mxu0 %v299
      %363 = vmatpush1.bf16.msra.mxu0 %v298
      %364 = vmatprep.subr.bf16.mxu0 %v301
      %365 = vmatpush1.bf16.msra.mxu0 %v300
      %366 = vmatprep.subr.bf16.mxu0 %v303
      %367 = vmatpush1.bf16.msra.mxu0 %v302
      %368 = vmatprep.subr.bf16.mxu0 %v305
      %369 = vmatpush1.bf16.msra.mxu0 %v304
      %370 = vmatprep.subr.bf16.mxu0 %v307
      %371 = vmatpush1.bf16.msra.mxu0 %v306
      %372 = vmatprep.subr.bf16.mxu0 %v309
      %373 = vmatpush1.bf16.msra.mxu0 %v308
      %374 = vmatprep.subr.bf16.mxu0 %v311
      %375 = vmatpush1.bf16.msra.mxu0 %v310
      %376 = vmatprep.subr.bf16.mxu0 %v313
      %377 = vmatpush1.bf16.msra.mxu0 %v312
      %378 = vmatprep.subr.bf16.mxu0 %v315
      %379 = vmatpush1.bf16.msra.mxu0 %v314
      %380 = vmatprep.subr.bf16.mxu0 %v317
      %381 = vmatpush1.bf16.msra.mxu0 %v316
      %382 = vmatprep.subr.bf16.mxu0 %v319
      %383 = vmatpush1.bf16.msra.mxu0 %v318
      %384 = vmatprep.subr.bf16.mxu0 %v321
      %385 = vmatpush1.bf16.msra.mxu0 %v320
      %386 = vmatprep.subr.bf16.mxu0 %v323
      %387 = vmatpush1.bf16.msra.mxu0 %v322
      %388 = vmatprep.subr.bf16.mxu0 %v325
      %389 = vmatpush1.bf16.msra.mxu0 %v324
      %390 = vmatprep.subr.bf16.mxu0 %v327
      %391 = vmatpush1.bf16.msra.mxu0 %v326
      %392 = vmatprep.mubr.bf16.mxu0 %v193
      %393 = vmatmul.mubr.bf16.gmra.mrb[0].mxu0 %v192
      %v394 = vpop.f32.mrb[0].mxu0
      %v395 = vadd.f32 0.0, %v394
      %v396 = vpop.f32.mrb[0].mxu0
      %v397 = vadd.f32 0.0, %v396
      %v398 = vpop.f32.mrb[0].mxu0
      %v399 = vadd.f32 0.0, %v398
      %v400 = vpop.f32.mrb[0].mxu0
      %v401 = vadd.f32 0.0, %v400
      %402 = vmatprep.mubr.bf16.mxu0 %v195
      %403 = vmatmul.mubr.bf16.gmra.mrb[0].mxu0 %v194
      %v404 = vpop.f32.mrb[0].mxu0
      %v405 = vadd.f32 0.0, %v404
      %v406 = vpop.f32.mrb[0].mxu0
      %v407 = vadd.f32 0.0, %v406
      %v408 = vpop.f32.mrb[0].mxu0
      %v409 = vadd.f32 0.0, %v408
      %v410 = vpop.f32.mrb[0].mxu0
      %v411 = vadd.f32 0.0, %v410
      %412 = vdwg.mxu0
      %v413 = vadd.f32 %v395, %v397
      %414 = vadd.xlane.f32.xlu0 %v413
      %v415 = vpop.xlane.xlu0 %414
      %v416 = vadd.f32 %v399, %v401
      %417 = vadd.xlane.f32.xlu0 %v416
      %v418 = vpop.xlane.xlu0 %417
      %v419 = vadd.f32 %v405, %v407
      %420 = vadd.xlane.f32.xlu0 %v419
      %v421 = vpop.xlane.xlu0 %420
      %v422 = vadd.f32 %v409, %v411
      %423 = vadd.xlane.f32.xlu0 %v422
      %v424 = vpop.xlane.xlu0 %423
      %v425 = vmul.f32 %v415, 0.00390625
      %v426 = vmul.f32 %v418, 0.00390625
      %v427 = vmul.f32 %v421, 0.00390625
      %v428 = vmul.f32 %v424, 0.00390625
      %v429 = vmul.f32 %v395, %v395
      %v430 = vmul.f32 %v397, %v397
      %v431 = vmul.f32 %v399, %v399
      %v432 = vmul.f32 %v401, %v401
      %v433 = vmul.f32 %v405, %v405
      %v434 = vmul.f32 %v407, %v407
      %v435 = vmul.f32 %v409, %v409
      %v436 = vmul.f32 %v411, %v411
      %v437 = vadd.f32 %v429, %v430
      %438 = vadd.xlane.f32.xlu0 %v437
      %v439 = vpop.xlane.xlu0 %438
      %v440 = vadd.f32 %v431, %v432
      %441 = vadd.xlane.f32.xlu0 %v440
      %v442 = vpop.xlane.xlu0 %441
      %v443 = vadd.f32 %v433, %v434
      %444 = vadd.xlane.f32.xlu0 %v443
      %v445 = vpop.xlane.xlu0 %444
      %v446 = vadd.f32 %v435, %v436
      %447 = vadd.xlane.f32.xlu0 %v446
      %v448 = vpop.xlane.xlu0 %447
      %v449 = vmul.f32 %v439, 0.00390625
      %v450 = vmul.f32 %v442, 0.00390625
      %v451 = vmul.f32 %v445, 0.00390625
      %v452 = vmul.f32 %v448, 0.00390625
      %v453 = vmul.f32 %v425, %v425
      %v454 = vmul.f32 %v426, %v426
      %v455 = vmul.f32 %v427, %v427
      %v456 = vmul.f32 %v428, %v428
      %v457 = vsub.f32 %v449, %v453
      %v458 = vsub.f32 %v450, %v454
      %v459 = vsub.f32 %v451, %v455
      %v460 = vsub.f32 %v452, %v456
      %v461 = vmax.f32 %v457, 0.0
      %v462 = vmax.f32 %v458, 0.0
      %v463 = vmax.f32 %v459, 0.0
      %v464 = vmax.f32 %v460, 0.0
      %v465 = vsub.f32 %v395, %v425
      %v466 = vsub.f32 %v397, %v425
      %v467 = vsub.f32 %v399, %v426
      %v468 = vsub.f32 %v401, %v426
      %v469 = vsub.f32 %v405, %v427
      %v470 = vsub.f32 %v407, %v427
      %v471 = vsub.f32 %v409, %v428
      %v472 = vsub.f32 %v411, %v428
      %v473 = vadd.f32 %v461, 1e-05
      %v474 = vadd.f32 %v462, 1e-05
      %v475 = vadd.f32 %v463, 1e-05
      %v476 = vadd.f32 %v464, 1e-05
      %v477 = vrsqrt.pop %v473
      %v478 = vrsqrt.pop %v474
      %v479 = vrsqrt.pop %v475
      %v480 = vrsqrt.pop %v476
      %v481 = vmul.f32 %v465, %v477
      %v482 = vmul.f32 %v466, %v477
      %v483 = vmul.f32 %v467, %v478
      %v484 = vmul.f32 %v468, %v478
      %v485 = vmul.f32 %v469, %v479
      %v486 = vmul.f32 %v470, %v479
      %v487 = vmul.f32 %v471, %v480
      %v488 = vmul.f32 %v472, %v480
      %vm489 = vcmp.ge.f32.partialorder %v481, 0.0
      %vm490 = vcmp.ge.f32.partialorder %v482, 0.0
      %vm491 = vcmp.ge.f32.partialorder %v483, 0.0
      %vm492 = vcmp.ge.f32.partialorder %v484, 0.0
      %vm493 = vcmp.ge.f32.partialorder %v485, 0.0
      %vm494 = vcmp.ge.f32.partialorder %v486, 0.0
      %vm495 = vcmp.ge.f32.partialorder %v487, 0.0
      %vm496 = vcmp.ge.f32.partialorder %v488, 0.0
      %v497 = vmul.f32 %v481, 0.2
      %v498 = vmul.f32 %v482, 0.2
      %v499 = vmul.f32 %v483, 0.2
      %v500 = vmul.f32 %v484, 0.2
      %v501 = vmul.f32 %v485, 0.2
      %v502 = vmul.f32 %v486, 0.2
      %v503 = vmul.f32 %v487, 0.2
      %v504 = vmul.f32 %v488, 0.2
      %v505 = vsel %vm489, %v481, %v497
      %v506 = vsel %vm490, %v482, %v498
      %v507 = vsel %vm491, %v483, %v499
      %v508 = vsel %vm492, %v484, %v500
      %v509 = vsel %vm493, %v485, %v501
      %v510 = vsel %vm494, %v486, %v502
      %v511 = vsel %vm495, %v487, %v503
      %v512 = vsel %vm496, %v488, %v504
      %v513 = vpack.c.bf16 %v507, %v505
      %v514 = vpack.c.bf16 %v508, %v506
      %v515 = vpack.c.bf16 %v511, %v509
      %v516 = vpack.c.bf16 %v512, %v510
      %v521 = vunpack.c.l.b16 %v513
      %v522 = vunpack.c.l.b16 %v514
      %v523 = vunpack.c.h.b16 %v513
      %v524 = vunpack.c.h.b16 %v514
      %v525 = vunpack.c.l.b16 %v515
      %v526 = vunpack.c.l.b16 %v516
      %v527 = vunpack.c.h.b16 %v515
      %v528 = vunpack.c.h.b16 %v516
      %v529 = vpack.c.b16 %v522, %v521
      %v530 = vpack.c.b16 %v524, %v523
      %v531 = vpack.c.b16 %v526, %v525
      %v532 = vpack.c.b16 %v528, %v527
      %537 = vst [vmem:[%s143] sm:$0xff] %v529
      %538 = vst [vmem:[%s143 + $0x8] sm:$0xff] %v530
      %539 = vst [vmem:[%s143 + $0x10] sm:$0xff] %v531
      %540 = vst [vmem:[%s143 + $0x18] sm:$0xff] %v532
      %p541 = scmp.lt.s32.totalorder %s13, 1
      %s542 = scalar_select %p541, %s13, 1
      %s543 = smul.addr %s542, 8
      %s544 = smul.addr %s543, 4
      %s545 = scalar_lea.vmem %s2, %s544
      // Predicated region
      $region29: #{critic_forward.7} parent=27 // pred_check
        %p546 = pneg %p78
      $region30: #{critic_forward.7} parent=27 // pred_check_branch
        %548 = sbr.rel (%p546) target = $region32
      $region31: #{critic_forward.7} parent=27 // pred_region
        _
      $region32: #{critic_forward.7} parent=27 // pred_fallthru
        _
    $region28: #{critic_forward.7} parent=5 // pred_fallthru
      _
    %p549 = scmp.le.s32.totalorder 2, %s8
    // Predicated region
    $region33: #{critic_forward.7} parent=5 // pred_check
      %p550 = pneg %p549
    $region34: #{critic_forward.7} parent=5 // pred_check_branch
      %552 = sbr.rel (%p550) target = $region36
    $region35: #{critic_forward.7} parent=5 // pred_region
      %s553 = ssub.s32 %s8, 2
      // Predicated region
      $region37: #{critic_forward.7} parent=35 // pred_check
        %p554 = pneg %p84
      $region38: #{critic_forward.7} parent=35 // pred_check_branch
        %556 = sbr.rel (%p554) target = $region40
      $region39: #{critic_forward.7} parent=35 // pred_region
        %p557 = scmp.lt.s32.totalorder %s14, 1
        %s558 = scalar_select %p557, %s14, 1
        %s559 = smul.addr %s558, 8
        %s560 = smul.addr %s559, 4
        %s561 = scalar_lea.vmem %s2, %s560
      $region40: #{critic_forward.7} parent=35 // pred_fallthru
        _
    $region36: #{critic_forward.7} parent=5 // pred_fallthru
      _
  $region6: #{critic_forward.7} parent=0 // loop_footer
    %s12 = sadd.s32 1, %s8
  $region7: #{critic_forward.7} parent=0 // loop_footer_branch
    %7 = sbr.rel target = $region3
  $region8: #{critic_forward.7} parent=0 // loop_exit
    _

// kernel: critic_forward.8
$region0: #{critic_forward.8}
  #allocation0 [shape = 'u32[]', space=smem, size = 0x4, offset = 0x4, fixed_abs, tag = 'smem constant byte address 0x4 - core index']
  #allocation1 [shape = 'u32[144,128]{1,0:T(1,128)}', space=vmem, size = 0x12000, scoped, tag = 'internal scratch']
  %s0 = inlined_call_operand.vmem [shape: bf16[64,512], index: 0, kind: input, shape index: {}]
  %s1 = inlined_call_operand.vmem [shape: bf16[2,512,64], index: 1, kind: input, shape index: {}]
  %s2 = inlined_call_operand.vmem [shape: bf16[2,64,64], index: 2, kind: output, shape index: {}]
  %s3 = sld [smem:[#allocation0]]
  $region41: #{critic_forward.8} parent=0
    _
  %s5 = ssub.s32 1, %s3
  %s6 = scalar_select 0, %s5, %s3
  loop: start=0, step=1, limit=4
  $region2: #{critic_forward.8} parent=0 // loop_pre_header
    _
  $region3: #{critic_forward.8} parent=0 // loop_header
    %s8 = sphi 0, %s12
    %p9 = scmp.ge.s32.totalorder %s8, 4
    %s16 = sphi 0, %s16
    %s18 = sphi 0, %s16
    %s19 = sphi 0, %s18
    %s33 = sphi 0, %s19
    %s39 = sphi 0, %s41
    %s42 = sphi 0, %s39
    %s43 = sphi 0, %s42
    %s59 = sphi 0, %s43
    %s65 = sphi 0, %s67
    %s68 = sphi 0, %s65
    %s69 = sphi 0, %s68
    %s85 = sphi 0, %s69
  $region4: #{critic_forward.8} parent=0 // loop_header_branch
    %11 = sbr.rel (%p9) target = $region8
  $region5: #{critic_forward.8} parent=0 // loop_body
    %s13 = ssub.s32 %s8, 1
    %s14 = ssub.s32 %s8, 2
    %s15 = sadd.s32 %s8, 1
    %s17 = sadd.s32 %s16, 1
    %p20 = scmp.eq.s32.totalorder %s8, 1
    %p21 = scmp.ne.s32.totalorder %s16, %s18
    %p22 = scmp.eq.s32.totalorder %s8, 0
    %p23 = por %p21, %p22
    %p24 = scmp.ne.s32.totalorder %s16, %s18
    %p25 = scmp.eq.s32.totalorder %s13, 1
    %p26 = por %p24, %p25
    %p27 = scmp.ne.s32.totalorder %s18, %s19
    %p28 = scmp.eq.s32.totalorder %s13, 0
    %p29 = por %p27, %p28
    %p30 = scmp.ne.s32.totalorder %s18, %s19
    %p31 = scmp.eq.s32.totalorder %s14, 1
    %p32 = por %p30, %p31
    %p34 = scmp.ne.s32.totalorder %s19, %s33
    %p35 = scmp.eq.s32.totalorder %s14, 0
    %p36 = por %p34, %p35
    %s37 = ssub.s32 %s8, %s15
    %p38 = scmp.eq.s32.totalorder %s37, 0
    %s40 = sadd.s32 %s39, 1
    %s41 = scalar_select %p38, %s39, %s40
    %p44 = pneg %p38
    %p45 = scmp.eq.s32.totalorder %s8, 1
    %p46 = por %p44, %p45
    %p47 = scmp.ne.s32.totalorder %s39, %s42
    %p48 = scmp.eq.s32.totalorder %s8, 0
    %p49 = por %p47, %p48
    %p50 = scmp.ne.s32.totalorder %s39, %s42
    %p51 = scmp.eq.s32.totalorder %s13, 1
    %p52 = por %p50, %p51
    %p53 = scmp.ne.s32.totalorder %s42, %s43
    %p54 = scmp.eq.s32.totalorder %s13, 0
    %p55 = por %p53, %p54
    %p56 = scmp.ne.s32.totalorder %s42, %s43
    %p57 = scmp.eq.s32.totalorder %s14, 1
    %p58 = por %p56, %p57
    %p60 = scmp.ne.s32.totalorder %s43, %s59
    %p61 = scmp.eq.s32.totalorder %s14, 0
    %p62 = por %p60, %p61
    %s63 = ssub.s32 %s8, %s15
    %p64 = scmp.eq.s32.totalorder %s63, 0
    %s66 = sadd.s32 %s65, 1
    %s67 = scalar_select %p64, %s65, %s66
    %p70 = pneg %p64
    %p71 = scmp.eq.s32.totalorder %s8, 1
    %p72 = por %p70, %p71
    %p73 = scmp.ne.s32.totalorder %s65, %s68
    %p74 = scmp.eq.s32.totalorder %s8, 0
    %p75 = por %p73, %p74
    %p76 = scmp.ne.s32.totalorder %s65, %s68
    %p77 = scmp.eq.s32.totalorder %s13, 1
    %p78 = por %p76, %p77
    %p79 = scmp.ne.s32.totalorder %s68, %s69
    %p80 = scmp.eq.s32.totalorder %s13, 0
    %p81 = por %p79, %p80
    %p82 = scmp.ne.s32.totalorder %s68, %s69
    %p83 = scmp.eq.s32.totalorder %s14, 1
    %p84 = por %p82, %p83
    %p86 = scmp.ne.s32.totalorder %s69, %s85
    %p87 = scmp.eq.s32.totalorder %s14, 0
    %p88 = por %p86, %p87
    %p89 = scmp.le.s32.totalorder 1, %s8
    %p90 = scmp.lt.s32.totalorder %s8, 3
    %p91 = pnand %p89, %p90
    %p92 = pneg %p91
    // Predicated region
    $region9: #{critic_forward.8} parent=5 // pred_check
      _
    $region10: #{critic_forward.8} parent=5 // pred_check_branch
      %94 = sbr.rel (%p91) target = $region12
    $region11: #{critic_forward.8} parent=5 // pred_region
      %s95 = ssub.s32 %s8, 1
      // Predicated region
      $region13: #{critic_forward.8} parent=11 // pred_check
        %p96 = pneg %p29
      $region14: #{critic_forward.8} parent=11 // pred_check_branch
        %98 = sbr.rel (%p96) target = $region16
      $region15: #{critic_forward.8} parent=11 // pred_region
        _
      $region16: #{critic_forward.8} parent=11 // pred_fallthru
        _
    $region12: #{critic_forward.8} parent=5 // pred_fallthru
      _
    %p99 = scmp.lt.s32.totalorder %s8, 2
    // Predicated region
    $region17: #{critic_forward.8} parent=5 // pred_check
      %p100 = pneg %p99
    $region18: #{critic_forward.8} parent=5 // pred_check_branch
      %102 = sbr.rel (%p100) target = $region20
    $region19: #{critic_forward.8} parent=5 // pred_region
      // Predicated region
      $region21: #{critic_forward.8} parent=19 // pred_check
        %p103 = pneg %p49
      $region22: #{critic_forward.8} parent=19 // pred_check_branch
        %105 = sbr.rel (%p103) target = $region24
      $region23: #{critic_forward.8} parent=19 // pred_region
        %p106 = scmp.lt.s32.totalorder %s8, 1
        %s107 = scalar_select %p106, %s8, 1
        %s108 = smul.addr %s107, 64
        %s109 = smul.addr %s108, 4
        %s110 = scalar_lea.vmem %s1, %s109
      $region24: #{critic_forward.8} parent=19 // pred_fallthru
        _
    $region20: #{critic_forward.8} parent=5 // pred_fallthru
      _
    %p111 = scmp.le.s32.totalorder 1, %s8
    %p112 = scmp.lt.s32.totalorder %s8, 3
    %p113 = pnand %p111, %p112
    %p114 = pneg %p113
    // Predicated region
    $region25: #{critic_forward.8} parent=5 // pred_check
      _
    $region26: #{critic_forward.8} parent=5 // pred_check_branch
      %116 = sbr.rel (%p113) target = $region28
    $region27: #{critic_forward.8} parent=5 // pred_region
      %s117 = ssub.s32 %s8, 1
      %p118 = pneg %p29
      %p119 = pneg %p26
      %p120 = scmp.lt.s32.totalorder %s13, 1
      %s121 = scalar_select %p120, %s13, 1
      %s122 = smul.addr %s121, 64
      %s123 = smul.addr %s122, 4
      %s124 = scalar_lea.vmem %s1, %s123
      %p125 = pneg %p55
      %p126 = pneg %p52
      %p127 = pneg %p81
      %p128 = pneg %p78
      %p129 = scmp.lt.s32.totalorder %s13, 1
      %s130 = scalar_select %p129, %s13, 1
      %s131 = smul.addr %s130, 8
      %s132 = smul.addr %s131, 4
      %s133 = scalar_lea.vmem %s2, %s132
      %p134 = scmp.lt.s32.totalorder %s13, 1
      %s135 = scalar_select %p134, %s13, 1
      %s136 = smul.addr %s135, 64
      %s137 = smul.addr %s136, 4
      %s138 = scalar_lea.vmem %s1, %s137
      %p139 = scmp.lt.s32.totalorder %s13, 1
      %s140 = scalar_select %p139, %s13, 1
      %s141 = smul.addr %s140, 8
      %s142 = smul.addr %s141, 4
      %s143 = scalar_lea.vmem %s2, %s142
      %v145 = vld [vmem:[%s0] sm:$0xff]
      %v146 = vld [vmem:[%s0 + $0x8] sm:$0xff]
      %v147 = vld [vmem:[%s0 + $0x10] sm:$0xff]
      %v148 = vld [vmem:[%s0 + $0x18] sm:$0xff]
      %v149 = vld [vmem:[%s0 + $0x20] sm:$0xff]
      %v150 = vld [vmem:[%s0 + $0x28] sm:$0xff]
      %v151 = vld [vmem:[%s0 + $0x30] sm:$0xff]
      %v152 = vld [vmem:[%s0 + $0x38] sm:$0xff]
      %v153 = vld [vmem:[%s0 + $0x40] sm:$0xff]
      %v154 = vld [vmem:[%s0 + $0x48] sm:$0xff]
      %v155 = vld [vmem:[%s0 + $0x50] sm:$0xff]
      %v156 = vld [vmem:[%s0 + $0x58] sm:$0xff]
      %v157 = vld [vmem:[%s0 + $0x60] sm:$0xff]
      %v158 = vld [vmem:[%s0 + $0x68] sm:$0xff]
      %v159 = vld [vmem:[%s0 + $0x70] sm:$0xff]
      %v160 = vld [vmem:[%s0 + $0x78] sm:$0xff]
      %v161 = vld [vmem:[%s138] sm:$0xf]
      %v162 = vld [vmem:[%s138 + $0x4] sm:$0xf]
      %v163 = vld [vmem:[%s138 + $0x8] sm:$0xf]
      %v164 = vld [vmem:[%s138 + $0xc] sm:$0xf]
      %v165 = vld [vmem:[%s138 + $0x10] sm:$0xf]
      %v166 = vld [vmem:[%s138 + $0x14] sm:$0xf]
      %v167 = vld [vmem:[%s138 + $0x18] sm:$0xf]
      %v168 = vld [vmem:[%s138 + $0x1c] sm:$0xf]
      %v169 = vld [vmem:[%s138 + $0x20] sm:$0xf]
      %v170 = vld [vmem:[%s138 + $0x24] sm:$0xf]
      %v171 = vld [vmem:[%s138 + $0x28] sm:$0xf]
      %v172 = vld [vmem:[%s138 + $0x2c] sm:$0xf]
      %v173 = vld [vmem:[%s138 + $0x30] sm:$0xf]
      %v174 = vld [vmem:[%s138 + $0x34] sm:$0xf]
      %v175 = vld [vmem:[%s138 + $0x38] sm:$0xf]
      %v176 = vld [vmem:[%s138 + $0x3c] sm:$0xf]
      %v177 = vld [vmem:[%s138 + $0x40] sm:$0xf]
      %v178 = vld [vmem:[%s138 + $0x44] sm:$0xf]
      %v179 = vld [vmem:[%s138 + $0x48] sm:$0xf]
      %v180 = vld [vmem:[%s138 + $0x4c] sm:$0xf]
      %v181 = vld [vmem:[%s138 + $0x50] sm:$0xf]
      %v182 = vld [vmem:[%s138 + $0x54] sm:$0xf]
      %v183 = vld [vmem:[%s138 + $0x58] sm:$0xf]
      %v184 = vld [vmem:[%s138 + $0x5c] sm:$0xf]
      %v185 = vld [vmem:[%s138 + $0x60] sm:$0xf]
      %v186 = vld [vmem:[%s138 + $0x64] sm:$0xf]
      %v187 = vld [vmem:[%s138 + $0x68] sm:$0xf]
      %v188 = vld [vmem:[%s138 + $0x6c] sm:$0xf]
      %v189 = vld [vmem:[%s138 + $0x70] sm:$0xf]
      %v190 = vld [vmem:[%s138 + $0x74] sm:$0xf]
      %v191 = vld [vmem:[%s138 + $0x78] sm:$0xf]
      %v192 = vld [vmem:[%s138 + $0x7c] sm:$0xf]
      %v193 = vld [vmem:[%s138 + $0x80] sm:$0xf]
      %v194 = vld [vmem:[%s138 + $0x84] sm:$0xf]
      %v195 = vld [vmem:[%s138 + $0x88] sm:$0xf]
      %v196 = vld [vmem:[%s138 + $0x8c] sm:$0xf]
      %v197 = vld [vmem:[%s138 + $0x90] sm:$0xf]
      %v198 = vld [vmem:[%s138 + $0x94] sm:$0xf]
      %v199 = vld [vmem:[%s138 + $0x98] sm:$0xf]
      %v200 = vld [vmem:[%s138 + $0x9c] sm:$0xf]
      %v201 = vld [vmem:[%s138 + $0xa0] sm:$0xf]
      %v202 = vld [vmem:[%s138 + $0xa4] sm:$0xf]
      %v203 = vld [vmem:[%s138 + $0xa8] sm:$0xf]
      %v204 = vld [vmem:[%s138 + $0xac] sm:$0xf]
      %v205 = vld [vmem:[%s138 + $0xb0] sm:$0xf]
      %v206 = vld [vmem:[%s138 + $0xb4] sm:$0xf]
      %v207 = vld [vmem:[%s138 + $0xb8] sm:$0xf]
      %v208 = vld [vmem:[%s138 + $0xbc] sm:$0xf]
      %v209 = vld [vmem:[%s138 + $0xc0] sm:$0xf]
      %v210 = vld [vmem:[%s138 + $0xc4] sm:$0xf]
      %v211 = vld [vmem:[%s138 + $0xc8] sm:$0xf]
      %v212 = vld [vmem:[%s138 + $0xcc] sm:$0xf]
      %v213 = vld [vmem:[%s138 + $0xd0] sm:$0xf]
      %v214 = vld [vmem:[%s138 + $0xd4] sm:$0xf]
      %v215 = vld [vmem:[%s138 + $0xd8] sm:$0xf]
      %v216 = vld [vmem:[%s138 + $0xdc] sm:$0xf]
      %v217 = vld [vmem:[%s138 + $0xe0] sm:$0xf]
      %v218 = vld [vmem:[%s138 + $0xe4] sm:$0xf]
      %v219 = vld [vmem:[%s138 + $0xe8] sm:$0xf]
      %v220 = vld [vmem:[%s138 + $0xec] sm:$0xf]
      %v221 = vld [vmem:[%s138 + $0xf0] sm:$0xf]
      %v222 = vld [vmem:[%s138 + $0xf4] sm:$0xf]
      %v223 = vld [vmem:[%s138 + $0xf8] sm:$0xf]
      %v224 = vld [vmem:[%s138 + $0xfc] sm:$0xf]
      %v241 = vunpack.c.l.b16 %v145
      %v242 = vunpack.c.h.b16 %v145
      %v243 = vunpack.c.l.b16 %v146
      %v244 = vunpack.c.h.b16 %v146
      %v245 = vunpack.c.l.b16 %v147
      %v246 = vunpack.c.h.b16 %v147
      %v247 = vunpack.c.l.b16 %v148
      %v248 = vunpack.c.h.b16 %v148
      %v249 = vunpack.c.l.b16 %v149
      %v250 = vunpack.c.h.b16 %v149
      %v251 = vunpack.c.l.b16 %v150
      %v252 = vunpack.c.h.b16 %v150
      %v253 = vunpack.c.l.b16 %v151
      %v254 = vunpack.c.h.b16 %v151
      %v255 = vunpack.c.l.b16 %v152
      %v256 = vunpack.c.h.b16 %v152
      %v257 = vunpack.c.l.b16 %v153
      %v258 = vunpack.c.h.b16 %v153
      %v259 = vunpack.c.l.b16 %v154
      %v260 = vunpack.c.h.b16 %v154
      %v261 = vunpack.c.l.b16 %v155
      %v262 = vunpack.c.h.b16 %v155
      %v263 = vunpack.c.l.b16 %v156
      %v264 = vunpack.c.h.b16 %v156
      %v265 = vunpack.c.l.b16 %v157
      %v266 = vunpack.c.h.b16 %v157
      %v267 = vunpack.c.l.b16 %v158
      %v268 = vunpack.c.h.b16 %v158
      %v269 = vunpack.c.l.b16 %v159
      %v270 = vunpack.c.h.b16 %v159
      %v271 = vunpack.c.l.b16 %v160
      %v272 = vunpack.c.h.b16 %v160
      %v273 = vpack.c.b16 %v245, %v241
      %v274 = vpack.c.b16 %v246, %v242
      %v275 = vpack.c.b16 %v247, %v243
      %v276 = vpack.c.b16 %v248, %v244
      %v277 = vpack.c.b16 %v253, %v249
      %v278 = vpack.c.b16 %v254, %v250
      %v279 = vpack.c.b16 %v255, %v251
      %v280 = vpack.c.b16 %v256, %v252
      %v281 = vpack.c.b16 %v261, %v257
      %v282 = vpack.c.b16 %v262, %v258
      %v283 = vpack.c.b16 %v263, %v259
      %v284 = vpack.c.b16 %v264, %v260
      %v285 = vpack.c.b16 %v269, %v265
      %v286 = vpack.c.b16 %v270, %v266
      %v287 = vpack.c.b16 %v271, %v267
      %v288 = vpack.c.b16 %v272, %v268
      %v369 = vunpack.c.l.b16 %v161
      %v370 = vunpack.c.l.b16 %v162
      %v371 = vunpack.c.l.b16 %v163
      %v372 = vunpack.c.l.b16 %v164
      %v373 = vunpack.c.l.b16 %v165
      %v374 = vunpack.c.l.b16 %v166
      %v375 = vunpack.c.l.b16 %v167
      %v376 = vunpack.c.l.b16 %v168
      %v377 = vunpack.c.l.b16 %v169
      %v378 = vunpack.c.l.b16 %v170
      %v379 = vunpack.c.l.b16 %v171
      %v380 = vunpack.c.l.b16 %v172
      %v381 = vunpack.c.l.b16 %v173
      %v382 = vunpack.c.l.b16 %v174
      %v383 = vunpack.c.l.b16 %v175
      %v384 = vunpack.c.l.b16 %v176
      %v385 = vunpack.c.l.b16 %v177
      %v386 = vunpack.c.l.b16 %v178
      %v387 = vunpack.c.l.b16 %v179
      %v388 = vunpack.c.l.b16 %v180
      %v389 = vunpack.c.l.b16 %v181
      %v390 = vunpack.c.l.b16 %v182
      %v391 = vunpack.c.l.b16 %v183
      %v392 = vunpack.c.l.b16 %v184
      %v393 = vunpack.c.l.b16 %v185
      %v394 = vunpack.c.l.b16 %v186
      %v395 = vunpack.c.l.b16 %v187
      %v396 = vunpack.c.l.b16 %v188
      %v397 = vunpack.c.l.b16 %v189
      %v398 = vunpack.c.l.b16 %v190
      %v399 = vunpack.c.l.b16 %v191
      %v400 = vunpack.c.l.b16 %v192
      %v401 = vunpack.c.l.b16 %v193
      %v402 = vunpack.c.l.b16 %v194
      %v403 = vunpack.c.l.b16 %v195
      %v404 = vunpack.c.l.b16 %v196
      %v405 = vunpack.c.l.b16 %v197
      %v406 = vunpack.c.l.b16 %v198
      %v407 = vunpack.c.l.b16 %v199
      %v408 = vunpack.c.l.b16 %v200
      %v409 = vunpack.c.l.b16 %v201
      %v410 = vunpack.c.l.b16 %v202
      %v411 = vunpack.c.l.b16 %v203
      %v412 = vunpack.c.l.b16 %v204
      %v413 = vunpack.c.l.b16 %v205
      %v414 = vunpack.c.l.b16 %v206
      %v415 = vunpack.c.l.b16 %v207
      %v416 = vunpack.c.l.b16 %v208
      %v417 = vunpack.c.l.b16 %v209
      %v418 = vunpack.c.l.b16 %v210
      %v419 = vunpack.c.l.b16 %v211
      %v420 = vunpack.c.l.b16 %v212
      %v421 = vunpack.c.l.b16 %v213
      %v422 = vunpack.c.l.b16 %v214
      %v423 = vunpack.c.l.b16 %v215
      %v424 = vunpack.c.l.b16 %v216
      %v425 = vunpack.c.l.b16 %v217
      %v426 = vunpack.c.l.b16 %v218
      %v427 = vunpack.c.l.b16 %v219
      %v428 = vunpack.c.l.b16 %v220
      %v429 = vunpack.c.l.b16 %v221
      %v430 = vunpack.c.l.b16 %v222
      %v431 = vunpack.c.l.b16 %v223
      %v432 = vunpack.c.l.b16 %v224
      %v433 = vpack.c.b16 %v370, %v369
      %v434 = vpack.c.b16 %v372, %v371
      %v435 = vpack.c.b16 %v374, %v373
      %v436 = vpack.c.b16 %v376, %v375
      %v437 = vpack.c.b16 %v378, %v377
      %v438 = vpack.c.b16 %v380, %v379
      %v439 = vpack.c.b16 %v382, %v381
      %v440 = vpack.c.b16 %v384, %v383
      %v441 = vpack.c.b16 %v386, %v385
      %v442 = vpack.c.b16 %v388, %v387
      %v443 = vpack.c.b16 %v390, %v389
      %v444 = vpack.c.b16 %v392, %v391
      %v445 = vpack.c.b16 %v394, %v393
      %v446 = vpack.c.b16 %v396, %v395
      %v447 = vpack.c.b16 %v398, %v397
      %v448 = vpack.c.b16 %v400, %v399
      %v449 = vpack.c.b16 %v402, %v401
      %v450 = vpack.c.b16 %v404, %v403
      %v451 = vpack.c.b16 %v406, %v405
      %v452 = vpack.c.b16 %v408, %v407
      %v453 = vpack.c.b16 %v410, %v409
      %v454 = vpack.c.b16 %v412, %v411
      %v455 = vpack.c.b16 %v414, %v413
      %v456 = vpack.c.b16 %v416, %v415
      %v457 = vpack.c.b16 %v418, %v417
      %v458 = vpack.c.b16 %v420, %v419
      %v459 = vpack.c.b16 %v422, %v421
      %v460 = vpack.c.b16 %v424, %v423
      %v461 = vpack.c.b16 %v426, %v425
      %v462 = vpack.c.b16 %v428, %v427
      %v463 = vpack.c.b16 %v430, %v429
      %v464 = vpack.c.b16 %v432, %v431
      %497 = vmatprep.subr.bf16.mxu0 0
      %498 = vmatpush1.bf16.msra.mxu0 %v433
      %499 = vmatprep.subr.bf16.mxu0 0
      %500 = vmatpush1.bf16.msra.mxu0 %v434
      %501 = vmatprep.subr.bf16.mxu0 0
      %502 = vmatpush1.bf16.msra.mxu0 %v435
      %503 = vmatprep.subr.bf16.mxu0 0
      %504 = vmatpush1.bf16.msra.mxu0 %v436
      %505 = vmatprep.subr.bf16.mxu0 0
      %506 = vmatpush1.bf16.msra.mxu0 %v437
      %507 = vmatprep.subr.bf16.mxu0 0
      %508 = vmatpush1.bf16.msra.mxu0 %v438
      %509 = vmatprep.subr.bf16.mxu0 0
      %510 = vmatpush1.bf16.msra.mxu0 %v439
      %511 = vmatprep.subr.bf16.mxu0 0
      %512 = vmatpush1.bf16.msra.mxu0 %v440
      %513 = vmatprep.subr.bf16.mxu0 0
      %514 = vmatpush1.bf16.msra.mxu0 %v441
      %515 = vmatprep.subr.bf16.mxu0 0
      %516 = vmatpush1.bf16.msra.mxu0 %v442
      %517 = vmatprep.subr.bf16.mxu0 0
      %518 = vmatpush1.bf16.msra.mxu0 %v443
      %519 = vmatprep.subr.bf16.mxu0 0
      %520 = vmatpush1.bf16.msra.mxu0 %v444
      %521 = vmatprep.subr.bf16.mxu0 0
      %522 = vmatpush1.bf16.msra.mxu0 %v445
      %523 = vmatprep.subr.bf16.mxu0 0
      %524 = vmatpush1.bf16.msra.mxu0 %v446
      %525 = vmatprep.subr.bf16.mxu0 0
      %526 = vmatpush1.bf16.msra.mxu0 %v447
      %527 = vmatprep.subr.bf16.mxu0 0
      %528 = vmatpush1.bf16.msra.mxu0 %v448
      %529 = vmatprep.mubr.bf16.mxu0 %v274
      %530 = vmatmul.mubr.bf16.gmra.mrb[0].mxu0 %v273
      %v531 = vpop.f32.mrb[0].mxu0
      %v532 = vadd.f32 0.0, %v531
      %v533 = vpop.f32.mrb[0].mxu0
      %v534 = vpop.f32.mrb[0].mxu0
      %v535 = vadd.f32 0.0, %v534
      %v536 = vpop.f32.mrb[0].mxu0
      %537 = vmatprep.mubr.bf16.mxu0 %v278
      %538 = vmatmul.mubr.bf16.gmra.mrb[0].mxu0 %v277
      %v539 = vpop.f32.mrb[0].mxu0
      %v540 = vadd.f32 0.0, %v539
      %v541 = vpop.f32.mrb[0].mxu0
      %v542 = vpop.f32.mrb[0].mxu0
      %v543 = vadd.f32 0.0, %v542
      %v544 = vpop.f32.mrb[0].mxu0
      %545 = vmatprep.mubr.bf16.mxu0 %v282
      %546 = vmatmul.mubr.bf16.gmra.mrb[0].mxu0 %v281
      %v547 = vpop.f32.mrb[0].mxu0
      %v548 = vadd.f32 0.0, %v547
      %v549 = vpop.f32.mrb[0].mxu0
      %v550 = vpop.f32.mrb[0].mxu0
      %v551 = vadd.f32 0.0, %v550
      %v552 = vpop.f32.mrb[0].mxu0
      %553 = vmatprep.mubr.bf16.mxu0 %v286
      %554 = vmatmul.mubr.bf16.gmra.mrb[0].mxu0 %v285
      %v555 = vpop.f32.mrb[0].mxu0
      %v556 = vadd.f32 0.0, %v555
      %v557 = vpop.f32.mrb[0].mxu0
      %v558 = vpop.f32.mrb[0].mxu0
      %v559 = vadd.f32 0.0, %v558
      %v560 = vpop.f32.mrb[0].mxu0
      %561 = vdwg.mxu0
      %562 = vmatprep.subr.bf16.mxu0 0
      %563 = vmatpush1.bf16.msra.mxu0 %v449
      %564 = vmatprep.subr.bf16.mxu0 0
      %565 = vmatpush1.bf16.msra.mxu0 %v450
      %566 = vmatprep.subr.bf16.mxu0 0
      %567 = vmatpush1.bf16.msra.mxu0 %v451
      %568 = vmatprep.subr.bf16.mxu0 0
      %569 = vmatpush1.bf16.msra.mxu0 %v452
      %570 = vmatprep.subr.bf16.mxu0 0
      %571 = vmatpush1.bf16.msra.mxu0 %v453
      %572 = vmatprep.subr.bf16.mxu0 0
      %573 = vmatpush1.bf16.msra.mxu0 %v454
      %574 = vmatprep.subr.bf16.mxu0 0
      %575 = vmatpush1.bf16.msra.mxu0 %v455
      %576 = vmatprep.subr.bf16.mxu0 0
      %577 = vmatpush1.bf16.msra.mxu0 %v456
      %578 = vmatprep.subr.bf16.mxu0 0
      %579 = vmatpush1.bf16.msra.mxu0 %v457
      %580 = vmatprep.subr.bf16.mxu0 0
      %581 = vmatpush1.bf16.msra.mxu0 %v458
      %582 = vmatprep.subr.bf16.mxu0 0
      %583 = vmatpush1.bf16.msra.mxu0 %v459
      %584 = vmatprep.subr.bf16.mxu0 0
      %585 = vmatpush1.bf16.msra.mxu0 %v460
      %586 = vmatprep.subr.bf16.mxu0 0
      %587 = vmatpush1.bf16.msra.mxu0 %v461
      %588 = vmatprep.subr.bf16.mxu0 0
      %589 = vmatpush1.bf16.msra.mxu0 %v462
      %590 = vmatprep.subr.bf16.mxu0 0
      %591 = vmatpush1.bf16.msra.mxu0 %v463
      %592 = vmatprep.subr.bf16.mxu0 0
      %593 = vmatpush1.bf16.msra.mxu0 %v464
      %594 = vmatprep.mubr.bf16.mxu0 %v276
      %595 = vmatmul.mubr.bf16.gmra.mrb[0].mxu0 %v275
      %v596 = vpop.f32.mrb[0].mxu0
      %v597 = vadd.f32 %v532, %v596
      %v598 = vpop.f32.mrb[0].mxu0
      %v599 = vpop.f32.mrb[0].mxu0
      %v600 = vadd.f32 %v535, %v599
      %v601 = vpop.f32.mrb[0].mxu0
      %602 = vmatprep.mubr.bf16.mxu0 %v280
      %603 = vmatmul.mubr.bf16.gmra.mrb[0].mxu0 %v279
      %v604 = vpop.f32.mrb[0].mxu0
      %v605 = vadd.f32 %v540, %v604
      %v606 = vpop.f32.mrb[0].mxu0
      %v607 = vpop.f32.mrb[0].mxu0
      %v608 = vadd.f32 %v543, %v607
      %v609 = vpop.f32.mrb[0].mxu0
      %610 = vmatprep.mubr.bf16.mxu0 %v284
      %611 = vmatmul.mubr.bf16.gmra.mrb[0].mxu0 %v283
      %v612 = vpop.f32.mrb[0].mxu0
      %v613 = vadd.f32 %v548, %v612
      %v614 = vpop.f32.mrb[0].mxu0
      %v615 = vpop.f32.mrb[0].mxu0
      %v616 = vadd.f32 %v551, %v615
      %v617 = vpop.f32.mrb[0].mxu0
      %618 = vmatprep.mubr.bf16.mxu0 %v288
      %619 = vmatmul.mubr.bf16.gmra.mrb[0].mxu0 %v287
      %v620 = vpop.f32.mrb[0].mxu0
      %v621 = vadd.f32 %v556, %v620
      %v622 = vpop.f32.mrb[0].mxu0
      %v623 = vpop.f32.mrb[0].mxu0
      %v624 = vadd.f32 %v559, %v623
      %v625 = vpop.f32.mrb[0].mxu0
      %626 = vdwg.mxu0
      %vm627 = vcmask 523264
      %v628 = vsel %vm627, %v597, 0.0
      %629 = vadd.xlane.f32.xlu0 %v628
      %v630 = vpop.xlane.xlu0 %629
      %v631 = vsel %vm627, %v600, 0.0
      %632 = vadd.xlane.f32.xlu0 %v631
      %v633 = vpop.xlane.xlu0 %632
      %v634 = vsel %vm627, %v605, 0.0
      %635 = vadd.xlane.f32.xlu0 %v634
      %v636 = vpop.xlane.xlu0 %635
      %v637 = vsel %vm627, %v608, 0.0
      %638 = vadd.xlane.f32.xlu0 %v637
      %v639 = vpop.xlane.xlu0 %638
      %v640 = vsel %vm627, %v613, 0.0
      %641 = vadd.xlane.f32.xlu0 %v640
      %v642 = vpop.xlane.xlu0 %641
      %v643 = vsel %vm627, %v616, 0.0
      %644 = vadd.xlane.f32.xlu0 %v643
      %v645 = vpop.xlane.xlu0 %644
      %v646 = vsel %vm627, %v621, 0.0
      %647 = vadd.xlane.f32.xlu0 %v646
      %v648 = vpop.xlane.xlu0 %647
      %v649 = vsel %vm627, %v624, 0.0
      %650 = vadd.xlane.f32.xlu0 %v649
      %v651 = vpop.xlane.xlu0 %650
      %v652 = vmul.f32 %v630, 0.015625
      %v653 = vmul.f32 %v633, 0.015625
      %v654 = vmul.f32 %v636, 0.015625
      %v655 = vmul.f32 %v639, 0.015625
      %v656 = vmul.f32 %v642, 0.015625
      %v657 = vmul.f32 %v645, 0.015625
      %v658 = vmul.f32 %v648, 0.015625
      %v659 = vmul.f32 %v651, 0.015625
      %v660 = vmul.f32 %v597, %v597
      %v661 = vmul.f32 %v600, %v600
      %v662 = vmul.f32 %v605, %v605
      %v663 = vmul.f32 %v608, %v608
      %v664 = vmul.f32 %v613, %v613
      %v665 = vmul.f32 %v616, %v616
      %v666 = vmul.f32 %v621, %v621
      %v667 = vmul.f32 %v624, %v624
      %v668 = vsel %vm627, %v660, 0.0
      %669 = vadd.xlane.f32.xlu0 %v668
      %v670 = vpop.xlane.xlu0 %669
      %v671 = vsel %vm627, %v661, 0.0
      %672 = vadd.xlane.f32.xlu0 %v671
      %v673 = vpop.xlane.xlu0 %672
      %v674 = vsel %vm627, %v662, 0.0
      %675 = vadd.xlane.f32.xlu0 %v674
      %v676 = vpop.xlane.xlu0 %675
      %v677 = vsel %vm627, %v663, 0.0
      %678 = vadd.xlane.f32.xlu0 %v677
      %v679 = vpop.xlane.xlu0 %678
      %v680 = vsel %vm627, %v664, 0.0
      %681 = vadd.xlane.f32.xlu0 %v680
      %v682 = vpop.xlane.xlu0 %681
      %v683 = vsel %vm627, %v665, 0.0
      %684 = vadd.xlane.f32.xlu0 %v683
      %v685 = vpop.xlane.xlu0 %684
      %v686 = vsel %vm627, %v666, 0.0
      %687 = vadd.xlane.f32.xlu0 %v686
      %v688 = vpop.xlane.xlu0 %687
      %v689 = vsel %vm627, %v667, 0.0
      %690 = vadd.xlane.f32.xlu0 %v689
      %v691 = vpop.xlane.xlu0 %690
      %v692 = vmul.f32 %v670, 0.015625
      %v693 = vmul.f32 %v673, 0.015625
      %v694 = vmul.f32 %v676, 0.015625
      %v695 = vmul.f32 %v679, 0.015625
      %v696 = vmul.f32 %v682, 0.015625
      %v697 = vmul.f32 %v685, 0.015625
      %v698 = vmul.f32 %v688, 0.015625
      %v699 = vmul.f32 %v691, 0.015625
      %v700 = vmul.f32 %v652, %v652
      %v701 = vmul.f32 %v653, %v653
      %v702 = vmul.f32 %v654, %v654
      %v703 = vmul.f32 %v655, %v655
      %v704 = vmul.f32 %v656, %v656
      %v705 = vmul.f32 %v657, %v657
      %v706 = vmul.f32 %v658, %v658
      %v707 = vmul.f32 %v659, %v659
      %v708 = vsub.f32 %v692, %v700
      %v709 = vsub.f32 %v693, %v701
      %v710 = vsub.f32 %v694, %v702
      %v711 = vsub.f32 %v695, %v703
      %v712 = vsub.f32 %v696, %v704
      %v713 = vsub.f32 %v697, %v705
      %v714 = vsub.f32 %v698, %v706
      %v715 = vsub.f32 %v699, %v707
      %v716 = vmax.f32 %v708, 0.0
      %v717 = vmax.f32 %v709, 0.0
      %v718 = vmax.f32 %v710, 0.0
      %v719 = vmax.f32 %v711, 0.0
      %v720 = vmax.f32 %v712, 0.0
      %v721 = vmax.f32 %v713, 0.0
      %v722 = vmax.f32 %v714, 0.0
      %v723 = vmax.f32 %v715, 0.0
      %v724 = vsub.f32 %v597, %v652
      %v725 = vsub.f32 %v600, %v653
      %v726 = vsub.f32 %v605, %v654
      %v727 = vsub.f32 %v608, %v655
      %v728 = vsub.f32 %v613, %v656
      %v729 = vsub.f32 %v616, %v657
      %v730 = vsub.f32 %v621, %v658
      %v731 = vsub.f32 %v624, %v659
      %v732 = vadd.f32 %v716, 1e-05
      %v733 = vadd.f32 %v717, 1e-05
      %v734 = vadd.f32 %v718, 1e-05
      %v735 = vadd.f32 %v719, 1e-05
      %v736 = vadd.f32 %v720, 1e-05
      %v737 = vadd.f32 %v721, 1e-05
      %v738 = vadd.f32 %v722, 1e-05
      %v739 = vadd.f32 %v723, 1e-05
      %v740 = vrsqrt.pop %v732
      %v741 = vrsqrt.pop %v733
      %v742 = vrsqrt.pop %v734
      %v743 = vrsqrt.pop %v735
      %v744 = vrsqrt.pop %v736
      %v745 = vrsqrt.pop %v737
      %v746 = vrsqrt.pop %v738
      %v747 = vrsqrt.pop %v739
      %v748 = vmul.f32 %v724, %v740
      %v749 = vmul.f32 %v725, %v741
      %v750 = vmul.f32 %v726, %v742
      %v751 = vmul.f32 %v727, %v743
      %v752 = vmul.f32 %v728, %v744
      %v753 = vmul.f32 %v729, %v745
      %v754 = vmul.f32 %v730, %v746
      %v755 = vmul.f32 %v731, %v747
      %vm756 = vcmp.ge.f32.partialorder %v748, 0.0
      %vm757 = vcmp.ge.f32.partialorder %v749, 0.0
      %vm758 = vcmp.ge.f32.partialorder %v750, 0.0
      %vm759 = vcmp.ge.f32.partialorder %v751, 0.0
      %vm760 = vcmp.ge.f32.partialorder %v752, 0.0
      %vm761 = vcmp.ge.f32.partialorder %v753, 0.0
      %vm762 = vcmp.ge.f32.partialorder %v754, 0.0
      %vm763 = vcmp.ge.f32.partialorder %v755, 0.0
      %v764 = vmul.f32 %v748, 0.2
      %v765 = vmul.f32 %v749, 0.2
      %v766 = vmul.f32 %v750, 0.2
      %v767 = vmul.f32 %v751, 0.2
      %v768 = vmul.f32 %v752, 0.2
      %v769 = vmul.f32 %v753, 0.2
      %v770 = vmul.f32 %v754, 0.2
      %v771 = vmul.f32 %v755, 0.2
      %v772 = vsel %vm756, %v748, %v764
      %v773 = vsel %vm757, %v749, %v765
      %v774 = vsel %vm758, %v750, %v766
      %v775 = vsel %vm759, %v751, %v767
      %v776 = vsel %vm760, %v752, %v768
      %v777 = vsel %vm761, %v753, %v769
      %v778 = vsel %vm762, %v754, %v770
      %v779 = vsel %vm763, %v755, %v771
      %v780 = vpack.c.bf16 %v773, %v772
      %v781 = vpack.c.bf16 %v775, %v774
      %v782 = vpack.c.bf16 %v777, %v776
      %v783 = vpack.c.bf16 %v779, %v778
      %v788 = vunpack.c.l.b16 %v780
      %v789 = vunpack.c.h.b16 %v780
      %v790 = vunpack.c.l.b16 %v781
      %v791 = vunpack.c.h.b16 %v781
      %v792 = vunpack.c.l.b16 %v782
      %v793 = vunpack.c.h.b16 %v782
      %v794 = vunpack.c.l.b16 %v783
      %v795 = vunpack.c.h.b16 %v783
      %v796 = vpack.c.b16 %v788, %v788
      %v797 = vpack.c.b16 %v789, %v789
      %v798 = vpack.c.b16 %v790, %v790
      %v799 = vpack.c.b16 %v791, %v791
      %v800 = vpack.c.b16 %v792, %v792
      %v801 = vpack.c.b16 %v793, %v793
      %v802 = vpack.c.b16 %v794, %v794
      %v803 = vpack.c.b16 %v795, %v795
      %vm812 = vcmask 519168
      %813 = vst.msk [vmem:[%s143] sm:$0xf] %vm812, %v796
      %814 = vst.msk [vmem:[%s143 + $0x4] sm:$0xf] %vm812, %v797
      %815 = vst.msk [vmem:[%s143 + $0x8] sm:$0xf] %vm812, %v798
      %816 = vst.msk [vmem:[%s143 + $0xc] sm:$0xf] %vm812, %v799
      %817 = vst.msk [vmem:[%s143 + $0x10] sm:$0xf] %vm812, %v800
      %818 = vst.msk [vmem:[%s143 + $0x14] sm:$0xf] %vm812, %v801
      %819 = vst.msk [vmem:[%s143 + $0x18] sm:$0xf] %vm812, %v802
      %820 = vst.msk [vmem:[%s143 + $0x1c] sm:$0xf] %vm812, %v803
      %p821 = scmp.lt.s32.totalorder %s13, 1
      %s822 = scalar_select %p821, %s13, 1
      %s823 = smul.addr %s822, 8
      %s824 = smul.addr %s823, 4
      %s825 = scalar_lea.vmem %s2, %s824
      // Predicated region
      $region29: #{critic_forward.8} parent=27 // pred_check
        %p826 = pneg %p78
      $region30: #{critic_forward.8} parent=27 // pred_check_branch
        %828 = sbr.rel (%p826) target = $region32
      $region31: #{critic_forward.8} parent=27 // pred_region
        _
      $region32: #{critic_forward.8} parent=27 // pred_fallthru
        _
    $region28: #{critic_forward.8} parent=5 // pred_fallthru
      _
    %p829 = scmp.le.s32.totalorder 2, %s8
    // Predicated region
    $region33: #{critic_forward.8} parent=5 // pred_check
      %p830 = pneg %p829
    $region34: #{critic_forward.8} parent=5 // pred_check_branch
      %832 = sbr.rel (%p830) target = $region36
    $region35: #{critic_forward.8} parent=5 // pred_region
      %s833 = ssub.s32 %s8, 2
      // Predicated region
      $region37: #{critic_forward.8} parent=35 // pred_check
        %p834 = pneg %p84
      $region38: #{critic_forward.8} parent=35 // pred_check_branch
        %836 = sbr.rel (%p834) target = $region40
      $region39: #{critic_forward.8} parent=35 // pred_region
        %p837 = scmp.lt.s32.totalorder %s14, 1
        %s838 = scalar_select %p837, %s14, 1
        %s839 = smul.addr %s838, 8
        %s840 = smul.addr %s839, 4
        %s841 = scalar_lea.vmem %s2, %s840
      $region40: #{critic_forward.8} parent=35 // pred_fallthru
        _
    $region36: #{critic_forward.8} parent=5 // pred_fallthru
      _
  $region6: #{critic_forward.8} parent=0 // loop_footer
    %s12 = sadd.s32 1, %s8
  $region7: #{critic_forward.8} parent=0 // loop_footer_branch
    %7 = sbr.rel target = $region3
  $region8: #{critic_forward.8} parent=0 // loop_exit
    _

// kernel: critic_forward.9
$region0: #{critic_forward.9}
  #allocation0 [shape = 'u32[]', space=smem, size = 0x4, offset = 0x4, fixed_abs, tag = 'smem constant byte address 0x4 - core index']
  #allocation1 [shape = 'u32[144,128]{1,0:T(1,128)}', space=vmem, size = 0x12000, scoped, tag = 'internal scratch']
  #allocation2 [shape = 'f32[1,1]{1,0:T(1,128)S(1)}', space=vmem, size = 0x200, scoped, tag = 'scoped memory for critic_forward.9']
  %s0 = inlined_call_operand.vmem [shape: bf16[128,1024], index: 0, kind: input, shape index: {}]
  %s1 = inlined_call_operand.vmem [shape: bf16[2,1024,16], index: 1, kind: input, shape index: {}]
  %s2 = inlined_call_operand.vmem [shape: f32[128,16], index: 2, kind: input, shape index: {}]
  %s3 = inlined_call_operand.<no memory space> [shape: f32[1,1], index: 3, kind: input, shape index: {}]
  %s4 = inlined_call_operand.vmem [shape: f32[2,1,1], index: 4, kind: output, shape index: {}]
  %s5 = sld [smem:[#allocation0]]
  $region49: #{critic_forward.9} parent=0
    _
  %s7 = ssub.s32 1, %s5
  %s8 = scalar_select 0, %s7, %s5
  %v9 = vstv %s3
  %10 = vst [vmem:[#allocation2] sm:$0x1] %v9
  loop: start=0, step=1, limit=4
  $region2: #{critic_forward.9} parent=0 // loop_pre_header
    _
  $region3: #{critic_forward.9} parent=0 // loop_header
    %s12 = sphi 0, %s16
    %p13 = scmp.ge.s32.totalorder %s12, 4
    %s20 = sphi 0, %s20
    %s22 = sphi 0, %s20
    %s23 = sphi 0, %s22
    %s37 = sphi 0, %s23
    %s43 = sphi 0, %s45
    %s46 = sphi 0, %s43
    %s47 = sphi 0, %s46
    %s63 = sphi 0, %s47
    %s67 = sphi 0, %s67
    %s69 = sphi 0, %s67
    %s70 = sphi 0, %s69
    %s84 = sphi 0, %s70
    %s88 = sphi 0, %s88
    %s90 = sphi 0, %s88
    %s91 = sphi 0, %s90
    %s105 = sphi 0, %s91
    %s111 = sphi 0, %s113
    %s114 = sphi 0, %s111
    %s115 = sphi 0, %s114
    %s131 = sphi 0, %s115
  $region4: #{critic_forward.9} parent=0 // loop_header_branch
    %15 = sbr.rel (%p13) target = $region8
  $region5: #{critic_forward.9} parent=0 // loop_body
    %s17 = ssub.s32 %s12, 1
    %s18 = ssub.s32 %s12, 2
    %s19 = sadd.s32 %s12, 1
    %s21 = sadd.s32 %s20, 1
    %p24 = scmp.eq.s32.totalorder %s12, 1
    %p25 = scmp.ne.s32.totalorder %s20, %s22
    %p26 = scmp.eq.s32.totalorder %s12, 0
    %p27 = por %p25, %p26
    %p28 = scmp.ne.s32.totalorder %s20, %s22
    %p29 = scmp.eq.s32.totalorder %s17, 1
    %p30 = por %p28, %p29
    %p31 = scmp.ne.s32.totalorder %s22, %s23
    %p32 = scmp.eq.s32.totalorder %s17, 0
    %p33 = por %p31, %p32
    %p34 = scmp.ne.s32.totalorder %s22, %s23
    %p35 = scmp.eq.s32.totalorder %s18, 1
    %p36 = por %p34, %p35
    %p38 = scmp.ne.s32.totalorder %s23, %s37
    %p39 = scmp.eq.s32.totalorder %s18, 0
    %p40 = por %p38, %p39
    %s41 = ssub.s32 %s12, %s19
    %p42 = scmp.eq.s32.totalorder %s41, 0
    %s44 = sadd.s32 %s43, 1
    %s45 = scalar_select %p42, %s43, %s44
    %p48 = pneg %p42
    %p49 = scmp.eq.s32.totalorder %s12, 1
    %p50 = por %p48, %p49
    %p51 = scmp.ne.s32.totalorder %s43, %s46
    %p52 = scmp.eq.s32.totalorder %s12, 0
    %p53 = por %p51, %p52
    %p54 = scmp.ne.s32.totalorder %s43, %s46
    %p55 = scmp.eq.s32.totalorder %s17, 1
    %p56 = por %p54, %p55
    %p57 = scmp.ne.s32.totalorder %s46, %s47
    %p58 = scmp.eq.s32.totalorder %s17, 0
    %p59 = por %p57, %p58
    %p60 = scmp.ne.s32.totalorder %s46, %s47
    %p61 = scmp.eq.s32.totalorder %s18, 1
    %p62 = por %p60, %p61
    %p64 = scmp.ne.s32.totalorder %s47, %s63
    %p65 = scmp.eq.s32.totalorder %s18, 0
    %p66 = por %p64, %p65
    %s68 = sadd.s32 %s67, 1
    %p71 = scmp.eq.s32.totalorder %s12, 1
    %p72 = scmp.ne.s32.totalorder %s67, %s69
    %p73 = scmp.eq.s32.totalorder %s12, 0
    %p74 = por %p72, %p73
    %p75 = scmp.ne.s32.totalorder %s67, %s69
    %p76 = scmp.eq.s32.totalorder %s17, 1
    %p77 = por %p75, %p76
    %p78 = scmp.ne.s32.totalorder %s69, %s70
    %p79 = scmp.eq.s32.totalorder %s17, 0
    %p80 = por %p78, %p79
    %p81 = scmp.ne.s32.totalorder %s69, %s70
    %p82 = scmp.eq.s32.totalorder %s18, 1
    %p83 = por %p81, %p82
    %p85 = scmp.ne.s32.totalorder %s70, %s84
    %p86 = scmp.eq.s32.totalorder %s18, 0
    %p87 = por %p85, %p86
    %s89 = sadd.s32 %s88, 1
    %p92 = scmp.eq.s32.totalorder %s12, 1
    %p93 = scmp.ne.s32.totalorder %s88, %s90
    %p94 = scmp.eq.s32.totalorder %s12, 0
    %p95 = por %p93, %p94
    %p96 = scmp.ne.s32.totalorder %s88, %s90
    %p97 = scmp.eq.s32.totalorder %s17, 1
    %p98 = por %p96, %p97
    %p99 = scmp.ne.s32.totalorder %s90, %s91
    %p100 = scmp.eq.s32.totalorder %s17, 0
    %p101 = por %p99, %p100
    %p102 = scmp.ne.s32.totalorder %s90, %s91
    %p103 = scmp.eq.s32.totalorder %s18, 1
    %p104 = por %p102, %p103
    %p106 = scmp.ne.s32.totalorder %s91, %s105
    %p107 = scmp.eq.s32.totalorder %s18, 0
    %p108 = por %p106, %p107
    %s109 = ssub.s32 %s12, %s19
    %p110 = scmp.eq.s32.totalorder %s109, 0
    %s112 = sadd.s32 %s111, 1
    %s113 = scalar_select %p110, %s111, %s112
    %p116 = pneg %p110
    %p117 = scmp.eq.s32.totalorder %s12, 1
    %p118 = por %p116, %p117
    %p119 = scmp.ne.s32.totalorder %s111, %s114
    %p120 = scmp.eq.s32.totalorder %s12, 0
    %p121 = por %p119, %p120
    %p122 = scmp.ne.s32.totalorder %s111, %s114
    %p123 = scmp.eq.s32.totalorder %s17, 1
    %p124 = por %p122, %p123
    %p125 = scmp.ne.s32.totalorder %s114, %s115
    %p126 = scmp.eq.s32.totalorder %s17, 0
    %p127 = por %p125, %p126
    %p128 = scmp.ne.s32.totalorder %s114, %s115
    %p129 = scmp.eq.s32.totalorder %s18, 1
    %p130 = por %p128, %p129
    %p132 = scmp.ne.s32.totalorder %s115, %s131
    %p133 = scmp.eq.s32.totalorder %s18, 0
    %p134 = por %p132, %p133
    %p135 = scmp.le.s32.totalorder 1, %s12
    %p136 = scmp.lt.s32.totalorder %s12, 3
    %p137 = pnand %p135, %p136
    %p138 = pneg %p137
    // Predicated region
    $region9: #{critic_forward.9} parent=5 // pred_check
      _
    $region10: #{critic_forward.9} parent=5 // pred_check_branch
      %140 = sbr.rel (%p137) target = $region12
    $region11: #{critic_forward.9} parent=5 // pred_region
      %s141 = ssub.s32 %s12, 1
      // Predicated region
      $region13: #{critic_forward.9} parent=11 // pred_check
        %p142 = pneg %p33
      $region14: #{critic_forward.9} parent=11 // pred_check_branch
        %144 = sbr.rel (%p142) target = $region16
      $region15: #{critic_forward.9} parent=11 // pred_region
        _
      $region16: #{critic_forward.9} parent=11 // pred_fallthru
        _
      // Predicated region
      $region17: #{critic_forward.9} parent=11 // pred_check
        %p145 = pneg %p80
      $region18: #{critic_forward.9} parent=11 // pred_check_branch
        %147 = sbr.rel (%p145) target = $region20
      $region19: #{critic_forward.9} parent=11 // pred_region
        _
      $region20: #{critic_forward.9} parent=11 // pred_fallthru
        _
      // Predicated region
      $region21: #{critic_forward.9} parent=11 // pred_check
        %p148 = pneg %p101
      $region22: #{critic_forward.9} parent=11 // pred_check_branch
        %150 = sbr.rel (%p148) target = $region24
      $region23: #{critic_forward.9} parent=11 // pred_region
        _
      $region24: #{critic_forward.9} parent=11 // pred_fallthru
        _
    $region12: #{critic_forward.9} parent=5 // pred_fallthru
      _
    %p151 = scmp.lt.s32.totalorder %s12, 2
    // Predicated region
    $region25: #{critic_forward.9} parent=5 // pred_check
      %p152 = pneg %p151
    $region26: #{critic_forward.9} parent=5 // pred_check_branch
      %154 = sbr.rel (%p152) target = $region28
    $region27: #{critic_forward.9} parent=5 // pred_region
      // Predicated region
      $region29: #{critic_forward.9} parent=27 // pred_check
        %p155 = pneg %p53
      $region30: #{critic_forward.9} parent=27 // pred_check_branch
        %157 = sbr.rel (%p155) target = $region32
      $region31: #{critic_forward.9} parent=27 // pred_region
        %p158 = scmp.lt.s32.totalorder %s12, 1
        %s159 = scalar_select %p158, %s12, 1
        %s160 = smul.addr %s159, 128
        %s161 = smul.addr %s160, 4
        %s162 = scalar_lea.vmem %s1, %s161
      $region32: #{critic_forward.9} parent=27 // pred_fallthru
        _
    $region28: #{critic_forward.9} parent=5 // pred_fallthru
      _
    %p163 = scmp.le.s32.totalorder 1, %s12
    %p164 = scmp.lt.s32.totalorder %s12, 3
    %p165 = pnand %p163, %p164
    %p166 = pneg %p165
    // Predicated region
    $region33: #{critic_forward.9} parent=5 // pred_check
      _
    $region34: #{critic_forward.9} parent=5 // pred_check_branch
      %168 = sbr.rel (%p165) target = $region36
    $region35: #{critic_forward.9} parent=5 // pred_region
      %s169 = ssub.s32 %s12, 1
      %p170 = pneg %p33
      %p171 = pneg %p30
      %p172 = scmp.lt.s32.totalorder %s17, 1
      %s173 = scalar_select %p172, %s17, 1
      %s174 = smul.addr %s173, 128
      %s175 = smul.addr %s174, 4
      %s176 = scalar_lea.vmem %s1, %s175
      %p177 = pneg %p59
      %p178 = pneg %p56
      %p179 = pneg %p80
      %p180 = pneg %p77
      %p181 = pneg %p101
      %p182 = pneg %p98
      %p183 = pneg %p127
      %p184 = pneg %p124
      %p185 = scmp.lt.s32.totalorder %s17, 1
      %s186 = scalar_select %p185, %s17, 1
      %s187 = scalar_lea.vmem %s4, %s186
      %p188 = scmp.lt.s32.totalorder %s17, 1
      %s189 = scalar_select %p188, %s17, 1
      %s190 = smul.addr %s189, 128
      %s191 = smul.addr %s190, 4
      %s192 = scalar_lea.vmem %s1, %s191
      %p193 = scmp.lt.s32.totalorder %s17, 1
      %s194 = scalar_select %p193, %s17, 1
      %s195 = scalar_lea.vmem %s4, %s194
      %v197 = vld [vmem:[%s0] sm:$0xff]
      %v198 = vld [vmem:[%s0 + $0x8] sm:$0xff]
      %v199 = vld [vmem:[%s0 + $0x10] sm:$0xff]
      %v200 = vld [vmem:[%s0 + $0x18] sm:$0xff]
      %v201 = vld [vmem:[%s0 + $0x20] sm:$0xff]
      %v202 = vld [vmem:[%s0 + $0x28] sm:$0xff]
      %v203 = vld [vmem:[%s0 + $0x30] sm:$0xff]
      %v204 = vld [vmem:[%s0 + $0x38] sm:$0xff]
      %v205 = vld [vmem:[%s0 + $0x40] sm:$0xff]
      %v206 = vld [vmem:[%s0 + $0x48] sm:$0xff]
      %v207 = vld [vmem:[%s0 + $0x50] sm:$0xff]
      %v208 = vld [vmem:[%s0 + $0x58] sm:$0xff]
      %v209 = vld [vmem:[%s0 + $0x60] sm:$0xff]
      %v210 = vld [vmem:[%s0 + $0x68] sm:$0xff]
      %v211 = vld [vmem:[%s0 + $0x70] sm:$0xff]
      %v212 = vld [vmem:[%s0 + $0x78] sm:$0xff]
      %v213 = vld [vmem:[%s0 + $0x80] sm:$0xff]
      %v214 = vld [vmem:[%s0 + $0x88] sm:$0xff]
      %v215 = vld [vmem:[%s0 + $0x90] sm:$0xff]
      %v216 = vld [vmem:[%s0 + $0x98] sm:$0xff]
      %v217 = vld [vmem:[%s0 + $0xa0] sm:$0xff]
      %v218 = vld [vmem:[%s0 + $0xa8] sm:$0xff]
      %v219 = vld [vmem:[%s0 + $0xb0] sm:$0xff]
      %v220 = vld [vmem:[%s0 + $0xb8] sm:$0xff]
      %v221 = vld [vmem:[%s0 + $0xc0] sm:$0xff]
      %v222 = vld [vmem:[%s0 + $0xc8] sm:$0xff]
      %v223 = vld [vmem:[%s0 + $0xd0] sm:$0xff]
      %v224 = vld [vmem:[%s0 + $0xd8] sm:$0xff]
      %v225 = vld [vmem:[%s0 + $0xe0] sm:$0xff]
      %v226 = vld [vmem:[%s0 + $0xe8] sm:$0xff]
      %v227 = vld [vmem:[%s0 + $0xf0] sm:$0xff]
      %v228 = vld [vmem:[%s0 + $0xf8] sm:$0xff]
      %v229 = vld [vmem:[%s0 + $0x100] sm:$0xff]
      %v230 = vld [vmem:[%s0 + $0x108] sm:$0xff]
      %v231 = vld [vmem:[%s0 + $0x110] sm:$0xff]
      %v232 = vld [vmem:[%s0 + $0x118] sm:$0xff]
      %v233 = vld [vmem:[%s0 + $0x120] sm:$0xff]
      %v234 = vld [vmem:[%s0 + $0x128] sm:$0xff]
      %v235 = vld [vmem:[%s0 + $0x130] sm:$0xff]
      %v236 = vld [vmem:[%s0 + $0x138] sm:$0xff]
      %v237 = vld [vmem:[%s0 + $0x140] sm:$0xff]
      %v238 = vld [vmem:[%s0 + $0x148] sm:$0xff]
      %v239 = vld [vmem:[%s0 + $0x150] sm:$0xff]
      %v240 = vld [vmem:[%s0 + $0x158] sm:$0xff]
      %v241 = vld [vmem:[%s0 + $0x160] sm:$0xff]
      %v242 = vld [vmem:[%s0 + $0x168] sm:$0xff]
      %v243 = vld [vmem:[%s0 + $0x170] sm:$0xff]
      %v244 = vld [vmem:[%s0 + $0x178] sm:$0xff]
      %v245 = vld [vmem:[%s0 + $0x180] sm:$0xff]
      %v246 = vld [vmem:[%s0 + $0x188] sm:$0xff]
      %v247 = vld [vmem:[%s0 + $0x190] sm:$0xff]
      %v248 = vld [vmem:[%s0 + $0x198] sm:$0xff]
      %v249 = vld [vmem:[%s0 + $0x1a0] sm:$0xff]
      %v250 = vld [vmem:[%s0 + $0x1a8] sm:$0xff]
      %v251 = vld [vmem:[%s0 + $0x1b0] sm:$0xff]
      %v252 = vld [vmem:[%s0 + $0x1b8] sm:$0xff]
      %v253 = vld [vmem:[%s0 + $0x1c0] sm:$0xff]
      %v254 = vld [vmem:[%s0 + $0x1c8] sm:$0xff]
      %v255 = vld [vmem:[%s0 + $0x1d0] sm:$0xff]
      %v256 = vld [vmem:[%s0 + $0x1d8] sm:$0xff]
      %v257 = vld [vmem:[%s0 + $0x1e0] sm:$0xff]
      %v258 = vld [vmem:[%s0 + $0x1e8] sm:$0xff]
      %v259 = vld [vmem:[%s0 + $0x1f0] sm:$0xff]
      %v260 = vld [vmem:[%s0 + $0x1f8] sm:$0xff]
      %v261 = vld [vmem:[%s192] sm:$0xf]
      %v262 = vld [vmem:[%s192 + $0x4] sm:$0xf]
      %v263 = vld [vmem:[%s192 + $0x8] sm:$0xf]
      %v264 = vld [vmem:[%s192 + $0xc] sm:$0xf]
      %v265 = vld [vmem:[%s192 + $0x10] sm:$0xf]
      %v266 = vld [vmem:[%s192 + $0x14] sm:$0xf]
      %v267 = vld [vmem:[%s192 + $0x18] sm:$0xf]
      %v268 = vld [vmem:[%s192 + $0x1c] sm:$0xf]
      %v269 = vld [vmem:[%s192 + $0x20] sm:$0xf]
      %v270 = vld [vmem:[%s192 + $0x24] sm:$0xf]
      %v271 = vld [vmem:[%s192 + $0x28] sm:$0xf]
      %v272 = vld [vmem:[%s192 + $0x2c] sm:$0xf]
      %v273 = vld [vmem:[%s192 + $0x30] sm:$0xf]
      %v274 = vld [vmem:[%s192 + $0x34] sm:$0xf]
      %v275 = vld [vmem:[%s192 + $0x38] sm:$0xf]
      %v276 = vld [vmem:[%s192 + $0x3c] sm:$0xf]
      %v277 = vld [vmem:[%s192 + $0x40] sm:$0xf]
      %v278 = vld [vmem:[%s192 + $0x44] sm:$0xf]
      %v279 = vld [vmem:[%s192 + $0x48] sm:$0xf]
      %v280 = vld [vmem:[%s192 + $0x4c] sm:$0xf]
      %v281 = vld [vmem:[%s192 + $0x50] sm:$0xf]
      %v282 = vld [vmem:[%s192 + $0x54] sm:$0xf]
      %v283 = vld [vmem:[%s192 + $0x58] sm:$0xf]
      %v284 = vld [vmem:[%s192 + $0x5c] sm:$0xf]
      %v285 = vld [vmem:[%s192 + $0x60] sm:$0xf]
      %v286 = vld [vmem:[%s192 + $0x64] sm:$0xf]
      %v287 = vld [vmem:[%s192 + $0x68] sm:$0xf]
      %v288 = vld [vmem:[%s192 + $0x6c] sm:$0xf]
      %v289 = vld [vmem:[%s192 + $0x70] sm:$0xf]
      %v290 = vld [vmem:[%s192 + $0x74] sm:$0xf]
      %v291 = vld [vmem:[%s192 + $0x78] sm:$0xf]
      %v292 = vld [vmem:[%s192 + $0x7c] sm:$0xf]
      %v293 = vld [vmem:[%s192 + $0x80] sm:$0xf]
      %v294 = vld [vmem:[%s192 + $0x84] sm:$0xf]
      %v295 = vld [vmem:[%s192 + $0x88] sm:$0xf]
      %v296 = vld [vmem:[%s192 + $0x8c] sm:$0xf]
      %v297 = vld [vmem:[%s192 + $0x90] sm:$0xf]
      %v298 = vld [vmem:[%s192 + $0x94] sm:$0xf]
      %v299 = vld [vmem:[%s192 + $0x98] sm:$0xf]
      %v300 = vld [vmem:[%s192 + $0x9c] sm:$0xf]
      %v301 = vld [vmem:[%s192 + $0xa0] sm:$0xf]
      %v302 = vld [vmem:[%s192 + $0xa4] sm:$0xf]
      %v303 = vld [vmem:[%s192 + $0xa8] sm:$0xf]
      %v304 = vld [vmem:[%s192 + $0xac] sm:$0xf]
      %v305 = vld [vmem:[%s192 + $0xb0] sm:$0xf]
      %v306 = vld [vmem:[%s192 + $0xb4] sm:$0xf]
      %v307 = vld [vmem:[%s192 + $0xb8] sm:$0xf]
      %v308 = vld [vmem:[%s192 + $0xbc] sm:$0xf]
      %v309 = vld [vmem:[%s192 + $0xc0] sm:$0xf]
      %v310 = vld [vmem:[%s192 + $0xc4] sm:$0xf]
      %v311 = vld [vmem:[%s192 + $0xc8] sm:$0xf]
      %v312 = vld [vmem:[%s192 + $0xcc] sm:$0xf]
      %v313 = vld [vmem:[%s192 + $0xd0] sm:$0xf]
      %v314 = vld [vmem:[%s192 + $0xd4] sm:$0xf]
      %v315 = vld [vmem:[%s192 + $0xd8] sm:$0xf]
      %v316 = vld [vmem:[%s192 + $0xdc] sm:$0xf]
      %v317 = vld [vmem:[%s192 + $0xe0] sm:$0xf]
      %v318 = vld [vmem:[%s192 + $0xe4] sm:$0xf]
      %v319 = vld [vmem:[%s192 + $0xe8] sm:$0xf]
      %v320 = vld [vmem:[%s192 + $0xec] sm:$0xf]
      %v321 = vld [vmem:[%s192 + $0xf0] sm:$0xf]
      %v322 = vld [vmem:[%s192 + $0xf4] sm:$0xf]
      %v323 = vld [vmem:[%s192 + $0xf8] sm:$0xf]
      %v324 = vld [vmem:[%s192 + $0xfc] sm:$0xf]
      %v325 = vld [vmem:[%s192 + $0x100] sm:$0xf]
      %v326 = vld [vmem:[%s192 + $0x104] sm:$0xf]
      %v327 = vld [vmem:[%s192 + $0x108] sm:$0xf]
      %v328 = vld [vmem:[%s192 + $0x10c] sm:$0xf]
      %v329 = vld [vmem:[%s192 + $0x110] sm:$0xf]
      %v330 = vld [vmem:[%s192 + $0x114] sm:$0xf]
      %v331 = vld [vmem:[%s192 + $0x118] sm:$0xf]
      %v332 = vld [vmem:[%s192 + $0x11c] sm:$0xf]
      %v333 = vld [vmem:[%s192 + $0x120] sm:$0xf]
      %v334 = vld [vmem:[%s192 + $0x124] sm:$0xf]
      %v335 = vld [vmem:[%s192 + $0x128] sm:$0xf]
      %v336 = vld [vmem:[%s192 + $0x12c] sm:$0xf]
      %v337 = vld [vmem:[%s192 + $0x130] sm:$0xf]
      %v338 = vld [vmem:[%s192 + $0x134] sm:$0xf]
      %v339 = vld [vmem:[%s192 + $0x138] sm:$0xf]
      %v340 = vld [vmem:[%s192 + $0x13c] sm:$0xf]
      %v341 = vld [vmem:[%s192 + $0x140] sm:$0xf]
      %v342 = vld [vmem:[%s192 + $0x144] sm:$0xf]
      %v343 = vld [vmem:[%s192 + $0x148] sm:$0xf]
      %v344 = vld [vmem:[%s192 + $0x14c] sm:$0xf]
      %v345 = vld [vmem:[%s192 + $0x150] sm:$0xf]
      %v346 = vld [vmem:[%s192 + $0x154] sm:$0xf]
      %v347 = vld [vmem:[%s192 + $0x158] sm:$0xf]
      %v348 = vld [vmem:[%s192 + $0x15c] sm:$0xf]
      %v349 = vld [vmem:[%s192 + $0x160] sm:$0xf]
      %v350 = vld [vmem:[%s192 + $0x164] sm:$0xf]
      %v351 = vld [vmem:[%s192 + $0x168] sm:$0xf]
      %v352 = vld [vmem:[%s192 + $0x16c] sm:$0xf]
      %v353 = vld [vmem:[%s192 + $0x170] sm:$0xf]
      %v354 = vld [vmem:[%s192 + $0x174] sm:$0xf]
      %v355 = vld [vmem:[%s192 + $0x178] sm:$0xf]
      %v356 = vld [vmem:[%s192 + $0x17c] sm:$0xf]
      %v357 = vld [vmem:[%s192 + $0x180] sm:$0xf]
      %v358 = vld [vmem:[%s192 + $0x184] sm:$0xf]
      %v359 = vld [vmem:[%s192 + $0x188] sm:$0xf]
      %v360 = vld [vmem:[%s192 + $0x18c] sm:$0xf]
      %v361 = vld [vmem:[%s192 + $0x190] sm:$0xf]
      %v362 = vld [vmem:[%s192 + $0x194] sm:$0xf]
      %v363 = vld [vmem:[%s192 + $0x198] sm:$0xf]
      %v364 = vld [vmem:[%s192 + $0x19c] sm:$0xf]
      %v365 = vld [vmem:[%s192 + $0x1a0] sm:$0xf]
      %v366 = vld [vmem:[%s192 + $0x1a4] sm:$0xf]
      %v367 = vld [vmem:[%s192 + $0x1a8] sm:$0xf]
      %v368 = vld [vmem:[%s192 + $0x1ac] sm:$0xf]
      %v369 = vld [vmem:[%s192 + $0x1b0] sm:$0xf]
      %v370 = vld [vmem:[%s192 + $0x1b4] sm:$0xf]
      %v371 = vld [vmem:[%s192 + $0x1b8] sm:$0xf]
      %v372 = vld [vmem:[%s192 + $0x1bc] sm:$0xf]
      %v373 = vld [vmem:[%s192 + $0x1c0] sm:$0xf]
      %v374 = vld [vmem:[%s192 + $0x1c4] sm:$0xf]
      %v375 = vld [vmem:[%s192 + $0x1c8] sm:$0xf]
      %v376 = vld [vmem:[%s192 + $0x1cc] sm:$0xf]
      %v377 = vld [vmem:[%s192 + $0x1d0] sm:$0xf]
      %v378 = vld [vmem:[%s192 + $0x1d4] sm:$0xf]
      %v379 = vld [vmem:[%s192 + $0x1d8] sm:$0xf]
      %v380 = vld [vmem:[%s192 + $0x1dc] sm:$0xf]
      %v381 = vld [vmem:[%s192 + $0x1e0] sm:$0xf]
      %v382 = vld [vmem:[%s192 + $0x1e4] sm:$0xf]
      %v383 = vld [vmem:[%s192 + $0x1e8] sm:$0xf]
      %v384 = vld [vmem:[%s192 + $0x1ec] sm:$0xf]
      %v385 = vld [vmem:[%s192 + $0x1f0] sm:$0xf]
      %v386 = vld [vmem:[%s192 + $0x1f4] sm:$0xf]
      %v387 = vld [vmem:[%s192 + $0x1f8] sm:$0xf]
      %v388 = vld [vmem:[%s192 + $0x1fc] sm:$0xf]
      %v453 = vunpack.c.l.b16 %v197
      %v454 = vunpack.c.h.b16 %v197
      %v455 = vunpack.c.l.b16 %v198
      %v456 = vunpack.c.h.b16 %v198
      %v457 = vunpack.c.l.b16 %v199
      %v458 = vunpack.c.h.b16 %v199
      %v459 = vunpack.c.l.b16 %v200
      %v460 = vunpack.c.h.b16 %v200
      %v461 = vunpack.c.l.b16 %v201
      %v462 = vunpack.c.h.b16 %v201
      %v463 = vunpack.c.l.b16 %v202
      %v464 = vunpack.c.h.b16 %v202
      %v465 = vunpack.c.l.b16 %v203
      %v466 = vunpack.c.h.b16 %v203
      %v467 = vunpack.c.l.b16 %v204
      %v468 = vunpack.c.h.b16 %v204
      %v469 = vunpack.c.l.b16 %v205
      %v470 = vunpack.c.h.b16 %v205
      %v471 = vunpack.c.l.b16 %v206
      %v472 = vunpack.c.h.b16 %v206
      %v473 = vunpack.c.l.b16 %v207
      %v474 = vunpack.c.h.b16 %v207
      %v475 = vunpack.c.l.b16 %v208
      %v476 = vunpack.c.h.b16 %v208
      %v477 = vunpack.c.l.b16 %v209
      %v478 = vunpack.c.h.b16 %v209
      %v479 = vunpack.c.l.b16 %v210
      %v480 = vunpack.c.h.b16 %v210
      %v481 = vunpack.c.l.b16 %v211
      %v482 = vunpack.c.h.b16 %v211
      %v483 = vunpack.c.l.b16 %v212
      %v484 = vunpack.c.h.b16 %v212
      %v485 = vunpack.c.l.b16 %v213
      %v486 = vunpack.c.h.b16 %v213
      %v487 = vunpack.c.l.b16 %v214
      %v488 = vunpack.c.h.b16 %v214
      %v489 = vunpack.c.l.b16 %v215
      %v490 = vunpack.c.h.b16 %v215
      %v491 = vunpack.c.l.b16 %v216
      %v492 = vunpack.c.h.b16 %v216
      %v493 = vunpack.c.l.b16 %v217
      %v494 = vunpack.c.h.b16 %v217
      %v495 = vunpack.c.l.b16 %v218
      %v496 = vunpack.c.h.b16 %v218
      %v497 = vunpack.c.l.b16 %v219
      %v498 = vunpack.c.h.b16 %v219
      %v499 = vunpack.c.l.b16 %v220
      %v500 = vunpack.c.h.b16 %v220
      %v501 = vunpack.c.l.b16 %v221
      %v502 = vunpack.c.h.b16 %v221
      %v503 = vunpack.c.l.b16 %v222
      %v504 = vunpack.c.h.b16 %v222
      %v505 = vunpack.c.l.b16 %v223
      %v506 = vunpack.c.h.b16 %v223
      %v507 = vunpack.c.l.b16 %v224
      %v508 = vunpack.c.h.b16 %v224
      %v509 = vunpack.c.l.b16 %v225
      %v510 = vunpack.c.h.b16 %v225
      %v511 = vunpack.c.l.b16 %v226
      %v512 = vunpack.c.h.b16 %v226
      %v513 = vunpack.c.l.b16 %v227
      %v514 = vunpack.c.h.b16 %v227
      %v515 = vunpack.c.l.b16 %v228
      %v516 = vunpack.c.h.b16 %v228
      %v517 = vunpack.c.l.b16 %v229
      %v518 = vunpack.c.h.b16 %v229
      %v519 = vunpack.c.l.b16 %v230
      %v520 = vunpack.c.h.b16 %v230
      %v521 = vunpack.c.l.b16 %v231
      %v522 = vunpack.c.h.b16 %v231
      %v523 = vunpack.c.l.b16 %v232
      %v524 = vunpack.c.h.b16 %v232
      %v525 = vunpack.c.l.b16 %v233
      %v526 = vunpack.c.h.b16 %v233
      %v527 = vunpack.c.l.b16 %v234
      %v528 = vunpack.c.h.b16 %v234
      %v529 = vunpack.c.l.b16 %v235
      %v530 = vunpack.c.h.b16 %v235
      %v531 = vunpack.c.l.b16 %v236
      %v532 = vunpack.c.h.b16 %v236
      %v533 = vunpack.c.l.b16 %v237
      %v534 = vunpack.c.h.b16 %v237
      %v535 = vunpack.c.l.b16 %v238
      %v536 = vunpack.c.h.b16 %v238
      %v537 = vunpack.c.l.b16 %v239
      %v538 = vunpack.c.h.b16 %v239
      %v539 = vunpack.c.l.b16 %v240
      %v540 = vunpack.c.h.b16 %v240
      %v541 = vunpack.c.l.b16 %v241
      %v542 = vunpack.c.h.b16 %v241
      %v543 = vunpack.c.l.b16 %v242
      %v544 = vunpack.c.h.b16 %v242
      %v545 = vunpack.c.l.b16 %v243
      %v546 = vunpack.c.h.b16 %v243
      %v547 = vunpack.c.l.b16 %v244
      %v548 = vunpack.c.h.b16 %v244
      %v549 = vunpack.c.l.b16 %v245
      %v550 = vunpack.c.h.b16 %v245
      %v551 = vunpack.c.l.b16 %v246
      %v552 = vunpack.c.h.b16 %v246
      %v553 = vunpack.c.l.b16 %v247
      %v554 = vunpack.c.h.b16 %v247
      %v555 = vunpack.c.l.b16 %v248
      %v556 = vunpack.c.h.b16 %v248
      %v557 = vunpack.c.l.b16 %v249
      %v558 = vunpack.c.h.b16 %v249
      %v559 = vunpack.c.l.b16 %v250
      %v560 = vunpack.c.h.b16 %v250
      %v561 = vunpack.c.l.b16 %v251
      %v562 = vunpack.c.h.b16 %v251
      %v563 = vunpack.c.l.b16 %v252
      %v564 = vunpack.c.h.b16 %v252
      %v565 = vunpack.c.l.b16 %v253
      %v566 = vunpack.c.h.b16 %v253
      %v567 = vunpack.c.l.b16 %v254
      %v568 = vunpack.c.h.b16 %v254
      %v569 = vunpack.c.l.b16 %v255
      %v570 = vunpack.c.h.b16 %v255
      %v571 = vunpack.c.l.b16 %v256
      %v572 = vunpack.c.h.b16 %v256
      %v573 = vunpack.c.l.b16 %v257
      %v574 = vunpack.c.h.b16 %v257
      %v575 = vunpack.c.l.b16 %v258
      %v576 = vunpack.c.h.b16 %v258
      %v577 = vunpack.c.l.b16 %v259
      %v578 = vunpack.c.h.b16 %v259
      %v579 = vunpack.c.l.b16 %v260
      %v580 = vunpack.c.h.b16 %v260
      %v581 = vpack.c.b16 %v461, %v453
      %v582 = vpack.c.b16 %v462, %v454
      %v583 = vpack.c.b16 %v463, %v455
      %v584 = vpack.c.b16 %v464, %v456
      %v585 = vpack.c.b16 %v465, %v457
      %v586 = vpack.c.b16 %v466, %v458
      %v587 = vpack.c.b16 %v467, %v459
      %v588 = vpack.c.b16 %v468, %v460
      %v589 = vpack.c.b16 %v477, %v469
      %v590 = vpack.c.b16 %v478, %v470
      %v591 = vpack.c.b16 %v479, %v471
      %v592 = vpack.c.b16 %v480, %v472
      %v593 = vpack.c.b16 %v481, %v473
      %v594 = vpack.c.b16 %v482, %v474
      %v595 = vpack.c.b16 %v483, %v475
      %v596 = vpack.c.b16 %v484, %v476
      %v597 = vpack.c.b16 %v493, %v485
      %v598 = vpack.c.b16 %v494, %v486
      %v599 = vpack.c.b16 %v495, %v487
      %v600 = vpack.c.b16 %v496, %v488
      %v601 = vpack.c.b16 %v497, %v489
      %v602 = vpack.c.b16 %v498, %v490
      %v603 = vpack.c.b16 %v499, %v491
      %v604 = vpack.c.b16 %v500, %v492
      %v605 = vpack.c.b16 %v509, %v501
      %v606 = vpack.c.b16 %v510, %v502
      %v607 = vpack.c.b16 %v511, %v503
      %v608 = vpack.c.b16 %v512, %v504
      %v609 = vpack.c.b16 %v513, %v505
      %v610 = vpack.c.b16 %v514, %v506
      %v611 = vpack.c.b16 %v515, %v507
      %v612 = vpack.c.b16 %v516, %v508
      %v613 = vpack.c.b16 %v525, %v517
      %v614 = vpack.c.b16 %v526, %v518
      %v615 = vpack.c.b16 %v527, %v519
      %v616 = vpack.c.b16 %v528, %v520
      %v617 = vpack.c.b16 %v529, %v521
      %v618 = vpack.c.b16 %v530, %v522
      %v619 = vpack.c.b16 %v531, %v523
      %v620 = vpack.c.b16 %v532, %v524
      %v621 = vpack.c.b16 %v541, %v533
      %v622 = vpack.c.b16 %v542, %v534
      %v623 = vpack.c.b16 %v543, %v535
      %v624 = vpack.c.b16 %v544, %v536
      %v625 = vpack.c.b16 %v545, %v537
      %v626 = vpack.c.b16 %v546, %v538
      %v627 = vpack.c.b16 %v547, %v539
      %v628 = vpack.c.b16 %v548, %v540
      %v629 = vpack.c.b16 %v557, %v549
      %v630 = vpack.c.b16 %v558, %v550
      %v631 = vpack.c.b16 %v559, %v551
      %v632 = vpack.c.b16 %v560, %v552
      %v633 = vpack.c.b16 %v561, %v553
      %v634 = vpack.c.b16 %v562, %v554
      %v635 = vpack.c.b16 %v563, %v555
      %v636 = vpack.c.b16 %v564, %v556
      %v637 = vpack.c.b16 %v573, %v565
      %v638 = vpack.c.b16 %v574, %v566
      %v639 = vpack.c.b16 %v575, %v567
      %v640 = vpack.c.b16 %v576, %v568
      %v641 = vpack.c.b16 %v577, %v569
      %v642 = vpack.c.b16 %v578, %v570
      %v643 = vpack.c.b16 %v579, %v571
      %v644 = vpack.c.b16 %v580, %v572
      %v837 = vunpack.c.l.b16 %v261
      %v838 = vunpack.c.l.b16 %v262
      %v839 = vunpack.c.l.b16 %v263
      %v840 = vunpack.c.l.b16 %v264
      %v841 = vunpack.c.l.b16 %v265
      %v842 = vunpack.c.l.b16 %v266
      %v843 = vunpack.c.l.b16 %v267
      %v844 = vunpack.c.l.b16 %v268
      %v845 = vunpack.c.l.b16 %v269
      %v846 = vunpack.c.l.b16 %v270
      %v847 = vunpack.c.l.b16 %v271
      %v848 = vunpack.c.l.b16 %v272
      %v849 = vunpack.c.l.b16 %v273
      %v850 = vunpack.c.l.b16 %v274
      %v851 = vunpack.c.l.b16 %v275
      %v852 = vunpack.c.l.b16 %v276
      %v853 = vunpack.c.l.b16 %v277
      %v854 = vunpack.c.l.b16 %v278
      %v855 = vunpack.c.l.b16 %v279
      %v856 = vunpack.c.l.b16 %v280
      %v857 = vunpack.c.l.b16 %v281
      %v858 = vunpack.c.l.b16 %v282
      %v859 = vunpack.c.l.b16 %v283
      %v860 = vunpack.c.l.b16 %v284
      %v861 = vunpack.c.l.b16 %v285
      %v862 = vunpack.c.l.b16 %v286
      %v863 = vunpack.c.l.b16 %v287
      %v864 = vunpack.c.l.b16 %v288
      %v865 = vunpack.c.l.b16 %v289
      %v866 = vunpack.c.l.b16 %v290
      %v867 = vunpack.c.l.b16 %v291
      %v868 = vunpack.c.l.b16 %v292
      %v869 = vunpack.c.l.b16 %v293
      %v870 = vunpack.c.l.b16 %v294
      %v871 = vunpack.c.l.b16 %v295
      %v872 = vunpack.c.l.b16 %v296
      %v873 = vunpack.c.l.b16 %v297
      %v874 = vunpack.c.l.b16 %v298
      %v875 = vunpack.c.l.b16 %v299
      %v876 = vunpack.c.l.b16 %v300
      %v877 = vunpack.c.l.b16 %v301
      %v878 = vunpack.c.l.b16 %v302
      %v879 = vunpack.c.l.b16 %v303
      %v880 = vunpack.c.l.b16 %v304
      %v881 = vunpack.c.l.b16 %v305
      %v882 = vunpack.c.l.b16 %v306
      %v883 = vunpack.c.l.b16 %v307
      %v884 = vunpack.c.l.b16 %v308
      %v885 = vunpack.c.l.b16 %v309
      %v886 = vunpack.c.l.b16 %v310
      %v887 = vunpack.c.l.b16 %v311
      %v888 = vunpack.c.l.b16 %v312
      %v889 = vunpack.c.l.b16 %v313
      %v890 = vunpack.c.l.b16 %v314
      %v891 = vunpack.c.l.b16 %v315
      %v892 = vunpack.c.l.b16 %v316
      %v893 = vunpack.c.l.b16 %v317
      %v894 = vunpack.c.l.b16 %v318
      %v895 = vunpack.c.l.b16 %v319
      %v896 = vunpack.c.l.b16 %v320
      %v897 = vunpack.c.l.b16 %v321
      %v898 = vunpack.c.l.b16 %v322
      %v899 = vunpack.c.l.b16 %v323
      %v900 = vunpack.c.l.b16 %v324
      %v901 = vunpack.c.l.b16 %v325
      %v902 = vunpack.c.l.b16 %v326
      %v903 = vunpack.c.l.b16 %v327
      %v904 = vunpack.c.l.b16 %v328
      %v905 = vunpack.c.l.b16 %v329
      %v906 = vunpack.c.l.b16 %v330
      %v907 = vunpack.c.l.b16 %v331
      %v908 = vunpack.c.l.b16 %v332
      %v909 = vunpack.c.l.b16 %v333
      %v910 = vunpack.c.l.b16 %v334
      %v911 = vunpack.c.l.b16 %v335
      %v912 = vunpack.c.l.b16 %v336
      %v913 = vunpack.c.l.b16 %v337
      %v914 = vunpack.c.l.b16 %v338
      %v915 = vunpack.c.l.b16 %v339
      %v916 = vunpack.c.l.b16 %v340
      %v917 = vunpack.c.l.b16 %v341
      %v918 = vunpack.c.l.b16 %v342
      %v919 = vunpack.c.l.b16 %v343
      %v920 = vunpack.c.l.b16 %v344
      %v921 = vunpack.c.l.b16 %v345
      %v922 = vunpack.c.l.b16 %v346
      %v923 = vunpack.c.l.b16 %v347
      %v924 = vunpack.c.l.b16 %v348
      %v925 = vunpack.c.l.b16 %v349
      %v926 = vunpack.c.l.b16 %v350
      %v927 = vunpack.c.l.b16 %v351
      %v928 = vunpack.c.l.b16 %v352
      %v929 = vunpack.c.l.b16 %v353
      %v930 = vunpack.c.l.b16 %v354
      %v931 = vunpack.c.l.b16 %v355
      %v932 = vunpack.c.l.b16 %v356
      %v933 = vunpack.c.l.b16 %v357
      %v934 = vunpack.c.l.b16 %v358
      %v935 = vunpack.c.l.b16 %v359
      %v936 = vunpack.c.l.b16 %v360
      %v937 = vunpack.c.l.b16 %v361
      %v938 = vunpack.c.l.b16 %v362
      %v939 = vunpack.c.l.b16 %v363
      %v940 = vunpack.c.l.b16 %v364
      %v941 = vunpack.c.l.b16 %v365
      %v942 = vunpack.c.l.b16 %v366
      %v943 = vunpack.c.l.b16 %v367
      %v944 = vunpack.c.l.b16 %v368
      %v945 = vunpack.c.l.b16 %v369
      %v946 = vunpack.c.l.b16 %v370
      %v947 = vunpack.c.l.b16 %v371
      %v948 = vunpack.c.l.b16 %v372
      %v949 = vunpack.c.l.b16 %v373
      %v950 = vunpack.c.l.b16 %v374
      %v951 = vunpack.c.l.b16 %v375
      %v952 = vunpack.c.l.b16 %v376
      %v953 = vunpack.c.l.b16 %v377
      %v954 = vunpack.c.l.b16 %v378
      %v955 = vunpack.c.l.b16 %v379
      %v956 = vunpack.c.l.b16 %v380
      %v957 = vunpack.c.l.b16 %v381
      %v958 = vunpack.c.l.b16 %v382
      %v959 = vunpack.c.l.b16 %v383
      %v960 = vunpack.c.l.b16 %v384
      %v961 = vunpack.c.l.b16 %v385
      %v962 = vunpack.c.l.b16 %v386
      %v963 = vunpack.c.l.b16 %v387
      %v964 = vunpack.c.l.b16 %v388
      %v965 = vpack.c.b16 %v838, %v837
      %v966 = vpack.c.b16 %v840, %v839
      %v967 = vpack.c.b16 %v842, %v841
      %v968 = vpack.c.b16 %v844, %v843
      %v969 = vpack.c.b16 %v846, %v845
      %v970 = vpack.c.b16 %v848, %v847
      %v971 = vpack.c.b16 %v850, %v849
      %v972 = vpack.c.b16 %v852, %v851
      %v973 = vpack.c.b16 %v854, %v853
      %v974 = vpack.c.b16 %v856, %v855
      %v975 = vpack.c.b16 %v858, %v857
      %v976 = vpack.c.b16 %v860, %v859
      %v977 = vpack.c.b16 %v862, %v861
      %v978 = vpack.c.b16 %v864, %v863
      %v979 = vpack.c.b16 %v866, %v865
      %v980 = vpack.c.b16 %v868, %v867
      %v981 = vpack.c.b16 %v870, %v869
      %v982 = vpack.c.b16 %v872, %v871
      %v983 = vpack.c.b16 %v874, %v873
      %v984 = vpack.c.b16 %v876, %v875
      %v985 = vpack.c.b16 %v878, %v877
      %v986 = vpack.c.b16 %v880, %v879
      %v987 = vpack.c.b16 %v882, %v881
      %v988 = vpack.c.b16 %v884, %v883
      %v989 = vpack.c.b16 %v886, %v885
      %v990 = vpack.c.b16 %v888, %v887
      %v991 = vpack.c.b16 %v890, %v889
      %v992 = vpack.c.b16 %v892, %v891
      %v993 = vpack.c.b16 %v894, %v893
      %v994 = vpack.c.b16 %v896, %v895
      %v995 = vpack.c.b16 %v898, %v897
      %v996 = vpack.c.b16 %v900, %v899
      %v997 = vpack.c.b16 %v902, %v901
      %v998 = vpack.c.b16 %v904, %v903
      %v999 = vpack.c.b16 %v906, %v905
      %v1000 = vpack.c.b16 %v908, %v907
      %v1001 = vpack.c.b16 %v910, %v909
      %v1002 = vpack.c.b16 %v912, %v911
      %v1003 = vpack.c.b16 %v914, %v913
      %v1004 = vpack.c.b16 %v916, %v915
      %v1005 = vpack.c.b16 %v918, %v917
      %v1006 = vpack.c.b16 %v920, %v919
      %v1007 = vpack.c.b16 %v922, %v921
      %v1008 = vpack.c.b16 %v924, %v923
      %v1009 = vpack.c.b16 %v926, %v925
      %v1010 = vpack.c.b16 %v928, %v927
      %v1011 = vpack.c.b16 %v930, %v929
      %v1012 = vpack.c.b16 %v932, %v931
      %v1013 = vpack.c.b16 %v934, %v933
      %v1014 = vpack.c.b16 %v936, %v935
      %v1015 = vpack.c.b16 %v938, %v937
      %v1016 = vpack.c.b16 %v940, %v939
      %v1017 = vpack.c.b16 %v942, %v941
      %v1018 = vpack.c.b16 %v944, %v943
      %v1019 = vpack.c.b16 %v946, %v945
      %v1020 = vpack.c.b16 %v948, %v947
      %v1021 = vpack.c.b16 %v950, %v949
      %v1022 = vpack.c.b16 %v952, %v951
      %v1023 = vpack.c.b16 %v954, %v953
      %v1024 = vpack.c.b16 %v956, %v955
      %v1025 = vpack.c.b16 %v958, %v957
      %v1026 = vpack.c.b16 %v960, %v959
      %v1027 = vpack.c.b16 %v962, %v961
      %v1028 = vpack.c.b16 %v964, %v963
      %1093 = vmatprep.subr.bf16.mxu0 0
      %1094 = vmatpush1.bf16.msra.mxu0 %v965
      %1095 = vmatprep.subr.bf16.mxu0 0
      %1096 = vmatpush1.bf16.msra.mxu0 %v966
      %1097 = vmatprep.subr.bf16.mxu0 0
      %1098 = vmatpush1.bf16.msra.mxu0 %v967
      %1099 = vmatprep.subr.bf16.mxu0 0
      %1100 = vmatpush1.bf16.msra.mxu0 %v968
      %1101 = vmatprep.subr.bf16.mxu0 0
      %1102 = vmatpush1.bf16.msra.mxu0 %v969
      %1103 = vmatprep.subr.bf16.mxu0 0
      %1104 = vmatpush1.bf16.msra.mxu0 %v970
      %1105 = vmatprep.subr.bf16.mxu0 0
      %1106 = vmatpush1.bf16.msra.mxu0 %v971
      %1107 = vmatprep.subr.bf16.mxu0 0
      %1108 = vmatpush1.bf16.msra.mxu0 %v972
      %1109 = vmatprep.subr.bf16.mxu0 0
      %1110 = vmatpush1.bf16.msra.mxu0 %v973
      %1111 = vmatprep.subr.bf16.mxu0 0
      %1112 = vmatpush1.bf16.msra.mxu0 %v974
      %1113 = vmatprep.subr.bf16.mxu0 0
      %1114 = vmatpush1.bf16.msra.mxu0 %v975
      %1115 = vmatprep.subr.bf16.mxu0 0
      %1116 = vmatpush1.bf16.msra.mxu0 %v976
      %1117 = vmatprep.subr.bf16.mxu0 0
      %1118 = vmatpush1.bf16.msra.mxu0 %v977
      %1119 = vmatprep.subr.bf16.mxu0 0
      %1120 = vmatpush1.bf16.msra.mxu0 %v978
      %1121 = vmatprep.subr.bf16.mxu0 0
      %1122 = vmatpush1.bf16.msra.mxu0 %v979
      %1123 = vmatprep.subr.bf16.mxu0 0
      %1124 = vmatpush1.bf16.msra.mxu0 %v980
      %1125 = vmatprep.mubr.bf16.mxu0 %v582
      %1126 = vmatmul.mubr.bf16.gmra.mrb[0].mxu0 %v581
      %v1127 = vpop.f32.mrb[0].mxu0
      %v1128 = vadd.f32 0.0, %v1127
      %v1129 = vpop.f32.mrb[0].mxu0
      %v1130 = vpop.f32.mrb[0].mxu0
      %v1131 = vadd.f32 0.0, %v1130
      %v1132 = vpop.f32.mrb[0].mxu0
      %1133 = vmatprep.mubr.bf16.mxu0 %v590
      %1134 = vmatmul.mubr.bf16.gmra.mrb[0].mxu0 %v589
      %v1135 = vpop.f32.mrb[0].mxu0
      %v1136 = vadd.f32 0.0, %v1135
      %v1137 = vpop.f32.mrb[0].mxu0
      %v1138 = vpop.f32.mrb[0].mxu0
      %v1139 = vadd.f32 0.0, %v1138
      %v1140 = vpop.f32.mrb[0].mxu0
      %1141 = vmatprep.mubr.bf16.mxu0 %v598
      %1142 = vmatmul.mubr.bf16.gmra.mrb[0].mxu0 %v597
      %v1143 = vpop.f32.mrb[0].mxu0
      %v1144 = vadd.f32 0.0, %v1143
      %v1145 = vpop.f32.mrb[0].mxu0
      %v1146 = vpop.f32.mrb[0].mxu0
      %v1147 = vadd.f32 0.0, %v1146
      %v1148 = vpop.f32.mrb[0].mxu0
      %1149 = vmatprep.mubr.bf16.mxu0 %v606
      %1150 = vmatmul.mubr.bf16.gmra.mrb[0].mxu0 %v605
      %v1151 = vpop.f32.mrb[0].mxu0
      %v1152 = vadd.f32 0.0, %v1151
      %v1153 = vpop.f32.mrb[0].mxu0
      %v1154 = vpop.f32.mrb[0].mxu0
      %v1155 = vadd.f32 0.0, %v1154
      %v1156 = vpop.f32.mrb[0].mxu0
      %1157 = vmatprep.mubr.bf16.mxu0 %v614
      %1158 = vmatmul.mubr.bf16.gmra.mrb[0].mxu0 %v613
      %v1159 = vpop.f32.mrb[0].mxu0
      %v1160 = vadd.f32 0.0, %v1159
      %v1161 = vpop.f32.mrb[0].mxu0
      %v1162 = vpop.f32.mrb[0].mxu0
      %v1163 = vadd.f32 0.0, %v1162
      %v1164 = vpop.f32.mrb[0].mxu0
      %1165 = vmatprep.mubr.bf16.mxu0 %v622
      %1166 = vmatmul.mubr.bf16.gmra.mrb[0].mxu0 %v621
      %v1167 = vpop.f32.mrb[0].mxu0
      %v1168 = vadd.f32 0.0, %v1167
      %v1169 = vpop.f32.mrb[0].mxu0
      %v1170 = vpop.f32.mrb[0].mxu0
      %v1171 = vadd.f32 0.0, %v1170
      %v1172 = vpop.f32.mrb[0].mxu0
      %1173 = vmatprep.mubr.bf16.mxu0 %v630
      %1174 = vmatmul.mubr.bf16.gmra.mrb[0].mxu0 %v629
      %v1175 = vpop.f32.mrb[0].mxu0
      %v1176 = vadd.f32 0.0, %v1175
      %v1177 = vpop.f32.mrb[0].mxu0
      %v1178 = vpop.f32.mrb[0].mxu0
      %v1179 = vadd.f32 0.0, %v1178
      %v1180 = vpop.f32.mrb[0].mxu0
      %1181 = vmatprep.mubr.bf16.mxu0 %v638
      %1182 = vmatmul.mubr.bf16.gmra.mrb[0].mxu0 %v637
      %v1183 = vpop.f32.mrb[0].mxu0
      %v1184 = vadd.f32 0.0, %v1183
      %v1185 = vpop.f32.mrb[0].mxu0
      %v1186 = vpop.f32.mrb[0].mxu0
      %v1187 = vadd.f32 0.0, %v1186
      %v1188 = vpop.f32.mrb[0].mxu0
      %1189 = vdwg.mxu0
      %1190 = vmatprep.subr.bf16.mxu0 0
      %1191 = vmatpush1.bf16.msra.mxu0 %v981
      %1192 = vmatprep.subr.bf16.mxu0 0
      %1193 = vmatpush1.bf16.msra.mxu0 %v982
      %1194 = vmatprep.subr.bf16.mxu0 0
      %1195 = vmatpush1.bf16.msra.mxu0 %v983
      %1196 = vmatprep.subr.bf16.mxu0 0
      %1197 = vmatpush1.bf16.msra.mxu0 %v984
      %1198 = vmatprep.subr.bf16.mxu0 0
      %1199 = vmatpush1.bf16.msra.mxu0 %v985
      %1200 = vmatprep.subr.bf16.mxu0 0
      %1201 = vmatpush1.bf16.msra.mxu0 %v986
      %1202 = vmatprep.subr.bf16.mxu0 0
      %1203 = vmatpush1.bf16.msra.mxu0 %v987
      %1204 = vmatprep.subr.bf16.mxu0 0
      %1205 = vmatpush1.bf16.msra.mxu0 %v988
      %1206 = vmatprep.subr.bf16.mxu0 0
      %1207 = vmatpush1.bf16.msra.mxu0 %v989
      %1208 = vmatprep.subr.bf16.mxu0 0
      %1209 = vmatpush1.bf16.msra.mxu0 %v990
      %1210 = vmatprep.subr.bf16.mxu0 0
      %1211 = vmatpush1.bf16.msra.mxu0 %v991
      %1212 = vmatprep.subr.bf16.mxu0 0
      %1213 = vmatpush1.bf16.msra.mxu0 %v992
      %1214 = vmatprep.subr.bf16.mxu0 0
      %1215 = vmatpush1.bf16.msra.mxu0 %v993
      %1216 = vmatprep.subr.bf16.mxu0 0
      %1217 = vmatpush1.bf16.msra.mxu0 %v994
      %1218 = vmatprep.subr.bf16.mxu0 0
      %1219 = vmatpush1.bf16.msra.mxu0 %v995
      %1220 = vmatprep.subr.bf16.mxu0 0
      %1221 = vmatpush1.bf16.msra.mxu0 %v996
      %1222 = vmatprep.mubr.bf16.mxu0 %v584
      %1223 = vmatmul.mubr.bf16.gmra.mrb[0].mxu0 %v583
      %v1224 = vpop.f32.mrb[0].mxu0
      %v1225 = vadd.f32 %v1128, %v1224
      %v1226 = vpop.f32.mrb[0].mxu0
      %v1227 = vpop.f32.mrb[0].mxu0
      %v1228 = vadd.f32 %v1131, %v1227
      %v1229 = vpop.f32.mrb[0].mxu0
      %1230 = vmatprep.mubr.bf16.mxu0 %v592
      %1231 = vmatmul.mubr.bf16.gmra.mrb[0].mxu0 %v591
      %v1232 = vpop.f32.mrb[0].mxu0
      %v1233 = vadd.f32 %v1136, %v1232
      %v1234 = vpop.f32.mrb[0].mxu0
      %v1235 = vpop.f32.mrb[0].mxu0
      %v1236 = vadd.f32 %v1139, %v1235
      %v1237 = vpop.f32.mrb[0].mxu0
      %1238 = vmatprep.mubr.bf16.mxu0 %v600
      %1239 = vmatmul.mubr.bf16.gmra.mrb[0].mxu0 %v599
      %v1240 = vpop.f32.mrb[0].mxu0
      %v1241 = vadd.f32 %v1144, %v1240
      %v1242 = vpop.f32.mrb[0].mxu0
      %v1243 = vpop.f32.mrb[0].mxu0
      %v1244 = vadd.f32 %v1147, %v1243
      %v1245 = vpop.f32.mrb[0].mxu0
      %1246 = vmatprep.mubr.bf16.mxu0 %v608
      %1247 = vmatmul.mubr.bf16.gmra.mrb[0].mxu0 %v607
      %v1248 = vpop.f32.mrb[0].mxu0
      %v1249 = vadd.f32 %v1152, %v1248
      %v1250 = vpop.f32.mrb[0].mxu0
      %v1251 = vpop.f32.mrb[0].mxu0
      %v1252 = vadd.f32 %v1155, %v1251
      %v1253 = vpop.f32.mrb[0].mxu0
      %1254 = vmatprep.mubr.bf16.mxu0 %v616
      %1255 = vmatmul.mubr.bf16.gmra.mrb[0].mxu0 %v615
      %v1256 = vpop.f32.mrb[0].mxu0
      %v1257 = vadd.f32 %v1160, %v1256
      %v1258 = vpop.f32.mrb[0].mxu0
      %v1259 = vpop.f32.mrb[0].mxu0
      %v1260 = vadd.f32 %v1163, %v1259
      %v1261 = vpop.f32.mrb[0].mxu0
      %1262 = vmatprep.mubr.bf16.mxu0 %v624
      %1263 = vmatmul.mubr.bf16.gmra.mrb[0].mxu0 %v623
      %v1264 = vpop.f32.mrb[0].mxu0
      %v1265 = vadd.f32 %v1168, %v1264
      %v1266 = vpop.f32.mrb[0].mxu0
      %v1267 = vpop.f32.mrb[0].mxu0
      %v1268 = vadd.f32 %v1171, %v1267
      %v1269 = vpop.f32.mrb[0].mxu0
      %1270 = vmatprep.mubr.bf16.mxu0 %v632
      %1271 = vmatmul.mubr.bf16.gmra.mrb[0].mxu0 %v631
      %v1272 = vpop.f32.mrb[0].mxu0
      %v1273 = vadd.f32 %v1176, %v1272
      %v1274 = vpop.f32.mrb[0].mxu0
      %v1275 = vpop.f32.mrb[0].mxu0
      %v1276 = vadd.f32 %v1179, %v1275
      %v1277 = vpop.f32.mrb[0].mxu0
      %1278 = vmatprep.mubr.bf16.mxu0 %v640
      %1279 = vmatmul.mubr.bf16.gmra.mrb[0].mxu0 %v639
      %v1280 = vpop.f32.mrb[0].mxu0
      %v1281 = vadd.f32 %v1184, %v1280
      %v1282 = vpop.f32.mrb[0].mxu0
      %v1283 = vpop.f32.mrb[0].mxu0
      %v1284 = vadd.f32 %v1187, %v1283
      %v1285 = vpop.f32.mrb[0].mxu0
      %1286 = vdwg.mxu0
      %1287 = vmatprep.subr.bf16.mxu0 0
      %1288 = vmatpush1.bf16.msra.mxu0 %v997
      %1289 = vmatprep.subr.bf16.mxu0 0
      %1290 = vmatpush1.bf16.msra.mxu0 %v998
      %1291 = vmatprep.subr.bf16.mxu0 0
      %1292 = vmatpush1.bf16.msra.mxu0 %v999
      %1293 = vmatprep.subr.bf16.mxu0 0
      %1294 = vmatpush1.bf16.msra.mxu0 %v1000
      %1295 = vmatprep.subr.bf16.mxu0 0
      %1296 = vmatpush1.bf16.msra.mxu0 %v1001
      %1297 = vmatprep.subr.bf16.mxu0 0
      %1298 = vmatpush1.bf16.msra.mxu0 %v1002
      %1299 = vmatprep.subr.bf16.mxu0 0
      %1300 = vmatpush1.bf16.msra.mxu0 %v1003
      %1301 = vmatprep.subr.bf16.mxu0 0
      %1302 = vmatpush1.bf16.msra.mxu0 %v1004
      %1303 = vmatprep.subr.bf16.mxu0 0
      %1304 = vmatpush1.bf16.msra.mxu0 %v1005
      %1305 = vmatprep.subr.bf16.mxu0 0
      %1306 = vmatpush1.bf16.msra.mxu0 %v1006
      %1307 = vmatprep.subr.bf16.mxu0 0
      %1308 = vmatpush1.bf16.msra.mxu0 %v1007
      %1309 = vmatprep.subr.bf16.mxu0 0
      %1310 = vmatpush1.bf16.msra.mxu0 %v1008
      %1311 = vmatprep.subr.bf16.mxu0 0
      %1312 = vmatpush1.bf16.msra.mxu0 %v1009
      %1313 = vmatprep.subr.bf16.mxu0 0
      %1314 = vmatpush1.bf16.msra.mxu0 %v1010
      %1315 = vmatprep.subr.bf16.mxu0 0
      %1316 = vmatpush1.bf16.msra.mxu0 %v1011
      %1317 = vmatprep.subr.bf16.mxu0 0
      %1318 = vmatpush1.bf16.msra.mxu0 %v1012
      %1319 = vmatprep.mubr.bf16.mxu0 %v586
      %1320 = vmatmul.mubr.bf16.gmra.mrb[0].mxu0 %v585
      %v1321 = vpop.f32.mrb[0].mxu0
      %v1322 = vadd.f32 %v1225, %v1321
      %v1323 = vpop.f32.mrb[0].mxu0
      %v1324 = vpop.f32.mrb[0].mxu0
      %v1325 = vadd.f32 %v1228, %v1324
      %v1326 = vpop.f32.mrb[0].mxu0
      %1327 = vmatprep.mubr.bf16.mxu0 %v594
      %1328 = vmatmul.mubr.bf16.gmra.mrb[0].mxu0 %v593
      %v1329 = vpop.f32.mrb[0].mxu0
      %v1330 = vadd.f32 %v1233, %v1329
      %v1331 = vpop.f32.mrb[0].mxu0
      %v1332 = vpop.f32.mrb[0].mxu0
      %v1333 = vadd.f32 %v1236, %v1332
      %v1334 = vpop.f32.mrb[0].mxu0
      %1335 = vmatprep.mubr.bf16.mxu0 %v602
      %1336 = vmatmul.mubr.bf16.gmra.mrb[0].mxu0 %v601
      %v1337 = vpop.f32.mrb[0].mxu0
      %v1338 = vadd.f32 %v1241, %v1337
      %v1339 = vpop.f32.mrb[0].mxu0
      %v1340 = vpop.f32.mrb[0].mxu0
      %v1341 = vadd.f32 %v1244, %v1340
      %v1342 = vpop.f32.mrb[0].mxu0
      %1343 = vmatprep.mubr.bf16.mxu0 %v610
      %1344 = vmatmul.mubr.bf16.gmra.mrb[0].mxu0 %v609
      %v1345 = vpop.f32.mrb[0].mxu0
      %v1346 = vadd.f32 %v1249, %v1345
      %v1347 = vpop.f32.mrb[0].mxu0
      %v1348 = vpop.f32.mrb[0].mxu0
      %v1349 = vadd.f32 %v1252, %v1348
      %v1350 = vpop.f32.mrb[0].mxu0
      %1351 = vmatprep.mubr.bf16.mxu0 %v618
      %1352 = vmatmul.mubr.bf16.gmra.mrb[0].mxu0 %v617
      %v1353 = vpop.f32.mrb[0].mxu0
      %v1354 = vadd.f32 %v1257, %v1353
      %v1355 = vpop.f32.mrb[0].mxu0
      %v1356 = vpop.f32.mrb[0].mxu0
      %v1357 = vadd.f32 %v1260, %v1356
      %v1358 = vpop.f32.mrb[0].mxu0
      %1359 = vmatprep.mubr.bf16.mxu0 %v626
      %1360 = vmatmul.mubr.bf16.gmra.mrb[0].mxu0 %v625
      %v1361 = vpop.f32.mrb[0].mxu0
      %v1362 = vadd.f32 %v1265, %v1361
      %v1363 = vpop.f32.mrb[0].mxu0
      %v1364 = vpop.f32.mrb[0].mxu0
      %v1365 = vadd.f32 %v1268, %v1364
      %v1366 = vpop.f32.mrb[0].mxu0
      %1367 = vmatprep.mubr.bf16.mxu0 %v634
      %1368 = vmatmul.mubr.bf16.gmra.mrb[0].mxu0 %v633
      %v1369 = vpop.f32.mrb[0].mxu0
      %v1370 = vadd.f32 %v1273, %v1369
      %v1371 = vpop.f32.mrb[0].mxu0
      %v1372 = vpop.f32.mrb[0].mxu0
      %v1373 = vadd.f32 %v1276, %v1372
      %v1374 = vpop.f32.mrb[0].mxu0
      %1375 = vmatprep.mubr.bf16.mxu0 %v642
      %1376 = vmatmul.mubr.bf16.gmra.mrb[0].mxu0 %v641
      %v1377 = vpop.f32.mrb[0].mxu0
      %v1378 = vadd.f32 %v1281, %v1377
      %v1379 = vpop.f32.mrb[0].mxu0
      %v1380 = vpop.f32.mrb[0].mxu0
      %v1381 = vadd.f32 %v1284, %v1380
      %v1382 = vpop.f32.mrb[0].mxu0
      %1383 = vdwg.mxu0
      %1384 = vmatprep.subr.bf16.mxu0 0
      %1385 = vmatpush1.bf16.msra.mxu0 %v1013
      %1386 = vmatprep.subr.bf16.mxu0 0
      %1387 = vmatpush1.bf16.msra.mxu0 %v1014
      %1388 = vmatprep.subr.bf16.mxu0 0
      %1389 = vmatpush1.bf16.msra.mxu0 %v1015
      %1390 = vmatprep.subr.bf16.mxu0 0
      %1391 = vmatpush1.bf16.msra.mxu0 %v1016
      %1392 = vmatprep.subr.bf16.mxu0 0
      %1393 = vmatpush1.bf16.msra.mxu0 %v1017
      %1394 = vmatprep.subr.bf16.mxu0 0
      %1395 = vmatpush1.bf16.msra.mxu0 %v1018
      %1396 = vmatprep.subr.bf16.mxu0 0
      %1397 = vmatpush1.bf16.msra.mxu0 %v1019
      %1398 = vmatprep.subr.bf16.mxu0 0
      %1399 = vmatpush1.bf16.msra.mxu0 %v1020
      %1400 = vmatprep.subr.bf16.mxu0 0
      %1401 = vmatpush1.bf16.msra.mxu0 %v1021
      %1402 = vmatprep.subr.bf16.mxu0 0
      %1403 = vmatpush1.bf16.msra.mxu0 %v1022
      %1404 = vmatprep.subr.bf16.mxu0 0
      %1405 = vmatpush1.bf16.msra.mxu0 %v1023
      %1406 = vmatprep.subr.bf16.mxu0 0
      %1407 = vmatpush1.bf16.msra.mxu0 %v1024
      %1408 = vmatprep.subr.bf16.mxu0 0
      %1409 = vmatpush1.bf16.msra.mxu0 %v1025
      %1410 = vmatprep.subr.bf16.mxu0 0
      %1411 = vmatpush1.bf16.msra.mxu0 %v1026
      %1412 = vmatprep.subr.bf16.mxu0 0
      %1413 = vmatpush1.bf16.msra.mxu0 %v1027
      %1414 = vmatprep.subr.bf16.mxu0 0
      %1415 = vmatpush1.bf16.msra.mxu0 %v1028
      %1416 = vmatprep.mubr.bf16.mxu0 %v588
      %1417 = vmatmul.mubr.bf16.gmra.mrb[0].mxu0 %v587
      %v1418 = vpop.f32.mrb[0].mxu0
      %v1419 = vadd.f32 %v1322, %v1418
      %v1420 = vpop.f32.mrb[0].mxu0
      %v1421 = vpop.f32.mrb[0].mxu0
      %v1422 = vadd.f32 %v1325, %v1421
      %v1423 = vpop.f32.mrb[0].mxu0
      %1424 = vmatprep.mubr.bf16.mxu0 %v596
      %1425 = vmatmul.mubr.bf16.gmra.mrb[0].mxu0 %v595
      %v1426 = vpop.f32.mrb[0].mxu0
      %v1427 = vadd.f32 %v1330, %v1426
      %v1428 = vpop.f32.mrb[0].mxu0
      %v1429 = vpop.f32.mrb[0].mxu0
      %v1430 = vadd.f32 %v1333, %v1429
      %v1431 = vpop.f32.mrb[0].mxu0
      %1432 = vmatprep.mubr.bf16.mxu0 %v604
      %1433 = vmatmul.mubr.bf16.gmra.mrb[0].mxu0 %v603
      %v1434 = vpop.f32.mrb[0].mxu0
      %v1435 = vadd.f32 %v1338, %v1434
      %v1436 = vpop.f32.mrb[0].mxu0
      %v1437 = vpop.f32.mrb[0].mxu0
      %v1438 = vadd.f32 %v1341, %v1437
      %v1439 = vpop.f32.mrb[0].mxu0
      %1440 = vmatprep.mubr.bf16.mxu0 %v612
      %1441 = vmatmul.mubr.bf16.gmra.mrb[0].mxu0 %v611
      %v1442 = vpop.f32.mrb[0].mxu0
      %v1443 = vadd.f32 %v1346, %v1442
      %v1444 = vpop.f32.mrb[0].mxu0
      %v1445 = vpop.f32.mrb[0].mxu0
      %v1446 = vadd.f32 %v1349, %v1445
      %v1447 = vpop.f32.mrb[0].mxu0
      %1448 = vmatprep.mubr.bf16.mxu0 %v620
      %1449 = vmatmul.mubr.bf16.gmra.mrb[0].mxu0 %v619
      %v1450 = vpop.f32.mrb[0].mxu0
      %v1451 = vadd.f32 %v1354, %v1450
      %v1452 = vpop.f32.mrb[0].mxu0
      %v1453 = vpop.f32.mrb[0].mxu0
      %v1454 = vadd.f32 %v1357, %v1453
      %v1455 = vpop.f32.mrb[0].mxu0
      %1456 = vmatprep.mubr.bf16.mxu0 %v628
      %1457 = vmatmul.mubr.bf16.gmra.mrb[0].mxu0 %v627
      %v1458 = vpop.f32.mrb[0].mxu0
      %v1459 = vadd.f32 %v1362, %v1458
      %v1460 = vpop.f32.mrb[0].mxu0
      %v1461 = vpop.f32.mrb[0].mxu0
      %v1462 = vadd.f32 %v1365, %v1461
      %v1463 = vpop.f32.mrb[0].mxu0
      %1464 = vmatprep.mubr.bf16.mxu0 %v636
      %1465 = vmatmul.mubr.bf16.gmra.mrb[0].mxu0 %v635
      %v1466 = vpop.f32.mrb[0].mxu0
      %v1467 = vadd.f32 %v1370, %v1466
      %v1468 = vpop.f32.mrb[0].mxu0
      %v1469 = vpop.f32.mrb[0].mxu0
      %v1470 = vadd.f32 %v1373, %v1469
      %v1471 = vpop.f32.mrb[0].mxu0
      %1472 = vmatprep.mubr.bf16.mxu0 %v644
      %1473 = vmatmul.mubr.bf16.gmra.mrb[0].mxu0 %v643
      %v1474 = vpop.f32.mrb[0].mxu0
      %v1475 = vadd.f32 %v1378, %v1474
      %v1476 = vpop.f32.mrb[0].mxu0
      %v1477 = vpop.f32.mrb[0].mxu0
      %v1478 = vadd.f32 %v1381, %v1477
      %v1479 = vpop.f32.mrb[0].mxu0
      %1480 = vdwg.mxu0
      %vm1481 = vcmask 130048
      %v1482 = vsel %vm1481, %v1419, 0.0
      %1483 = vadd.xlane.f32.xlu0 %v1482
      %v1484 = vpop.xlane.xlu0 %1483
      %v1485 = vsel %vm1481, %v1422, 0.0
      %1486 = vadd.xlane.f32.xlu0 %v1485
      %v1487 = vpop.xlane.xlu0 %1486
      %v1488 = vsel %vm1481, %v1427, 0.0
      %1489 = vadd.xlane.f32.xlu0 %v1488
      %v1490 = vpop.xlane.xlu0 %1489
      %v1491 = vsel %vm1481, %v1430, 0.0
      %1492 = vadd.xlane.f32.xlu0 %v1491
      %v1493 = vpop.xlane.xlu0 %1492
      %v1494 = vsel %vm1481, %v1435, 0.0
      %1495 = vadd.xlane.f32.xlu0 %v1494
      %v1496 = vpop.xlane.xlu0 %1495
      %v1497 = vsel %vm1481, %v1438, 0.0
      %1498 = vadd.xlane.f32.xlu0 %v1497
      %v1499 = vpop.xlane.xlu0 %1498
      %v1500 = vsel %vm1481, %v1443, 0.0
      %1501 = vadd.xlane.f32.xlu0 %v1500
      %v1502 = vpop.xlane.xlu0 %1501
      %v1503 = vsel %vm1481, %v1446, 0.0
      %1504 = vadd.xlane.f32.xlu0 %v1503
      %v1505 = vpop.xlane.xlu0 %1504
      %v1506 = vsel %vm1481, %v1451, 0.0
      %1507 = vadd.xlane.f32.xlu0 %v1506
      %v1508 = vpop.xlane.xlu0 %1507
      %v1509 = vsel %vm1481, %v1454, 0.0
      %1510 = vadd.xlane.f32.xlu0 %v1509
      %v1511 = vpop.xlane.xlu0 %1510
      %v1512 = vsel %vm1481, %v1459, 0.0
      %1513 = vadd.xlane.f32.xlu0 %v1512
      %v1514 = vpop.xlane.xlu0 %1513
      %v1515 = vsel %vm1481, %v1462, 0.0
      %1516 = vadd.xlane.f32.xlu0 %v1515
      %v1517 = vpop.xlane.xlu0 %1516
      %v1518 = vsel %vm1481, %v1467, 0.0
      %1519 = vadd.xlane.f32.xlu0 %v1518
      %v1520 = vpop.xlane.xlu0 %1519
      %v1521 = vsel %vm1481, %v1470, 0.0
      %1522 = vadd.xlane.f32.xlu0 %v1521
      %v1523 = vpop.xlane.xlu0 %1522
      %v1524 = vsel %vm1481, %v1475, 0.0
      %1525 = vadd.xlane.f32.xlu0 %v1524
      %v1526 = vpop.xlane.xlu0 %1525
      %v1527 = vsel %vm1481, %v1478, 0.0
      %1528 = vadd.xlane.f32.xlu0 %v1527
      %v1529 = vpop.xlane.xlu0 %1528
      %v1530 = vmul.f32 %v1484, 0.0625
      %v1531 = vmul.f32 %v1487, 0.0625
      %v1532 = vmul.f32 %v1490, 0.0625
      %v1533 = vmul.f32 %v1493, 0.0625
      %v1534 = vmul.f32 %v1496, 0.0625
      %v1535 = vmul.f32 %v1499, 0.0625
      %v1536 = vmul.f32 %v1502, 0.0625
      %v1537 = vmul.f32 %v1505, 0.0625
      %v1538 = vmul.f32 %v1508, 0.0625
      %v1539 = vmul.f32 %v1511, 0.0625
      %v1540 = vmul.f32 %v1514, 0.0625
      %v1541 = vmul.f32 %v1517, 0.0625
      %v1542 = vmul.f32 %v1520, 0.0625
      %v1543 = vmul.f32 %v1523, 0.0625
      %v1544 = vmul.f32 %v1526, 0.0625
      %v1545 = vmul.f32 %v1529, 0.0625
      %v1546 = vmul.f32 %v1419, %v1419
      %v1547 = vmul.f32 %v1422, %v1422
      %v1548 = vmul.f32 %v1427, %v1427
      %v1549 = vmul.f32 %v1430, %v1430
      %v1550 = vmul.f32 %v1435, %v1435
      %v1551 = vmul.f32 %v1438, %v1438
      %v1552 = vmul.f32 %v1443, %v1443
      %v1553 = vmul.f32 %v1446, %v1446
      %v1554 = vmul.f32 %v1451, %v1451
      %v1555 = vmul.f32 %v1454, %v1454
      %v1556 = vmul.f32 %v1459, %v1459
      %v1557 = vmul.f32 %v1462, %v1462
      %v1558 = vmul.f32 %v1467, %v1467
      %v1559 = vmul.f32 %v1470, %v1470
      %v1560 = vmul.f32 %v1475, %v1475
      %v1561 = vmul.f32 %v1478, %v1478
      %v1562 = vsel %vm1481, %v1546, 0.0
      %1563 = vadd.xlane.f32.xlu0 %v1562
      %v1564 = vpop.xlane.xlu0 %1563
      %v1565 = vsel %vm1481, %v1547, 0.0
      %1566 = vadd.xlane.f32.xlu0 %v1565
      %v1567 = vpop.xlane.xlu0 %1566
      %v1568 = vsel %vm1481, %v1548, 0.0
      %1569 = vadd.xlane.f32.xlu0 %v1568
      %v1570 = vpop.xlane.xlu0 %1569
      %v1571 = vsel %vm1481, %v1549, 0.0
      %1572 = vadd.xlane.f32.xlu0 %v1571
      %v1573 = vpop.xlane.xlu0 %1572
      %v1574 = vsel %vm1481, %v1550, 0.0
      %1575 = vadd.xlane.f32.xlu0 %v1574
      %v1576 = vpop.xlane.xlu0 %1575
      %v1577 = vsel %vm1481, %v1551, 0.0
      %1578 = vadd.xlane.f32.xlu0 %v1577
      %v1579 = vpop.xlane.xlu0 %1578
      %v1580 = vsel %vm1481, %v1552, 0.0
      %1581 = vadd.xlane.f32.xlu0 %v1580
      %v1582 = vpop.xlane.xlu0 %1581
      %v1583 = vsel %vm1481, %v1553, 0.0
      %1584 = vadd.xlane.f32.xlu0 %v1583
      %v1585 = vpop.xlane.xlu0 %1584
      %v1586 = vsel %vm1481, %v1554, 0.0
      %1587 = vadd.xlane.f32.xlu0 %v1586
      %v1588 = vpop.xlane.xlu0 %1587
      %v1589 = vsel %vm1481, %v1555, 0.0
      %1590 = vadd.xlane.f32.xlu0 %v1589
      %v1591 = vpop.xlane.xlu0 %1590
      %v1592 = vsel %vm1481, %v1556, 0.0
      %1593 = vadd.xlane.f32.xlu0 %v1592
      %v1594 = vpop.xlane.xlu0 %1593
      %v1595 = vsel %vm1481, %v1557, 0.0
      %1596 = vadd.xlane.f32.xlu0 %v1595
      %v1597 = vpop.xlane.xlu0 %1596
      %v1598 = vsel %vm1481, %v1558, 0.0
      %1599 = vadd.xlane.f32.xlu0 %v1598
      %v1600 = vpop.xlane.xlu0 %1599
      %v1601 = vsel %vm1481, %v1559, 0.0
      %1602 = vadd.xlane.f32.xlu0 %v1601
      %v1603 = vpop.xlane.xlu0 %1602
      %v1604 = vsel %vm1481, %v1560, 0.0
      %1605 = vadd.xlane.f32.xlu0 %v1604
      %v1606 = vpop.xlane.xlu0 %1605
      %v1607 = vsel %vm1481, %v1561, 0.0
      %1608 = vadd.xlane.f32.xlu0 %v1607
      %v1609 = vpop.xlane.xlu0 %1608
      %v1610 = vmul.f32 %v1564, 0.0625
      %v1611 = vmul.f32 %v1567, 0.0625
      %v1612 = vmul.f32 %v1570, 0.0625
      %v1613 = vmul.f32 %v1573, 0.0625
      %v1614 = vmul.f32 %v1576, 0.0625
      %v1615 = vmul.f32 %v1579, 0.0625
      %v1616 = vmul.f32 %v1582, 0.0625
      %v1617 = vmul.f32 %v1585, 0.0625
      %v1618 = vmul.f32 %v1588, 0.0625
      %v1619 = vmul.f32 %v1591, 0.0625
      %v1620 = vmul.f32 %v1594, 0.0625
      %v1621 = vmul.f32 %v1597, 0.0625
      %v1622 = vmul.f32 %v1600, 0.0625
      %v1623 = vmul.f32 %v1603, 0.0625
      %v1624 = vmul.f32 %v1606, 0.0625
      %v1625 = vmul.f32 %v1609, 0.0625
      %v1626 = vmul.f32 %v1530, %v1530
      %v1627 = vmul.f32 %v1531, %v1531
      %v1628 = vmul.f32 %v1532, %v1532
      %v1629 = vmul.f32 %v1533, %v1533
      %v1630 = vmul.f32 %v1534, %v1534
      %v1631 = vmul.f32 %v1535, %v1535
      %v1632 = vmul.f32 %v1536, %v1536
      %v1633 = vmul.f32 %v1537, %v1537
      %v1634 = vmul.f32 %v1538, %v1538
      %v1635 = vmul.f32 %v1539, %v1539
      %v1636 = vmul.f32 %v1540, %v1540
      %v1637 = vmul.f32 %v1541, %v1541
      %v1638 = vmul.f32 %v1542, %v1542
      %v1639 = vmul.f32 %v1543, %v1543
      %v1640 = vmul.f32 %v1544, %v1544
      %v1641 = vmul.f32 %v1545, %v1545
      %v1642 = vsub.f32 %v1610, %v1626
      %v1643 = vsub.f32 %v1611, %v1627
      %v1644 = vsub.f32 %v1612, %v1628
      %v1645 = vsub.f32 %v1613, %v1629
      %v1646 = vsub.f32 %v1614, %v1630
      %v1647 = vsub.f32 %v1615, %v1631
      %v1648 = vsub.f32 %v1616, %v1632
      %v1649 = vsub.f32 %v1617, %v1633
      %v1650 = vsub.f32 %v1618, %v1634
      %v1651 = vsub.f32 %v1619, %v1635
      %v1652 = vsub.f32 %v1620, %v1636
      %v1653 = vsub.f32 %v1621, %v1637
      %v1654 = vsub.f32 %v1622, %v1638
      %v1655 = vsub.f32 %v1623, %v1639
      %v1656 = vsub.f32 %v1624, %v1640
      %v1657 = vsub.f32 %v1625, %v1641
      %v1658 = vmax.f32 %v1642, 0.0
      %v1659 = vmax.f32 %v1643, 0.0
      %v1660 = vmax.f32 %v1644, 0.0
      %v1661 = vmax.f32 %v1645, 0.0
      %v1662 = vmax.f32 %v1646, 0.0
      %v1663 = vmax.f32 %v1647, 0.0
      %v1664 = vmax.f32 %v1648, 0.0
      %v1665 = vmax.f32 %v1649, 0.0
      %v1666 = vmax.f32 %v1650, 0.0
      %v1667 = vmax.f32 %v1651, 0.0
      %v1668 = vmax.f32 %v1652, 0.0
      %v1669 = vmax.f32 %v1653, 0.0
      %v1670 = vmax.f32 %v1654, 0.0
      %v1671 = vmax.f32 %v1655, 0.0
      %v1672 = vmax.f32 %v1656, 0.0
      %v1673 = vmax.f32 %v1657, 0.0
      %v1674 = vsub.f32 %v1419, %v1530
      %v1675 = vsub.f32 %v1422, %v1531
      %v1676 = vsub.f32 %v1427, %v1532
      %v1677 = vsub.f32 %v1430, %v1533
      %v1678 = vsub.f32 %v1435, %v1534
      %v1679 = vsub.f32 %v1438, %v1535
      %v1680 = vsub.f32 %v1443, %v1536
      %v1681 = vsub.f32 %v1446, %v1537
      %v1682 = vsub.f32 %v1451, %v1538
      %v1683 = vsub.f32 %v1454, %v1539
      %v1684 = vsub.f32 %v1459, %v1540
      %v1685 = vsub.f32 %v1462, %v1541
      %v1686 = vsub.f32 %v1467, %v1542
      %v1687 = vsub.f32 %v1470, %v1543
      %v1688 = vsub.f32 %v1475, %v1544
      %v1689 = vsub.f32 %v1478, %v1545
      %v1690 = vadd.f32 %v1658, 1e-05
      %v1691 = vadd.f32 %v1659, 1e-05
      %v1692 = vadd.f32 %v1660, 1e-05
      %v1693 = vadd.f32 %v1661, 1e-05
      %v1694 = vadd.f32 %v1662, 1e-05
      %v1695 = vadd.f32 %v1663, 1e-05
      %v1696 = vadd.f32 %v1664, 1e-05
      %v1697 = vadd.f32 %v1665, 1e-05
      %v1698 = vadd.f32 %v1666, 1e-05
      %v1699 = vadd.f32 %v1667, 1e-05
      %v1700 = vadd.f32 %v1668, 1e-05
      %v1701 = vadd.f32 %v1669, 1e-05
      %v1702 = vadd.f32 %v1670, 1e-05
      %v1703 = vadd.f32 %v1671, 1e-05
      %v1704 = vadd.f32 %v1672, 1e-05
      %v1705 = vadd.f32 %v1673, 1e-05
      %v1706 = vrsqrt.pop %v1690
      %v1707 = vrsqrt.pop %v1691
      %v1708 = vrsqrt.pop %v1692
      %v1709 = vrsqrt.pop %v1693
      %v1710 = vrsqrt.pop %v1694
      %v1711 = vrsqrt.pop %v1695
      %v1712 = vrsqrt.pop %v1696
      %v1713 = vrsqrt.pop %v1697
      %v1714 = vrsqrt.pop %v1698
      %v1715 = vrsqrt.pop %v1699
      %v1716 = vrsqrt.pop %v1700
      %v1717 = vrsqrt.pop %v1701
      %v1718 = vrsqrt.pop %v1702
      %v1719 = vrsqrt.pop %v1703
      %v1720 = vrsqrt.pop %v1704
      %v1721 = vrsqrt.pop %v1705
      %v1722 = vmul.f32 %v1674, %v1706
      %v1723 = vmul.f32 %v1675, %v1707
      %v1724 = vmul.f32 %v1676, %v1708
      %v1725 = vmul.f32 %v1677, %v1709
      %v1726 = vmul.f32 %v1678, %v1710
      %v1727 = vmul.f32 %v1679, %v1711
      %v1728 = vmul.f32 %v1680, %v1712
      %v1729 = vmul.f32 %v1681, %v1713
      %v1730 = vmul.f32 %v1682, %v1714
      %v1731 = vmul.f32 %v1683, %v1715
      %v1732 = vmul.f32 %v1684, %v1716
      %v1733 = vmul.f32 %v1685, %v1717
      %v1734 = vmul.f32 %v1686, %v1718
      %v1735 = vmul.f32 %v1687, %v1719
      %v1736 = vmul.f32 %v1688, %v1720
      %v1737 = vmul.f32 %v1689, %v1721
      %vm1738 = vcmp.ge.f32.partialorder %v1722, 0.0
      %vm1739 = vcmp.ge.f32.partialorder %v1723, 0.0
      %vm1740 = vcmp.ge.f32.partialorder %v1724, 0.0
      %vm1741 = vcmp.ge.f32.partialorder %v1725, 0.0
      %vm1742 = vcmp.ge.f32.partialorder %v1726, 0.0
      %vm1743 = vcmp.ge.f32.partialorder %v1727, 0.0
      %vm1744 = vcmp.ge.f32.partialorder %v1728, 0.0
      %vm1745 = vcmp.ge.f32.partialorder %v1729, 0.0
      %vm1746 = vcmp.ge.f32.partialorder %v1730, 0.0
      %vm1747 = vcmp.ge.f32.partialorder %v1731, 0.0
      %vm1748 = vcmp.ge.f32.partialorder %v1732, 0.0
      %vm1749 = vcmp.ge.f32.partialorder %v1733, 0.0
      %vm1750 = vcmp.ge.f32.partialorder %v1734, 0.0
      %vm1751 = vcmp.ge.f32.partialorder %v1735, 0.0
      %vm1752 = vcmp.ge.f32.partialorder %v1736, 0.0
      %vm1753 = vcmp.ge.f32.partialorder %v1737, 0.0
      %v1754 = vmul.f32 %v1722, 0.2
      %v1755 = vmul.f32 %v1723, 0.2
      %v1756 = vmul.f32 %v1724, 0.2
      %v1757 = vmul.f32 %v1725, 0.2
      %v1758 = vmul.f32 %v1726, 0.2
      %v1759 = vmul.f32 %v1727, 0.2
      %v1760 = vmul.f32 %v1728, 0.2
      %v1761 = vmul.f32 %v1729, 0.2
      %v1762 = vmul.f32 %v1730, 0.2
      %v1763 = vmul.f32 %v1731, 0.2
      %v1764 = vmul.f32 %v1732, 0.2
      %v1765 = vmul.f32 %v1733, 0.2
      %v1766 = vmul.f32 %v1734, 0.2
      %v1767 = vmul.f32 %v1735, 0.2
      %v1768 = vmul.f32 %v1736, 0.2
      %v1769 = vmul.f32 %v1737, 0.2
      %v1770 = vsel %vm1738, %v1722, %v1754
      %v1771 = vsel %vm1739, %v1723, %v1755
      %v1772 = vsel %vm1740, %v1724, %v1756
      %v1773 = vsel %vm1741, %v1725, %v1757
      %v1774 = vsel %vm1742, %v1726, %v1758
      %v1775 = vsel %vm1743, %v1727, %v1759
      %v1776 = vsel %vm1744, %v1728, %v1760
      %v1777 = vsel %vm1745, %v1729, %v1761
      %v1778 = vsel %vm1746, %v1730, %v1762
      %v1779 = vsel %vm1747, %v1731, %v1763
      %v1780 = vsel %vm1748, %v1732, %v1764
      %v1781 = vsel %vm1749, %v1733, %v1765
      %v1782 = vsel %vm1750, %v1734, %v1766
      %v1783 = vsel %vm1751, %v1735, %v1767
      %v1784 = vsel %vm1752, %v1736, %v1768
      %v1785 = vsel %vm1753, %v1737, %v1769
      %v1786 = vld [vmem:[%s2] sm:$0xff]
      %v1787 = vld [vmem:[%s2 + $0x8] sm:$0xff]
      %v1788 = vld [vmem:[%s2 + $0x10] sm:$0xff]
      %v1789 = vld [vmem:[%s2 + $0x18] sm:$0xff]
      %v1790 = vld [vmem:[%s2 + $0x20] sm:$0xff]
      %v1791 = vld [vmem:[%s2 + $0x28] sm:$0xff]
      %v1792 = vld [vmem:[%s2 + $0x30] sm:$0xff]
      %v1793 = vld [vmem:[%s2 + $0x38] sm:$0xff]
      %v1794 = vld [vmem:[%s2 + $0x40] sm:$0xff]
      %v1795 = vld [vmem:[%s2 + $0x48] sm:$0xff]
      %v1796 = vld [vmem:[%s2 + $0x50] sm:$0xff]
      %v1797 = vld [vmem:[%s2 + $0x58] sm:$0xff]
      %v1798 = vld [vmem:[%s2 + $0x60] sm:$0xff]
      %v1799 = vld [vmem:[%s2 + $0x68] sm:$0xff]
      %v1800 = vld [vmem:[%s2 + $0x70] sm:$0xff]
      %v1801 = vld [vmem:[%s2 + $0x78] sm:$0xff]
      %v1802 = vmul.f32 %v1770, %v1786
      %v1803 = vmul.f32 %v1771, %v1787
      %v1804 = vmul.f32 %v1772, %v1788
      %v1805 = vmul.f32 %v1773, %v1789
      %v1806 = vmul.f32 %v1774, %v1790
      %v1807 = vmul.f32 %v1775, %v1791
      %v1808 = vmul.f32 %v1776, %v1792
      %v1809 = vmul.f32 %v1777, %v1793
      %v1810 = vmul.f32 %v1778, %v1794
      %v1811 = vmul.f32 %v1779, %v1795
      %v1812 = vmul.f32 %v1780, %v1796
      %v1813 = vmul.f32 %v1781, %v1797
      %v1814 = vmul.f32 %v1782, %v1798
      %v1815 = vmul.f32 %v1783, %v1799
      %v1816 = vmul.f32 %v1784, %v1800
      %v1817 = vmul.f32 %v1785, %v1801
      %v1818 = vsel %vm1481, %v1802, 0.0
      %v1819 = vsel %vm1481, %v1803, 0.0
      %v1820 = vadd.f32 %v1818, %v1819
      %v1821 = vsel %vm1481, %v1804, 0.0
      %v1822 = vadd.f32 %v1820, %v1821
      %v1823 = vsel %vm1481, %v1805, 0.0
      %v1824 = vadd.f32 %v1822, %v1823
      %v1825 = vsel %vm1481, %v1806, 0.0
      %v1826 = vadd.f32 %v1824, %v1825
      %v1827 = vsel %vm1481, %v1807, 0.0
      %v1828 = vadd.f32 %v1826, %v1827
      %v1829 = vsel %vm1481, %v1808, 0.0
      %v1830 = vadd.f32 %v1828, %v1829
      %v1831 = vsel %vm1481, %v1809, 0.0
      %v1832 = vadd.f32 %v1830, %v1831
      %v1833 = vsel %vm1481, %v1810, 0.0
      %v1834 = vadd.f32 %v1832, %v1833
      %v1835 = vsel %vm1481, %v1811, 0.0
      %v1836 = vadd.f32 %v1834, %v1835
      %v1837 = vsel %vm1481, %v1812, 0.0
      %v1838 = vadd.f32 %v1836, %v1837
      %v1839 = vsel %vm1481, %v1813, 0.0
      %v1840 = vadd.f32 %v1838, %v1839
      %v1841 = vsel %vm1481, %v1814, 0.0
      %v1842 = vadd.f32 %v1840, %v1841
      %v1843 = vsel %vm1481, %v1815, 0.0
      %v1844 = vadd.f32 %v1842, %v1843
      %v1845 = vsel %vm1481, %v1816, 0.0
      %v1846 = vadd.f32 %v1844, %v1845
      %v1847 = vsel %vm1481, %v1817, 0.0
      %v1848 = vadd.f32 %v1846, %v1847
      %1849 = vadd.xlane.f32.xlu0 %v1848
      %v1850 = vpop.xlane.xlu0 %1849
      %v1851 = vrot.slane %v1850, 4
      %v1852 = vadd.f32 %v1850, %v1851
      %v1853 = vrot.slane %v1852, 2
      %v1854 = vadd.f32 %v1852, %v1853
      %v1855 = vrot.slane %v1854, 1
      %v1856 = vadd.f32 %v1854, %v1855
      %s1857 = vtos %v1856
      %v1858 = vld [vmem:[#allocation2] sm:$0x1]
      %v1859 = vstv %s1857
      %v1860 = vadd.f32 %v1859, %v1858
      %vm1861 = vcmask 0
      %1862 = vst.msk [vmem:[%s195] sm:$0x1] %vm1861, %v1860
      %p1863 = scmp.lt.s32.totalorder %s17, 1
      %s1864 = scalar_select %p1863, %s17, 1
      %s1865 = scalar_lea.vmem %s4, %s1864
      // Predicated region
      $region37: #{critic_forward.9} parent=35 // pred_check
        %p1866 = pneg %p124
      $region38: #{critic_forward.9} parent=35 // pred_check_branch
        %1868 = sbr.rel (%p1866) target = $region40
      $region39: #{critic_forward.9} parent=35 // pred_region
        _
      $region40: #{critic_forward.9} parent=35 // pred_fallthru
        _
    $region36: #{critic_forward.9} parent=5 // pred_fallthru
      _
    %p1869 = scmp.le.s32.totalorder 2, %s12
    // Predicated region
    $region41: #{critic_forward.9} parent=5 // pred_check
      %p1870 = pneg %p1869
    $region42: #{critic_forward.9} parent=5 // pred_check_branch
      %1872 = sbr.rel (%p1870) target = $region44
    $region43: #{critic_forward.9} parent=5 // pred_region
      %s1873 = ssub.s32 %s12, 2
      // Predicated region
      $region45: #{critic_forward.9} parent=43 // pred_check
        %p1874 = pneg %p130
      $region46: #{critic_forward.9} parent=43 // pred_check_branch
        %1876 = sbr.rel (%p1874) target = $region48
      $region47: #{critic_forward.9} parent=43 // pred_region
        %p1877 = scmp.lt.s32.totalorder %s18, 1
        %s1878 = scalar_select %p1877, %s18, 1
        %s1879 = scalar_lea.vmem %s4, %s1878
      $region48: #{critic_forward.9} parent=43 // pred_fallthru
        _
    $region44: #{critic_forward.9} parent=5 // pred_fallthru
      _
  $region6: #{critic_forward.9} parent=0 // loop_footer
    %s16 = sadd.s32 1, %s12
  $region7: #{critic_forward.9} parent=0 // loop_footer_branch
    %11 = sbr.rel target = $region3
  $region8: #{critic_forward.9} parent=0 // loop_exit
    _

</llo_original>
